<compile_context>
chip_gen: v7x
topology: tpu7x:2x2x1
jax: 0.10.0
libtpu: 0.0.40
codegen_flags: <defaults>
</compile_context>

<pallas_src>
import functools

import jax
import jax.numpy as jnp
from jax import lax
from jax.experimental import pallas as pl
from jax.experimental.pallas import tpu as pltpu


# ---------------------------------------------------------------------------
# Pallas kernel: full RVAE forward (encoder RNN -> VAE heads -> decoder RNN -> out)
# Each grid step processes one batch tile of tB rows, fully independently.
# ---------------------------------------------------------------------------
def rvae_kernel(
    # inputs (per batch tile)
    nois_f0s_ref,   # (T, tB, n_nois + n_feats)
    nois_ref,       # (T, tB, n_nois)
    lens_ref,       # (tB, 1) int32
    wih_e_ref, whh_e_ref, be_ref,    # encoder RNN (bias = b_ih + b_hh, pre-folded)
    wih_d_ref, whh_d_ref, bd_ref,    # decoder RNN (bias = b_ih + b_hh, pre-folded)
    wheads_ref, bheads_ref,          # fused [enc_mu | enc_logvar]
    wlat_ref, blat_ref,              # lat_to_input
    wout_ref, bout_ref,              # out (unpadded: H -> n_feats)
    # outputs (per batch tile)
    y_ref,        # (T, tB, n_feats)   zero past lens
    z_ref,        # (1, tB, n_latent)
    mu_ref,       # (1, tB, n_latent)
    logvar_ref,   # (1, tB, n_latent)
    # scratch
    xenc_scr,     # (T, tB, H)  hoisted encoder input projection
    xdec_scr,     # (T, tB, H)  hoisted decoder inputs, overwritten with decoder hiddens
):
    T, tB, n_in_enc = nois_f0s_ref.shape
    n_nois = nois_ref.shape[2]
    H = whh_e_ref.shape[0]
    L = wheads_ref.shape[1] // 2
    f32 = jnp.float32

    # interleave two independent batch sub-chunks inside the serial time loop to hide
    # MXU/EUP latency; only when each sub-chunk still fills a full 8-row sublane group.
    n_il = 2 if (tB >= 16 and tB % 16 == 0) else 1
    cB = tB // n_il
    unroll = True if T <= 16 else 8

    lens_col = lens_ref[...]                                   # (tB, 1) int32
    lens_chunks = tuple(lens_col[c * cB:(c + 1) * cB] for c in range(n_il))

    # ---- hoisted input projections: one batched matmul each, biases folded ----
    x_enc = (jnp.dot(nois_f0s_ref[...].reshape(T * tB, n_in_enc), wih_e_ref[...],
                     preferred_element_type=f32)
             + be_ref[...])
    xenc_scr[...] = x_enc.reshape(T, tB, H)

    x_dec = (jnp.dot(nois_ref[...].reshape(T * tB, n_nois), wih_d_ref[...],
                     preferred_element_type=f32)
             + bd_ref[...])
    xdec_scr[...] = x_dec.reshape(T, tB, H)

    whh_e = whh_e_ref[...]
    whh_d = whh_d_ref[...]

    # ---- encoder RNN (tanh cell), masked carry == packed-sequence semantics ----
    def enc_step(t, hs):
        xt = xenc_scr[t]                                       # (tB, H)
        new_hs = []
        for c in range(n_il):                                  # independent sub-chunks
            h = hs[c]
            h_new = jnp.tanh(xt[c * cB:(c + 1) * cB]
                             + jnp.dot(h, whh_e, preferred_element_type=f32))
            new_hs.append(jnp.where(t < lens_chunks[c], h_new, h))
        return tuple(new_hs)

    h0 = tuple(jnp.zeros((cB, H), f32) for _ in range(n_il))
    h_fin = lax.fori_loop(0, T, enc_step, h0, unroll=unroll)
    h_enc = h_fin[0] if n_il == 1 else jnp.concatenate(h_fin, axis=0)

    # ---- fused VAE heads: one matmul, then slice mu / logvar ----
    heads = (jnp.dot(h_enc, wheads_ref[...], preferred_element_type=f32)
             + bheads_ref[...])
    mu = heads[:, :L]
    logvar = heads[:, L:]
    z = mu                                                     # eval path

    mu_ref[0] = mu
    logvar_ref[0] = logvar
    z_ref[0] = z

    # ---- lat_to_input: latent -> decoder initial hidden ----
    hx = jnp.dot(z, wlat_ref[...], preferred_element_type=f32) + blat_ref[...]

    # ---- decoder RNN: hidden states overwrite the (now dead) xdec slots ----
    def dec_step(t, hs):
        xt = xdec_scr[t]                                       # (tB, H) read before write
        new_hs = []
        h_store = []
        for c in range(n_il):
            h = hs[c]
            h_new = jnp.tanh(xt[c * cB:(c + 1) * cB]
                             + jnp.dot(h, whh_d, preferred_element_type=f32))
            h_store.append(h_new)
            new_hs.append(jnp.where(t < lens_chunks[c], h_new, h))
        xdec_scr[t] = h_store[0] if n_il == 1 else jnp.concatenate(h_store, axis=0)
        return tuple(new_hs)

    hx0 = tuple(hx[c * cB:(c + 1) * cB] for c in range(n_il))
    lax.fori_loop(0, T, dec_step, hx0, unroll=unroll)

    # ---- deferred output projection + single masked store (no lane padding to HBM) ----
    y_full = (jnp.dot(xdec_scr[...].reshape(T * tB, H), wout_ref[...],
                      preferred_element_type=f32)
              + bout_ref[...]).reshape(T, tB, -1)
    t_iota = lax.broadcasted_iota(jnp.int32, (T, tB, 1), 0)
    valid = t_iota < lens_col[None]                            # (T, tB, 1) bool
    y_ref[...] = jnp.where(valid, y_full, 0.0)


# ---------------------------------------------------------------------------
# Wrapper: padding, head/bias fusion, batch-grid pallas_call plumbing
# ---------------------------------------------------------------------------
def rvae_forward(nois_f0s, nois, lens, max_len, params, batch_tile=16):
    T, B, n_in_enc = nois_f0s.shape
    n_nois = nois.shape[2]
    H = params["w_hh_e"].shape[0]
    n_feats = params["w_out"].shape[1]
    n_latent = params["w_mu"].shape[1]

    # batch tiling: pad batch so the sublane dim of every tile is a multiple of 8 and
    # the grid divides the padded batch exactly.
    if B <= batch_tile:
        Bp = ((B + 7) // 8) * 8
        tB = Bp
    else:
        Bp = ((B + batch_tile - 1) // batch_tile) * batch_tile
        tB = batch_tile
    pad_b = Bp - B
    n_blocks = Bp // tB

    nois_f0s_p = jnp.pad(nois_f0s, ((0, 0), (0, pad_b), (0, 0)))
    nois_p = jnp.pad(nois, ((0, 0), (0, pad_b), (0, 0)))
    lens_col = jnp.pad(lens.astype(jnp.int32), (0, pad_b))[:, None]   # (Bp, 1)

    # fused VAE heads, pre-folded RNN biases; output projection kept UNPADDED so y's
    # HBM writeback is n_feats lanes, not 128.
    w_heads = jnp.concatenate([params["w_mu"], params["w_lv"]], axis=1)
    b_heads = jnp.concatenate([params["b_mu"], params["b_lv"]], axis=1)
    b_enc = params["b_ih_e"] + params["b_hh_e"]
    b_dec = params["b_ih_d"] + params["b_hh_d"]

    weight_inputs = (
        params["w_ih_e"], params["w_hh_e"], b_enc,
        params["w_ih_d"], params["w_hh_d"], b_dec,
        w_heads, b_heads,
        params["w_lat"], params["b_lat"],
        params["w_out"], params["b_out"],
    )
    kernel_inputs = (nois_f0s_p, nois_p, lens_col) + weight_inputs

    def full_block(shape):
        nd = len(shape)
        return pl.BlockSpec(shape, lambda b: (0,) * nd)

    in_specs = [
        pl.BlockSpec((T, tB, n_in_enc), lambda b: (0, b, 0)),   # nois_f0s
        pl.BlockSpec((T, tB, n_nois), lambda b: (0, b, 0)),     # nois
        pl.BlockSpec((tB, 1), lambda b: (b, 0)),                # lens
    ] + [full_block(w.shape) for w in weight_inputs]

    out_shapes = (
        jax.ShapeDtypeStruct((T, Bp, n_feats), jnp.float32),    # y
        jax.ShapeDtypeStruct((1, Bp, n_latent), jnp.float32),   # z
        jax.ShapeDtypeStruct((1, Bp, n_latent), jnp.float32),   # mu
        jax.ShapeDtypeStruct((1, Bp, n_latent), jnp.float32),   # logvar
    )
    out_specs = (
        pl.BlockSpec((T, tB, n_feats), lambda b: (0, b, 0)),
        pl.BlockSpec((1, tB, n_latent), lambda b: (0, b, 0)),
        pl.BlockSpec((1, tB, n_latent), lambda b: (0, b, 0)),
        pl.BlockSpec((1, tB, n_latent), lambda b: (0, b, 0)),
    )

    # explicit VMEM budget (per-core): double-buffered blocks + scratch + weights.
    weights_elems = sum(int(w.size) for w in weight_inputs)
    block_in_elems = T * tB * (n_in_enc + n_nois) + tB
    block_out_elems = T * tB * n_feats + 3 * tB * n_latent
    scratch_elems = 2 * T * tB * H
    est_bytes = 4 * (2 * (block_in_elems + block_out_elems) + scratch_elems + weights_elems)
    assert est_bytes < (48 << 20), (
        "VMEM estimate too large; TODO(synk): enable T-tiling (grid over time) first")
    vmem_limit = int(min(max(4 * est_bytes, 16 << 20), 100 << 20))

    flops = 2 * (T * Bp * (n_in_enc * H + n_nois * H + 2 * H * H + H * n_feats)
                 + Bp * (H * 2 * n_latent + n_latent * H))
    bytes_accessed = 4 * (T * Bp * (n_in_enc + n_nois + n_feats)
                          + Bp * (1 + 3 * n_latent) + weights_elems)

    y_p, z_p, mu_p, lv_p = pl.pallas_call(
        rvae_kernel,
        out_shape=out_shapes,
        grid_spec=pltpu.PrefetchScalarGridSpec(
            num_scalar_prefetch=0,
            grid=(n_blocks,),
            in_specs=in_specs,
            out_specs=out_specs,
            scratch_shapes=[
                pltpu.VMEM((T, tB, H), jnp.float32),   # hoisted encoder inputs
                pltpu.VMEM((T, tB, H), jnp.float32),   # decoder inputs -> decoder hiddens
            ],
        ),
        compiler_params=pltpu.CompilerParams(
            dimension_semantics=("parallel",),         # batch tiles independent (2 TCs on v7x)
            vmem_limit_bytes=vmem_limit,
        ),
        cost_estimate=pl.CostEstimate(
            flops=int(flops),
            transcendentals=int(2 * T * Bp * H),
            bytes_accessed=int(bytes_accessed),
        ),
    )(*kernel_inputs)

    # slice away batch padding only (no lane padding was written to HBM)
    y = y_p[:, :B]
    z = z_p[:, :B]
    mu = mu_p[:, :B]
    logvar = lv_p[:, :B]
    return y, z, mu, logvar


# ---------------------------------------------------------------------------
# Deterministic parameter init (shapes follow RVAEModel.__init__, transposed to (in, out))
# ---------------------------------------------------------------------------
def init_params(key, n_feats, n_nois, n_hidden, n_latent):
    n_in_enc = n_nois + n_feats
    k = 1.0 / jnp.sqrt(jnp.float32(n_hidden))

    def uni(key, shape):
        return jax.random.uniform(key, shape, jnp.float32, -k, k)

    keys = jax.random.split(key, 16)
    return {
        # encoder RNN: input n_nois+n_feats -> n_hidden
        "w_ih_e": uni(keys[0], (n_in_enc, n_hidden)),
        "b_ih_e": uni(keys[1], (1, n_hidden)),
        "w_hh_e": uni(keys[2], (n_hidden, n_hidden)),
        "b_hh_e": uni(keys[3], (1, n_hidden)),
        # decoder RNN: input n_nois -> n_hidden
        "w_ih_d": uni(keys[4], (n_nois, n_hidden)),
        "b_ih_d": uni(keys[5], (1, n_hidden)),
        "w_hh_d": uni(keys[6], (n_hidden, n_hidden)),
        "b_hh_d": uni(keys[7], (1, n_hidden)),
        # enc_mu / enc_logvar: n_hidden -> n_latent
        "w_mu": uni(keys[8], (n_hidden, n_latent)),
        "b_mu": uni(keys[9], (1, n_latent)),
        "w_lv": uni(keys[10], (n_hidden, n_latent)),
        "b_lv": uni(keys[11], (1, n_latent)),
        # lat_to_input: n_latent -> n_hidden  (vae_as_input=False)
        "w_lat": uni(keys[12], (n_latent, n_hidden)),
        "b_lat": uni(keys[13], (1, n_hidden)),
        # out: n_hidden -> n_feats
        "w_out": uni(keys[14], (n_hidden, n_feats)),
        "b_out": uni(keys[15], (1, n_feats)),
    }


# ---------------------------------------------------------------------------
# Pure-JAX reference (same math) for a sanity check
# ---------------------------------------------------------------------------
def rvae_reference(nois_f0s, nois, lens, max_len, p):
    T, B, _ = nois_f0s.shape
    H = p["w_hh_e"].shape[0]
    mask = (jnp.arange(T)[:, None] < lens[None, :]).astype(jnp.float32)[:, :, None]

    def enc_step(h, xm):
        x, m = xm
        h_new = jnp.tanh(x @ p["w_ih_e"] + p["b_ih_e"] + h @ p["w_hh_e"] + p["b_hh_e"])
        return m * h_new + (1.0 - m) * h, None

    h_enc, _ = lax.scan(enc_step, jnp.zeros((B, H), jnp.float32), (nois_f0s, mask))
    mu = h_enc @ p["w_mu"] + p["b_mu"]
    logvar = h_enc @ p["w_lv"] + p["b_lv"]
    z = mu
    hx = z @ p["w_lat"] + p["b_lat"]

    def dec_step(h, xm):
        x, m = xm
        h_new = jnp.tanh(x @ p["w_ih_d"] + p["b_ih_d"] + h @ p["w_hh_d"] + p["b_hh_d"])
        y_t = (h_new @ p["w_out"] + p["b_out"]) * m
        return m * h_new + (1.0 - m) * h, y_t

    _, y = lax.scan(dec_step, hx, (nois, mask))
    return y, z[None], mu[None], logvar[None]


if __name__ == "__main__":
    # Model config (RVAEModel(n_feats=4, n_nois=3, hidden_units=[32], n_latent=8, 'rnn'))
    n_feats, n_nois, n_hidden, n_latent = 4, 3, 32, 8
    T, B = 8, 28                                      # max_len, batch (Bp=32 -> 2 grid blocks)
    # descending lens, as pack_padded_sequence requires
    lens = jnp.maximum(1, T - (jnp.arange(B) * T) // B).astype(jnp.int32)

    key = jax.random.PRNGKey(0)
    kp, kx, kn = jax.random.split(key, 3)
    params = init_params(kp, n_feats, n_nois, n_hidden, n_latent)

    nois_f0s = jax.random.normal(kx, (T, B, n_nois + n_feats), jnp.float32)
    nois = jax.random.normal(kn, (T, B, n_nois), jnp.float32)

    y, z, mu, logvar = jax.jit(
        functools.partial(rvae_forward, max_len=T, params=params)
    )(nois_f0s, nois, lens)
    jax.block_until_ready((y, z, mu, logvar))

    # correctness check against pure-JAX reference
    y_r, z_r, mu_r, lv_r = rvae_reference(nois_f0s, nois, lens, T, params)
    assert jnp.allclose(y, y_r, atol=1e-5), "y mismatch"
    assert jnp.allclose(z, z_r, atol=1e-5), "z mismatch"
    assert jnp.allclose(mu, mu_r, atol=1e-5), "mu mismatch"
    assert jnp.allclose(logvar, lv_r, atol=1e-5), "logvar mismatch"

    print("KERNEL_OK")
</pallas_src>

<mosaic_0001>
module attributes {stable_mosaic.version = 11 : i64} {
  func.func @rvae_kernel(%arg0: i32, %arg1: memref<8x16x7xf32, #tpu.memory_space<vmem>>, %arg2: memref<8x16x3xf32, #tpu.memory_space<vmem>>, %arg3: memref<16x1xi32, #tpu.memory_space<vmem>>, %arg4: memref<7x32xf32, #tpu.memory_space<vmem>>, %arg5: memref<32x32xf32, #tpu.memory_space<vmem>>, %arg6: memref<1x32xf32, #tpu.memory_space<vmem>>, %arg7: memref<3x32xf32, #tpu.memory_space<vmem>>, %arg8: memref<32x32xf32, #tpu.memory_space<vmem>>, %arg9: memref<1x32xf32, #tpu.memory_space<vmem>>, %arg10: memref<32x16xf32, #tpu.memory_space<vmem>>, %arg11: memref<1x16xf32, #tpu.memory_space<vmem>>, %arg12: memref<8x32xf32, #tpu.memory_space<vmem>>, %arg13: memref<1x32xf32, #tpu.memory_space<vmem>>, %arg14: memref<32x4xf32, #tpu.memory_space<vmem>>, %arg15: memref<1x4xf32, #tpu.memory_space<vmem>>, %arg16: memref<8x16x4xf32, #tpu.memory_space<vmem>>, %arg17: memref<1x16x8xf32, #tpu.memory_space<vmem>>, %arg18: memref<1x16x8xf32, #tpu.memory_space<vmem>>, %arg19: memref<1x16x8xf32, #tpu.memory_space<vmem>>, %arg20: memref<8x16x32xf32, #tpu.memory_space<vmem>>, %arg21: memref<8x16x32xf32, #tpu.memory_space<vmem>>) attributes {dimension_semantics = [#tpu.dimension_semantics<parallel>], iteration_bounds = array<i64: 2>, scalar_prefetch = 0 : i64, scratch_operands = 2 : i64, tpu.core_type = #tpu.core_type<tc>, window_params = [{transform_indices = @transform_0, window_bounds = array<i64: 8, 16, 7>}, {transform_indices = @transform_1, window_bounds = array<i64: 8, 16, 3>}, {transform_indices = @transform_2, window_bounds = array<i64: 16, 1>}, {pipeline_mode = #tpu.pipeline_mode<synchronous>, transform_indices = @transform_3, window_bounds = array<i64: 7, 32>}, {pipeline_mode = #tpu.pipeline_mode<synchronous>, transform_indices = @transform_4, window_bounds = array<i64: 32, 32>}, {pipeline_mode = #tpu.pipeline_mode<synchronous>, transform_indices = @transform_5, window_bounds = array<i64: 1, 32>}, {pipeline_mode = #tpu.pipeline_mode<synchronous>, transform_indices = @transform_6, window_bounds = array<i64: 3, 32>}, {pipeline_mode = #tpu.pipeline_mode<synchronous>, transform_indices = @transform_7, window_bounds = array<i64: 32, 32>}, {pipeline_mode = #tpu.pipeline_mode<synchronous>, transform_indices = @transform_8, window_bounds = array<i64: 1, 32>}, {pipeline_mode = #tpu.pipeline_mode<synchronous>, transform_indices = @transform_9, window_bounds = array<i64: 32, 16>}, {pipeline_mode = #tpu.pipeline_mode<synchronous>, transform_indices = @transform_10, window_bounds = array<i64: 1, 16>}, {pipeline_mode = #tpu.pipeline_mode<synchronous>, transform_indices = @transform_11, window_bounds = array<i64: 8, 32>}, {pipeline_mode = #tpu.pipeline_mode<synchronous>, transform_indices = @transform_12, window_bounds = array<i64: 1, 32>}, {pipeline_mode = #tpu.pipeline_mode<synchronous>, transform_indices = @transform_13, window_bounds = array<i64: 32, 4>}, {pipeline_mode = #tpu.pipeline_mode<synchronous>, transform_indices = @transform_14, window_bounds = array<i64: 1, 4>}, {transform_indices = @transform_15, window_bounds = array<i64: 8, 16, 4>}, {transform_indices = @transform_16, window_bounds = array<i64: 1, 16, 8>}, {transform_indices = @transform_17, window_bounds = array<i64: 1, 16, 8>}, {transform_indices = @transform_18, window_bounds = array<i64: 1, 16, 8>}]} {
    %c0 = arith.constant 0 : index
    %c0_0 = arith.constant 0 : index
    %0 = vector.load %arg3[%c0, %c0_0] : memref<16x1xi32, #tpu.memory_space<vmem>>, vector<16x1xi32>
    %1 = vector.extract_strided_slice %0 {offsets = [0, 0], sizes = [8, 1], strides = [1, 1]} : vector<16x1xi32> to vector<8x1xi32>
    %2 = vector.extract_strided_slice %0 {offsets = [8, 0], sizes = [8, 1], strides = [1, 1]} : vector<16x1xi32> to vector<8x1xi32>
    %c0_1 = arith.constant 0 : index
    %c0_2 = arith.constant 0 : index
    %c0_3 = arith.constant 0 : index
    %3 = vector.load %arg1[%c0_1, %c0_2, %c0_3] : memref<8x16x7xf32, #tpu.memory_space<vmem>>, vector<8x16x7xf32>
    %4 = vector.shape_cast %3 : vector<8x16x7xf32> to vector<128x7xf32>
    %c0_4 = arith.constant 0 : index
    %c0_5 = arith.constant 0 : index
    %5 = vector.load %arg4[%c0_4, %c0_5] : memref<7x32xf32, #tpu.memory_space<vmem>>, vector<7x32xf32>
    %cst = arith.constant dense<0.000000e+00> : vector<128x32xf32>
    %6 = tpu.matmul %4, %5, %cst {dimension_numbers = #tpu.dot_dimension_numbers<[1], [0], [0], [1], [0, 0, 1, 1], [], []>} : vector<128x7xf32>, vector<7x32xf32>, vector<128x32xf32> -> vector<128x32xf32>
    %c0_6 = arith.constant 0 : index
    %c0_7 = arith.constant 0 : index
    %7 = vector.load %arg6[%c0_6, %c0_7] : memref<1x32xf32, #tpu.memory_space<vmem>>, vector<1x32xf32>
    %8 = vector.broadcast %7 : vector<1x32xf32> to vector<128x32xf32>
    %9 = arith.addf %6, %8 : vector<128x32xf32>
    %10 = vector.shape_cast %9 : vector<128x32xf32> to vector<8x16x32xf32>
    %c0_8 = arith.constant 0 : index
    %c0_9 = arith.constant 0 : index
    %c0_10 = arith.constant 0 : index
    %11 = vector.load %arg20[%c0_8, %c0_9, %c0_10] : memref<8x16x32xf32, #tpu.memory_space<vmem>>, vector<8x16x32xf32>
    tpu.vector_store %arg20[%c0_8, %c0_9, %c0_10], %10 {strides = array<i32>} : memref<8x16x32xf32, #tpu.memory_space<vmem>>, vector<8x16x32xf32>,
    %c0_11 = arith.constant 0 : index
    %c0_12 = arith.constant 0 : index
    %c0_13 = arith.constant 0 : index
    %12 = vector.load %arg2[%c0_11, %c0_12, %c0_13] : memref<8x16x3xf32, #tpu.memory_space<vmem>>, vector<8x16x3xf32>
    %13 = vector.shape_cast %12 : vector<8x16x3xf32> to vector<128x3xf32>
    %c0_14 = arith.constant 0 : index
    %c0_15 = arith.constant 0 : index
    %14 = vector.load %arg7[%c0_14, %c0_15] : memref<3x32xf32, #tpu.memory_space<vmem>>, vector<3x32xf32>
    %cst_16 = arith.constant dense<0.000000e+00> : vector<128x32xf32>
    %15 = tpu.matmul %13, %14, %cst_16 {dimension_numbers = #tpu.dot_dimension_numbers<[1], [0], [0], [1], [0, 0, 1, 1], [], []>} : vector<128x3xf32>, vector<3x32xf32>, vector<128x32xf32> -> vector<128x32xf32>
    %c0_17 = arith.constant 0 : index
    %c0_18 = arith.constant 0 : index
    %16 = vector.load %arg9[%c0_17, %c0_18] : memref<1x32xf32, #tpu.memory_space<vmem>>, vector<1x32xf32>
    %17 = vector.broadcast %16 : vector<1x32xf32> to vector<128x32xf32>
    %18 = arith.addf %15, %17 : vector<128x32xf32>
    %19 = vector.shape_cast %18 : vector<128x32xf32> to vector<8x16x32xf32>
    %c0_19 = arith.constant 0 : index
    %c0_20 = arith.constant 0 : index
    %c0_21 = arith.constant 0 : index
    %20 = vector.load %arg21[%c0_19, %c0_20, %c0_21] : memref<8x16x32xf32, #tpu.memory_space<vmem>>, vector<8x16x32xf32>
    tpu.vector_store %arg21[%c0_19, %c0_20, %c0_21], %19 {strides = array<i32>} : memref<8x16x32xf32, #tpu.memory_space<vmem>>, vector<8x16x32xf32>,
    %c0_22 = arith.constant 0 : index
    %c0_23 = arith.constant 0 : index
    %21 = vector.load %arg5[%c0_22, %c0_23] : memref<32x32xf32, #tpu.memory_space<vmem>>, vector<32x32xf32>
    %c0_24 = arith.constant 0 : index
    %c0_25 = arith.constant 0 : index
    %22 = vector.load %arg8[%c0_24, %c0_25] : memref<32x32xf32, #tpu.memory_space<vmem>>, vector<32x32xf32>
    %cst_26 = arith.constant 0.000000e+00 : f32
    %23 = vector.broadcast %cst_26 : f32 to vector<8x32xf32>
    %cst_27 = arith.constant 0.000000e+00 : f32
    %24 = vector.broadcast %cst_27 : f32 to vector<8x32xf32>
    %c0_i32 = arith.constant 0 : i32
    %25 = arith.index_cast %c0_i32 : i32 to index
    %c0_28 = arith.constant 0 : index
    %c0_29 = arith.constant 0 : index
    %26 = vector.load %arg20[%25, %c0_28, %c0_29] : memref<8x16x32xf32, #tpu.memory_space<vmem>>, vector<1x16x32xf32>
    %27 = vector.shape_cast %26 : vector<1x16x32xf32> to vector<16x32xf32>
    %28 = vector.extract_strided_slice %27 {offsets = [0, 0], sizes = [8, 32], strides = [1, 1]} : vector<16x32xf32> to vector<8x32xf32>
    %cst_30 = arith.constant dense<0.000000e+00> : vector<8x32xf32>
    %29 = tpu.matmul %23, %21, %cst_30 {dimension_numbers = #tpu.dot_dimension_numbers<[1], [0], [0], [1], [0, 0, 1, 1], [], []>} : vector<8x32xf32>, vector<32x32xf32>, vector<8x32xf32> -> vector<8x32xf32>
    %30 = arith.addf %28, %29 : vector<8x32xf32>
    %31 = math.tanh %30 : vector<8x32xf32>
    %32 = vector.broadcast %c0_i32 : i32 to vector<8x1xi32>
    %33 = arith.cmpi slt, %32, %1 : vector<8x1xi32>
    %34 = vector.shape_cast %33 : vector<8x1xi1> to vector<8x1xi1>
    %35 = vector.broadcast %34 : vector<8x1xi1> to vector<8x32xi1>
    %36 = arith.select %35, %31, %23 : vector<8x32xi1>, vector<8x32xf32>
    %37 = vector.extract_strided_slice %27 {offsets = [8, 0], sizes = [8, 32], strides = [1, 1]} : vector<16x32xf32> to vector<8x32xf32>
    %cst_31 = arith.constant dense<0.000000e+00> : vector<8x32xf32>
    %38 = tpu.matmul %24, %21, %cst_31 {dimension_numbers = #tpu.dot_dimension_numbers<[1], [0], [0], [1], [0, 0, 1, 1], [], []>} : vector<8x32xf32>, vector<32x32xf32>, vector<8x32xf32> -> vector<8x32xf32>
    %39 = arith.addf %37, %38 : vector<8x32xf32>
    %40 = math.tanh %39 : vector<8x32xf32>
    %41 = vector.broadcast %c0_i32 : i32 to vector<8x1xi32>
    %42 = arith.cmpi slt, %41, %2 : vector<8x1xi32>
    %43 = vector.shape_cast %42 : vector<8x1xi1> to vector<8x1xi1>
    %44 = vector.broadcast %43 : vector<8x1xi1> to vector<8x32xi1>
    %45 = arith.select %44, %40, %24 : vector<8x32xi1>, vector<8x32xf32>
    %c1_i32 = arith.constant 1 : i32
    %46 = arith.index_cast %c1_i32 : i32 to index
    %c0_32 = arith.constant 0 : index
    %c0_33 = arith.constant 0 : index
    %47 = vector.load %arg20[%46, %c0_32, %c0_33] : memref<8x16x32xf32, #tpu.memory_space<vmem>>, vector<1x16x32xf32>
    %48 = vector.shape_cast %47 : vector<1x16x32xf32> to vector<16x32xf32>
    %49 = vector.extract_strided_slice %48 {offsets = [0, 0], sizes = [8, 32], strides = [1, 1]} : vector<16x32xf32> to vector<8x32xf32>
    %cst_34 = arith.constant dense<0.000000e+00> : vector<8x32xf32>
    %50 = tpu.matmul %36, %21, %cst_34 {dimension_numbers = #tpu.dot_dimension_numbers<[1], [0], [0], [1], [0, 0, 1, 1], [], []>} : vector<8x32xf32>, vector<32x32xf32>, vector<8x32xf32> -> vector<8x32xf32>
    %51 = arith.addf %49, %50 : vector<8x32xf32>
    %52 = math.tanh %51 : vector<8x32xf32>
    %53 = vector.broadcast %c1_i32 : i32 to vector<8x1xi32>
    %54 = arith.cmpi slt, %53, %1 : vector<8x1xi32>
    %55 = vector.shape_cast %54 : vector<8x1xi1> to vector<8x1xi1>
    %56 = vector.broadcast %55 : vector<8x1xi1> to vector<8x32xi1>
    %57 = arith.select %56, %52, %36 : vector<8x32xi1>, vector<8x32xf32>
    %58 = vector.extract_strided_slice %48 {offsets = [8, 0], sizes = [8, 32], strides = [1, 1]} : vector<16x32xf32> to vector<8x32xf32>
    %cst_35 = arith.constant dense<0.000000e+00> : vector<8x32xf32>
    %59 = tpu.matmul %45, %21, %cst_35 {dimension_numbers = #tpu.dot_dimension_numbers<[1], [0], [0], [1], [0, 0, 1, 1], [], []>} : vector<8x32xf32>, vector<32x32xf32>, vector<8x32xf32> -> vector<8x32xf32>
    %60 = arith.addf %58, %59 : vector<8x32xf32>
    %61 = math.tanh %60 : vector<8x32xf32>
    %62 = vector.broadcast %c1_i32 : i32 to vector<8x1xi32>
    %63 = arith.cmpi slt, %62, %2 : vector<8x1xi32>
    %64 = vector.shape_cast %63 : vector<8x1xi1> to vector<8x1xi1>
    %65 = vector.broadcast %64 : vector<8x1xi1> to vector<8x32xi1>
    %66 = arith.select %65, %61, %45 : vector<8x32xi1>, vector<8x32xf32>
    %c2_i32 = arith.constant 2 : i32
    %67 = arith.index_cast %c2_i32 : i32 to index
    %c0_36 = arith.constant 0 : index
    %c0_37 = arith.constant 0 : index
    %68 = vector.load %arg20[%67, %c0_36, %c0_37] : memref<8x16x32xf32, #tpu.memory_space<vmem>>, vector<1x16x32xf32>
    %69 = vector.shape_cast %68 : vector<1x16x32xf32> to vector<16x32xf32>
    %70 = vector.extract_strided_slice %69 {offsets = [0, 0], sizes = [8, 32], strides = [1, 1]} : vector<16x32xf32> to vector<8x32xf32>
    %cst_38 = arith.constant dense<0.000000e+00> : vector<8x32xf32>
    %71 = tpu.matmul %57, %21, %cst_38 {dimension_numbers = #tpu.dot_dimension_numbers<[1], [0], [0], [1], [0, 0, 1, 1], [], []>} : vector<8x32xf32>, vector<32x32xf32>, vector<8x32xf32> -> vector<8x32xf32>
    %72 = arith.addf %70, %71 : vector<8x32xf32>
    %73 = math.tanh %72 : vector<8x32xf32>
    %74 = vector.broadcast %c2_i32 : i32 to vector<8x1xi32>
    %75 = arith.cmpi slt, %74, %1 : vector<8x1xi32>
    %76 = vector.shape_cast %75 : vector<8x1xi1> to vector<8x1xi1>
    %77 = vector.broadcast %76 : vector<8x1xi1> to vector<8x32xi1>
    %78 = arith.select %77, %73, %57 : vector<8x32xi1>, vector<8x32xf32>
    %79 = vector.extract_strided_slice %69 {offsets = [8, 0], sizes = [8, 32], strides = [1, 1]} : vector<16x32xf32> to vector<8x32xf32>
    %cst_39 = arith.constant dense<0.000000e+00> : vector<8x32xf32>
    %80 = tpu.matmul %66, %21, %cst_39 {dimension_numbers = #tpu.dot_dimension_numbers<[1], [0], [0], [1], [0, 0, 1, 1], [], []>} : vector<8x32xf32>, vector<32x32xf32>, vector<8x32xf32> -> vector<8x32xf32>
    %81 = arith.addf %79, %80 : vector<8x32xf32>
    %82 = math.tanh %81 : vector<8x32xf32>
    %83 = vector.broadcast %c2_i32 : i32 to vector<8x1xi32>
    %84 = arith.cmpi slt, %83, %2 : vector<8x1xi32>
    %85 = vector.shape_cast %84 : vector<8x1xi1> to vector<8x1xi1>
    %86 = vector.broadcast %85 : vector<8x1xi1> to vector<8x32xi1>
    %87 = arith.select %86, %82, %66 : vector<8x32xi1>, vector<8x32xf32>
    %c3_i32 = arith.constant 3 : i32
    %88 = arith.index_cast %c3_i32 : i32 to index
    %c0_40 = arith.constant 0 : index
    %c0_41 = arith.constant 0 : index
    %89 = vector.load %arg20[%88, %c0_40, %c0_41] : memref<8x16x32xf32, #tpu.memory_space<vmem>>, vector<1x16x32xf32>
    %90 = vector.shape_cast %89 : vector<1x16x32xf32> to vector<16x32xf32>
    %91 = vector.extract_strided_slice %90 {offsets = [0, 0], sizes = [8, 32], strides = [1, 1]} : vector<16x32xf32> to vector<8x32xf32>
    %cst_42 = arith.constant dense<0.000000e+00> : vector<8x32xf32>
    %92 = tpu.matmul %78, %21, %cst_42 {dimension_numbers = #tpu.dot_dimension_numbers<[1], [0], [0], [1], [0, 0, 1, 1], [], []>} : vector<8x32xf32>, vector<32x32xf32>, vector<8x32xf32> -> vector<8x32xf32>
    %93 = arith.addf %91, %92 : vector<8x32xf32>
    %94 = math.tanh %93 : vector<8x32xf32>
    %95 = vector.broadcast %c3_i32 : i32 to vector<8x1xi32>
    %96 = arith.cmpi slt, %95, %1 : vector<8x1xi32>
    %97 = vector.shape_cast %96 : vector<8x1xi1> to vector<8x1xi1>
    %98 = vector.broadcast %97 : vector<8x1xi1> to vector<8x32xi1>
    %99 = arith.select %98, %94, %78 : vector<8x32xi1>, vector<8x32xf32>
    %100 = vector.extract_strided_slice %90 {offsets = [8, 0], sizes = [8, 32], strides = [1, 1]} : vector<16x32xf32> to vector<8x32xf32>
    %cst_43 = arith.constant dense<0.000000e+00> : vector<8x32xf32>
    %101 = tpu.matmul %87, %21, %cst_43 {dimension_numbers = #tpu.dot_dimension_numbers<[1], [0], [0], [1], [0, 0, 1, 1], [], []>} : vector<8x32xf32>, vector<32x32xf32>, vector<8x32xf32> -> vector<8x32xf32>
    %102 = arith.addf %100, %101 : vector<8x32xf32>
    %103 = math.tanh %102 : vector<8x32xf32>
    %104 = vector.broadcast %c3_i32 : i32 to vector<8x1xi32>
    %105 = arith.cmpi slt, %104, %2 : vector<8x1xi32>
    %106 = vector.shape_cast %105 : vector<8x1xi1> to vector<8x1xi1>
    %107 = vector.broadcast %106 : vector<8x1xi1> to vector<8x32xi1>
    %108 = arith.select %107, %103, %87 : vector<8x32xi1>, vector<8x32xf32>
    %c4_i32 = arith.constant 4 : i32
    %109 = arith.index_cast %c4_i32 : i32 to index
    %c0_44 = arith.constant 0 : index
    %c0_45 = arith.constant 0 : index
    %110 = vector.load %arg20[%109, %c0_44, %c0_45] : memref<8x16x32xf32, #tpu.memory_space<vmem>>, vector<1x16x32xf32>
    %111 = vector.shape_cast %110 : vector<1x16x32xf32> to vector<16x32xf32>
    %112 = vector.extract_strided_slice %111 {offsets = [0, 0], sizes = [8, 32], strides = [1, 1]} : vector<16x32xf32> to vector<8x32xf32>
    %cst_46 = arith.constant dense<0.000000e+00> : vector<8x32xf32>
    %113 = tpu.matmul %99, %21, %cst_46 {dimension_numbers = #tpu.dot_dimension_numbers<[1], [0], [0], [1], [0, 0, 1, 1], [], []>} : vector<8x32xf32>, vector<32x32xf32>, vector<8x32xf32> -> vector<8x32xf32>
    %114 = arith.addf %112, %113 : vector<8x32xf32>
    %115 = math.tanh %114 : vector<8x32xf32>
    %116 = vector.broadcast %c4_i32 : i32 to vector<8x1xi32>
    %117 = arith.cmpi slt, %116, %1 : vector<8x1xi32>
    %118 = vector.shape_cast %117 : vector<8x1xi1> to vector<8x1xi1>
    %119 = vector.broadcast %118 : vector<8x1xi1> to vector<8x32xi1>
    %120 = arith.select %119, %115, %99 : vector<8x32xi1>, vector<8x32xf32>
    %121 = vector.extract_strided_slice %111 {offsets = [8, 0], sizes = [8, 32], strides = [1, 1]} : vector<16x32xf32> to vector<8x32xf32>
    %cst_47 = arith.constant dense<0.000000e+00> : vector<8x32xf32>
    %122 = tpu.matmul %108, %21, %cst_47 {dimension_numbers = #tpu.dot_dimension_numbers<[1], [0], [0], [1], [0, 0, 1, 1], [], []>} : vector<8x32xf32>, vector<32x32xf32>, vector<8x32xf32> -> vector<8x32xf32>
    %123 = arith.addf %121, %122 : vector<8x32xf32>
    %124 = math.tanh %123 : vector<8x32xf32>
    %125 = vector.broadcast %c4_i32 : i32 to vector<8x1xi32>
    %126 = arith.cmpi slt, %125, %2 : vector<8x1xi32>
    %127 = vector.shape_cast %126 : vector<8x1xi1> to vector<8x1xi1>
    %128 = vector.broadcast %127 : vector<8x1xi1> to vector<8x32xi1>
    %129 = arith.select %128, %124, %108 : vector<8x32xi1>, vector<8x32xf32>
    %c5_i32 = arith.constant 5 : i32
    %130 = arith.index_cast %c5_i32 : i32 to index
    %c0_48 = arith.constant 0 : index
    %c0_49 = arith.constant 0 : index
    %131 = vector.load %arg20[%130, %c0_48, %c0_49] : memref<8x16x32xf32, #tpu.memory_space<vmem>>, vector<1x16x32xf32>
    %132 = vector.shape_cast %131 : vector<1x16x32xf32> to vector<16x32xf32>
    %133 = vector.extract_strided_slice %132 {offsets = [0, 0], sizes = [8, 32], strides = [1, 1]} : vector<16x32xf32> to vector<8x32xf32>
    %cst_50 = arith.constant dense<0.000000e+00> : vector<8x32xf32>
    %134 = tpu.matmul %120, %21, %cst_50 {dimension_numbers = #tpu.dot_dimension_numbers<[1], [0], [0], [1], [0, 0, 1, 1], [], []>} : vector<8x32xf32>, vector<32x32xf32>, vector<8x32xf32> -> vector<8x32xf32>
    %135 = arith.addf %133, %134 : vector<8x32xf32>
    %136 = math.tanh %135 : vector<8x32xf32>
    %137 = vector.broadcast %c5_i32 : i32 to vector<8x1xi32>
    %138 = arith.cmpi slt, %137, %1 : vector<8x1xi32>
    %139 = vector.shape_cast %138 : vector<8x1xi1> to vector<8x1xi1>
    %140 = vector.broadcast %139 : vector<8x1xi1> to vector<8x32xi1>
    %141 = arith.select %140, %136, %120 : vector<8x32xi1>, vector<8x32xf32>
    %142 = vector.extract_strided_slice %132 {offsets = [8, 0], sizes = [8, 32], strides = [1, 1]} : vector<16x32xf32> to vector<8x32xf32>
    %cst_51 = arith.constant dense<0.000000e+00> : vector<8x32xf32>
    %143 = tpu.matmul %129, %21, %cst_51 {dimension_numbers = #tpu.dot_dimension_numbers<[1], [0], [0], [1], [0, 0, 1, 1], [], []>} : vector<8x32xf32>, vector<32x32xf32>, vector<8x32xf32> -> vector<8x32xf32>
    %144 = arith.addf %142, %143 : vector<8x32xf32>
    %145 = math.tanh %144 : vector<8x32xf32>
    %146 = vector.broadcast %c5_i32 : i32 to vector<8x1xi32>
    %147 = arith.cmpi slt, %146, %2 : vector<8x1xi32>
    %148 = vector.shape_cast %147 : vector<8x1xi1> to vector<8x1xi1>
    %149 = vector.broadcast %148 : vector<8x1xi1> to vector<8x32xi1>
    %150 = arith.select %149, %145, %129 : vector<8x32xi1>, vector<8x32xf32>
    %c6_i32 = arith.constant 6 : i32
    %151 = arith.index_cast %c6_i32 : i32 to index
    %c0_52 = arith.constant 0 : index
    %c0_53 = arith.constant 0 : index
    %152 = vector.load %arg20[%151, %c0_52, %c0_53] : memref<8x16x32xf32, #tpu.memory_space<vmem>>, vector<1x16x32xf32>
    %153 = vector.shape_cast %152 : vector<1x16x32xf32> to vector<16x32xf32>
    %154 = vector.extract_strided_slice %153 {offsets = [0, 0], sizes = [8, 32], strides = [1, 1]} : vector<16x32xf32> to vector<8x32xf32>
    %cst_54 = arith.constant dense<0.000000e+00> : vector<8x32xf32>
    %155 = tpu.matmul %141, %21, %cst_54 {dimension_numbers = #tpu.dot_dimension_numbers<[1], [0], [0], [1], [0, 0, 1, 1], [], []>} : vector<8x32xf32>, vector<32x32xf32>, vector<8x32xf32> -> vector<8x32xf32>
    %156 = arith.addf %154, %155 : vector<8x32xf32>
    %157 = math.tanh %156 : vector<8x32xf32>
    %158 = vector.broadcast %c6_i32 : i32 to vector<8x1xi32>
    %159 = arith.cmpi slt, %158, %1 : vector<8x1xi32>
    %160 = vector.shape_cast %159 : vector<8x1xi1> to vector<8x1xi1>
    %161 = vector.broadcast %160 : vector<8x1xi1> to vector<8x32xi1>
    %162 = arith.select %161, %157, %141 : vector<8x32xi1>, vector<8x32xf32>
    %163 = vector.extract_strided_slice %153 {offsets = [8, 0], sizes = [8, 32], strides = [1, 1]} : vector<16x32xf32> to vector<8x32xf32>
    %cst_55 = arith.constant dense<0.000000e+00> : vector<8x32xf32>
    %164 = tpu.matmul %150, %21, %cst_55 {dimension_numbers = #tpu.dot_dimension_numbers<[1], [0], [0], [1], [0, 0, 1, 1], [], []>} : vector<8x32xf32>, vector<32x32xf32>, vector<8x32xf32> -> vector<8x32xf32>
    %165 = arith.addf %163, %164 : vector<8x32xf32>
    %166 = math.tanh %165 : vector<8x32xf32>
    %167 = vector.broadcast %c6_i32 : i32 to vector<8x1xi32>
    %168 = arith.cmpi slt, %167, %2 : vector<8x1xi32>
    %169 = vector.shape_cast %168 : vector<8x1xi1> to vector<8x1xi1>
    %170 = vector.broadcast %169 : vector<8x1xi1> to vector<8x32xi1>
    %171 = arith.select %170, %166, %150 : vector<8x32xi1>, vector<8x32xf32>
    %c7_i32 = arith.constant 7 : i32
    %172 = arith.index_cast %c7_i32 : i32 to index
    %c0_56 = arith.constant 0 : index
    %c0_57 = arith.constant 0 : index
    %173 = vector.load %arg20[%172, %c0_56, %c0_57] : memref<8x16x32xf32, #tpu.memory_space<vmem>>, vector<1x16x32xf32>
    %174 = vector.shape_cast %173 : vector<1x16x32xf32> to vector<16x32xf32>
    %175 = vector.extract_strided_slice %174 {offsets = [0, 0], sizes = [8, 32], strides = [1, 1]} : vector<16x32xf32> to vector<8x32xf32>
    %cst_58 = arith.constant dense<0.000000e+00> : vector<8x32xf32>
    %176 = tpu.matmul %162, %21, %cst_58 {dimension_numbers = #tpu.dot_dimension_numbers<[1], [0], [0], [1], [0, 0, 1, 1], [], []>} : vector<8x32xf32>, vector<32x32xf32>, vector<8x32xf32> -> vector<8x32xf32>
    %177 = arith.addf %175, %176 : vector<8x32xf32>
    %178 = math.tanh %177 : vector<8x32xf32>
    %179 = vector.broadcast %c7_i32 : i32 to vector<8x1xi32>
    %180 = arith.cmpi slt, %179, %1 : vector<8x1xi32>
    %181 = vector.shape_cast %180 : vector<8x1xi1> to vector<8x1xi1>
    %182 = vector.broadcast %181 : vector<8x1xi1> to vector<8x32xi1>
    %183 = arith.select %182, %178, %162 : vector<8x32xi1>, vector<8x32xf32>
    %184 = vector.extract_strided_slice %174 {offsets = [8, 0], sizes = [8, 32], strides = [1, 1]} : vector<16x32xf32> to vector<8x32xf32>
    %cst_59 = arith.constant dense<0.000000e+00> : vector<8x32xf32>
    %185 = tpu.matmul %171, %21, %cst_59 {dimension_numbers = #tpu.dot_dimension_numbers<[1], [0], [0], [1], [0, 0, 1, 1], [], []>} : vector<8x32xf32>, vector<32x32xf32>, vector<8x32xf32> -> vector<8x32xf32>
    %186 = arith.addf %184, %185 : vector<8x32xf32>
    %187 = math.tanh %186 : vector<8x32xf32>
    %188 = vector.broadcast %c7_i32 : i32 to vector<8x1xi32>
    %189 = arith.cmpi slt, %188, %2 : vector<8x1xi32>
    %190 = vector.shape_cast %189 : vector<8x1xi1> to vector<8x1xi1>
    %191 = vector.broadcast %190 : vector<8x1xi1> to vector<8x32xi1>
    %192 = arith.select %191, %187, %171 : vector<8x32xi1>, vector<8x32xf32>
    %c8_i32 = arith.constant 8 : i32
    %193 = tpu.concatenate %183, %192 in 0 : vector<8x32xf32>, vector<8x32xf32> -> vector<16x32xf32>
    %c0_60 = arith.constant 0 : index
    %c0_61 = arith.constant 0 : index
    %194 = vector.load %arg10[%c0_60, %c0_61] : memref<32x16xf32, #tpu.memory_space<vmem>>, vector<32x16xf32>
    %cst_62 = arith.constant dense<0.000000e+00> : vector<16x16xf32>
    %195 = tpu.matmul %193, %194, %cst_62 {dimension_numbers = #tpu.dot_dimension_numbers<[1], [0], [0], [1], [0, 0, 1, 1], [], []>} : vector<16x32xf32>, vector<32x16xf32>, vector<16x16xf32> -> vector<16x16xf32>
    %c0_63 = arith.constant 0 : index
    %c0_64 = arith.constant 0 : index
    %196 = vector.load %arg11[%c0_63, %c0_64] : memref<1x16xf32, #tpu.memory_space<vmem>>, vector<1x16xf32>
    %197 = vector.broadcast %196 : vector<1x16xf32> to vector<16x16xf32>
    %198 = arith.addf %195, %197 : vector<16x16xf32>
    %199 = vector.extract_strided_slice %198 {offsets = [0, 0], sizes = [16, 8], strides = [1, 1]} : vector<16x16xf32> to vector<16x8xf32>
    %200 = vector.extract_strided_slice %198 {offsets = [0, 8], sizes = [16, 8], strides = [1, 1]} : vector<16x16xf32> to vector<16x8xf32>
    %c0_65 = arith.constant 0 : index
    %c0_66 = arith.constant 0 : index
    %c0_67 = arith.constant 0 : index
    %201 = vector.load %arg18[%c0_65, %c0_66, %c0_67] : memref<1x16x8xf32, #tpu.memory_space<vmem>>, vector<1x16x8xf32>
    %202 = vector.shape_cast %201 : vector<1x16x8xf32> to vector<16x8xf32>
    %203 = vector.shape_cast %199 : vector<16x8xf32> to vector<1x16x8xf32>
    tpu.vector_store %arg18[%c0_65, %c0_66, %c0_67], %203 {strides = array<i32>} : memref<1x16x8xf32, #tpu.memory_space<vmem>>, vector<1x16x8xf32>,
    %c0_68 = arith.constant 0 : index
    %c0_69 = arith.constant 0 : index
    %c0_70 = arith.constant 0 : index
    %204 = vector.load %arg19[%c0_68, %c0_69, %c0_70] : memref<1x16x8xf32, #tpu.memory_space<vmem>>, vector<1x16x8xf32>
    %205 = vector.shape_cast %204 : vector<1x16x8xf32> to vector<16x8xf32>
    %206 = vector.shape_cast %200 : vector<16x8xf32> to vector<1x16x8xf32>
    tpu.vector_store %arg19[%c0_68, %c0_69, %c0_70], %206 {strides = array<i32>} : memref<1x16x8xf32, #tpu.memory_space<vmem>>, vector<1x16x8xf32>,
    %c0_71 = arith.constant 0 : index
    %c0_72 = arith.constant 0 : index
    %c0_73 = arith.constant 0 : index
    %207 = vector.load %arg17[%c0_71, %c0_72, %c0_73] : memref<1x16x8xf32, #tpu.memory_space<vmem>>, vector<1x16x8xf32>
    %208 = vector.shape_cast %207 : vector<1x16x8xf32> to vector<16x8xf32>
    %209 = vector.shape_cast %199 : vector<16x8xf32> to vector<1x16x8xf32>
    tpu.vector_store %arg17[%c0_71, %c0_72, %c0_73], %209 {strides = array<i32>} : memref<1x16x8xf32, #tpu.memory_space<vmem>>, vector<1x16x8xf32>,
    %c0_74 = arith.constant 0 : index
    %c0_75 = arith.constant 0 : index
    %210 = vector.load %arg12[%c0_74, %c0_75] : memref<8x32xf32, #tpu.memory_space<vmem>>, vector<8x32xf32>
    %cst_76 = arith.constant dense<0.000000e+00> : vector<16x32xf32>
    %211 = tpu.matmul %199, %210, %cst_76 {dimension_numbers = #tpu.dot_dimension_numbers<[1], [0], [0], [1], [0, 0, 1, 1], [], []>} : vector<16x8xf32>, vector<8x32xf32>, vector<16x32xf32> -> vector<16x32xf32>
    %c0_77 = arith.constant 0 : index
    %c0_78 = arith.constant 0 : index
    %212 = vector.load %arg13[%c0_77, %c0_78] : memref<1x32xf32, #tpu.memory_space<vmem>>, vector<1x32xf32>
    %213 = vector.broadcast %212 : vector<1x32xf32> to vector<16x32xf32>
    %214 = arith.addf %211, %213 : vector<16x32xf32>
    %215 = vector.extract_strided_slice %214 {offsets = [0, 0], sizes = [8, 32], strides = [1, 1]} : vector<16x32xf32> to vector<8x32xf32>
    %216 = vector.extract_strided_slice %214 {offsets = [8, 0], sizes = [8, 32], strides = [1, 1]} : vector<16x32xf32> to vector<8x32xf32>
    %c0_i32_79 = arith.constant 0 : i32
    %217 = arith.index_cast %c0_i32_79 : i32 to index
    %c0_80 = arith.constant 0 : index
    %c0_81 = arith.constant 0 : index
    %218 = vector.load %arg21[%217, %c0_80, %c0_81] : memref<8x16x32xf32, #tpu.memory_space<vmem>>, vector<1x16x32xf32>
    %219 = vector.shape_cast %218 : vector<1x16x32xf32> to vector<16x32xf32>
    %220 = vector.extract_strided_slice %219 {offsets = [0, 0], sizes = [8, 32], strides = [1, 1]} : vector<16x32xf32> to vector<8x32xf32>
    %cst_82 = arith.constant dense<0.000000e+00> : vector<8x32xf32>
    %221 = tpu.matmul %215, %22, %cst_82 {dimension_numbers = #tpu.dot_dimension_numbers<[1], [0], [0], [1], [0, 0, 1, 1], [], []>} : vector<8x32xf32>, vector<32x32xf32>, vector<8x32xf32> -> vector<8x32xf32>
    %222 = arith.addf %220, %221 : vector<8x32xf32>
    %223 = math.tanh %222 : vector<8x32xf32>
    %224 = vector.broadcast %c0_i32_79 : i32 to vector<8x1xi32>
    %225 = arith.cmpi slt, %224, %1 : vector<8x1xi32>
    %226 = vector.shape_cast %225 : vector<8x1xi1> to vector<8x1xi1>
    %227 = vector.broadcast %226 : vector<8x1xi1> to vector<8x32xi1>
    %228 = arith.select %227, %223, %215 : vector<8x32xi1>, vector<8x32xf32>
    %229 = vector.extract_strided_slice %219 {offsets = [8, 0], sizes = [8, 32], strides = [1, 1]} : vector<16x32xf32> to vector<8x32xf32>
    %cst_83 = arith.constant dense<0.000000e+00> : vector<8x32xf32>
    %230 = tpu.matmul %216, %22, %cst_83 {dimension_numbers = #tpu.dot_dimension_numbers<[1], [0], [0], [1], [0, 0, 1, 1], [], []>} : vector<8x32xf32>, vector<32x32xf32>, vector<8x32xf32> -> vector<8x32xf32>
    %231 = arith.addf %229, %230 : vector<8x32xf32>
    %232 = math.tanh %231 : vector<8x32xf32>
    %233 = vector.broadcast %c0_i32_79 : i32 to vector<8x1xi32>
    %234 = arith.cmpi slt, %233, %2 : vector<8x1xi32>
    %235 = vector.shape_cast %234 : vector<8x1xi1> to vector<8x1xi1>
    %236 = vector.broadcast %235 : vector<8x1xi1> to vector<8x32xi1>
    %237 = arith.select %236, %232, %216 : vector<8x32xi1>, vector<8x32xf32>
    %238 = tpu.concatenate %223, %232 in 0 : vector<8x32xf32>, vector<8x32xf32> -> vector<16x32xf32>
    %239 = arith.index_cast %c0_i32_79 : i32 to index
    %c0_84 = arith.constant 0 : index
    %c0_85 = arith.constant 0 : index
    %240 = vector.load %arg21[%239, %c0_84, %c0_85] : memref<8x16x32xf32, #tpu.memory_space<vmem>>, vector<1x16x32xf32>
    %241 = vector.shape_cast %240 : vector<1x16x32xf32> to vector<16x32xf32>
    %242 = vector.shape_cast %238 : vector<16x32xf32> to vector<1x16x32xf32>
    tpu.vector_store %arg21[%239, %c0_84, %c0_85], %242 {strides = array<i32>} : memref<8x16x32xf32, #tpu.memory_space<vmem>>, vector<1x16x32xf32>,
    %c1_i32_86 = arith.constant 1 : i32
    %243 = arith.index_cast %c1_i32_86 : i32 to index
    %c0_87 = arith.constant 0 : index
    %c0_88 = arith.constant 0 : index
    %244 = vector.load %arg21[%243, %c0_87, %c0_88] : memref<8x16x32xf32, #tpu.memory_space<vmem>>, vector<1x16x32xf32>
    %245 = vector.shape_cast %244 : vector<1x16x32xf32> to vector<16x32xf32>
    %246 = vector.extract_strided_slice %245 {offsets = [0, 0], sizes = [8, 32], strides = [1, 1]} : vector<16x32xf32> to vector<8x32xf32>
    %cst_89 = arith.constant dense<0.000000e+00> : vector<8x32xf32>
    %247 = tpu.matmul %228, %22, %cst_89 {dimension_numbers = #tpu.dot_dimension_numbers<[1], [0], [0], [1], [0, 0, 1, 1], [], []>} : vector<8x32xf32>, vector<32x32xf32>, vector<8x32xf32> -> vector<8x32xf32>
    %248 = arith.addf %246, %247 : vector<8x32xf32>
    %249 = math.tanh %248 : vector<8x32xf32>
    %250 = vector.broadcast %c1_i32_86 : i32 to vector<8x1xi32>
    %251 = arith.cmpi slt, %250, %1 : vector<8x1xi32>
    %252 = vector.shape_cast %251 : vector<8x1xi1> to vector<8x1xi1>
    %253 = vector.broadcast %252 : vector<8x1xi1> to vector<8x32xi1>
    %254 = arith.select %253, %249, %228 : vector<8x32xi1>, vector<8x32xf32>
    %255 = vector.extract_strided_slice %245 {offsets = [8, 0], sizes = [8, 32], strides = [1, 1]} : vector<16x32xf32> to vector<8x32xf32>
    %cst_90 = arith.constant dense<0.000000e+00> : vector<8x32xf32>
    %256 = tpu.matmul %237, %22, %cst_90 {dimension_numbers = #tpu.dot_dimension_numbers<[1], [0], [0], [1], [0, 0, 1, 1], [], []>} : vector<8x32xf32>, vector<32x32xf32>, vector<8x32xf32> -> vector<8x32xf32>
    %257 = arith.addf %255, %256 : vector<8x32xf32>
    %258 = math.tanh %257 : vector<8x32xf32>
    %259 = vector.broadcast %c1_i32_86 : i32 to vector<8x1xi32>
    %260 = arith.cmpi slt, %259, %2 : vector<8x1xi32>
    %261 = vector.shape_cast %260 : vector<8x1xi1> to vector<8x1xi1>
    %262 = vector.broadcast %261 : vector<8x1xi1> to vector<8x32xi1>
    %263 = arith.select %262, %258, %237 : vector<8x32xi1>, vector<8x32xf32>
    %264 = tpu.concatenate %249, %258 in 0 : vector<8x32xf32>, vector<8x32xf32> -> vector<16x32xf32>
    %265 = arith.index_cast %c1_i32_86 : i32 to index
    %c0_91 = arith.constant 0 : index
    %c0_92 = arith.constant 0 : index
    %266 = vector.load %arg21[%265, %c0_91, %c0_92] : memref<8x16x32xf32, #tpu.memory_space<vmem>>, vector<1x16x32xf32>
    %267 = vector.shape_cast %266 : vector<1x16x32xf32> to vector<16x32xf32>
    %268 = vector.shape_cast %264 : vector<16x32xf32> to vector<1x16x32xf32>
    tpu.vector_store %arg21[%265, %c0_91, %c0_92], %268 {strides = array<i32>} : memref<8x16x32xf32, #tpu.memory_space<vmem>>, vector<1x16x32xf32>,
    %c2_i32_93 = arith.constant 2 : i32
    %269 = arith.index_cast %c2_i32_93 : i32 to index
    %c0_94 = arith.constant 0 : index
    %c0_95 = arith.constant 0 : index
    %270 = vector.load %arg21[%269, %c0_94, %c0_95] : memref<8x16x32xf32, #tpu.memory_space<vmem>>, vector<1x16x32xf32>
    %271 = vector.shape_cast %270 : vector<1x16x32xf32> to vector<16x32xf32>
    %272 = vector.extract_strided_slice %271 {offsets = [0, 0], sizes = [8, 32], strides = [1, 1]} : vector<16x32xf32> to vector<8x32xf32>
    %cst_96 = arith.constant dense<0.000000e+00> : vector<8x32xf32>
    %273 = tpu.matmul %254, %22, %cst_96 {dimension_numbers = #tpu.dot_dimension_numbers<[1], [0], [0], [1], [0, 0, 1, 1], [], []>} : vector<8x32xf32>, vector<32x32xf32>, vector<8x32xf32> -> vector<8x32xf32>
    %274 = arith.addf %272, %273 : vector<8x32xf32>
    %275 = math.tanh %274 : vector<8x32xf32>
    %276 = vector.broadcast %c2_i32_93 : i32 to vector<8x1xi32>
    %277 = arith.cmpi slt, %276, %1 : vector<8x1xi32>
    %278 = vector.shape_cast %277 : vector<8x1xi1> to vector<8x1xi1>
    %279 = vector.broadcast %278 : vector<8x1xi1> to vector<8x32xi1>
    %280 = arith.select %279, %275, %254 : vector<8x32xi1>, vector<8x32xf32>
    %281 = vector.extract_strided_slice %271 {offsets = [8, 0], sizes = [8, 32], strides = [1, 1]} : vector<16x32xf32> to vector<8x32xf32>
    %cst_97 = arith.constant dense<0.000000e+00> : vector<8x32xf32>
    %282 = tpu.matmul %263, %22, %cst_97 {dimension_numbers = #tpu.dot_dimension_numbers<[1], [0], [0], [1], [0, 0, 1, 1], [], []>} : vector<8x32xf32>, vector<32x32xf32>, vector<8x32xf32> -> vector<8x32xf32>
    %283 = arith.addf %281, %282 : vector<8x32xf32>
    %284 = math.tanh %283 : vector<8x32xf32>
    %285 = vector.broadcast %c2_i32_93 : i32 to vector<8x1xi32>
    %286 = arith.cmpi slt, %285, %2 : vector<8x1xi32>
    %287 = vector.shape_cast %286 : vector<8x1xi1> to vector<8x1xi1>
    %288 = vector.broadcast %287 : vector<8x1xi1> to vector<8x32xi1>
    %289 = arith.select %288, %284, %263 : vector<8x32xi1>, vector<8x32xf32>
    %290 = tpu.concatenate %275, %284 in 0 : vector<8x32xf32>, vector<8x32xf32> -> vector<16x32xf32>
    %291 = arith.index_cast %c2_i32_93 : i32 to index
    %c0_98 = arith.constant 0 : index
    %c0_99 = arith.constant 0 : index
    %292 = vector.load %arg21[%291, %c0_98, %c0_99] : memref<8x16x32xf32, #tpu.memory_space<vmem>>, vector<1x16x32xf32>
    %293 = vector.shape_cast %292 : vector<1x16x32xf32> to vector<16x32xf32>
    %294 = vector.shape_cast %290 : vector<16x32xf32> to vector<1x16x32xf32>
    tpu.vector_store %arg21[%291, %c0_98, %c0_99], %294 {strides = array<i32>} : memref<8x16x32xf32, #tpu.memory_space<vmem>>, vector<1x16x32xf32>,
    %c3_i32_100 = arith.constant 3 : i32
    %295 = arith.index_cast %c3_i32_100 : i32 to index
    %c0_101 = arith.constant 0 : index
    %c0_102 = arith.constant 0 : index
    %296 = vector.load %arg21[%295, %c0_101, %c0_102] : memref<8x16x32xf32, #tpu.memory_space<vmem>>, vector<1x16x32xf32>
    %297 = vector.shape_cast %296 : vector<1x16x32xf32> to vector<16x32xf32>
    %298 = vector.extract_strided_slice %297 {offsets = [0, 0], sizes = [8, 32], strides = [1, 1]} : vector<16x32xf32> to vector<8x32xf32>
    %cst_103 = arith.constant dense<0.000000e+00> : vector<8x32xf32>
    %299 = tpu.matmul %280, %22, %cst_103 {dimension_numbers = #tpu.dot_dimension_numbers<[1], [0], [0], [1], [0, 0, 1, 1], [], []>} : vector<8x32xf32>, vector<32x32xf32>, vector<8x32xf32> -> vector<8x32xf32>
    %300 = arith.addf %298, %299 : vector<8x32xf32>
    %301 = math.tanh %300 : vector<8x32xf32>
    %302 = vector.broadcast %c3_i32_100 : i32 to vector<8x1xi32>
    %303 = arith.cmpi slt, %302, %1 : vector<8x1xi32>
    %304 = vector.shape_cast %303 : vector<8x1xi1> to vector<8x1xi1>
    %305 = vector.broadcast %304 : vector<8x1xi1> to vector<8x32xi1>
    %306 = arith.select %305, %301, %280 : vector<8x32xi1>, vector<8x32xf32>
    %307 = vector.extract_strided_slice %297 {offsets = [8, 0], sizes = [8, 32], strides = [1, 1]} : vector<16x32xf32> to vector<8x32xf32>
    %cst_104 = arith.constant dense<0.000000e+00> : vector<8x32xf32>
    %308 = tpu.matmul %289, %22, %cst_104 {dimension_numbers = #tpu.dot_dimension_numbers<[1], [0], [0], [1], [0, 0, 1, 1], [], []>} : vector<8x32xf32>, vector<32x32xf32>, vector<8x32xf32> -> vector<8x32xf32>
    %309 = arith.addf %307, %308 : vector<8x32xf32>
    %310 = math.tanh %309 : vector<8x32xf32>
    %311 = vector.broadcast %c3_i32_100 : i32 to vector<8x1xi32>
    %312 = arith.cmpi slt, %311, %2 : vector<8x1xi32>
    %313 = vector.shape_cast %312 : vector<8x1xi1> to vector<8x1xi1>
    %314 = vector.broadcast %313 : vector<8x1xi1> to vector<8x32xi1>
    %315 = arith.select %314, %310, %289 : vector<8x32xi1>, vector<8x32xf32>
    %316 = tpu.concatenate %301, %310 in 0 : vector<8x32xf32>, vector<8x32xf32> -> vector<16x32xf32>
    %317 = arith.index_cast %c3_i32_100 : i32 to index
    %c0_105 = arith.constant 0 : index
    %c0_106 = arith.constant 0 : index
    %318 = vector.load %arg21[%317, %c0_105, %c0_106] : memref<8x16x32xf32, #tpu.memory_space<vmem>>, vector<1x16x32xf32>
    %319 = vector.shape_cast %318 : vector<1x16x32xf32> to vector<16x32xf32>
    %320 = vector.shape_cast %316 : vector<16x32xf32> to vector<1x16x32xf32>
    tpu.vector_store %arg21[%317, %c0_105, %c0_106], %320 {strides = array<i32>} : memref<8x16x32xf32, #tpu.memory_space<vmem>>, vector<1x16x32xf32>,
    %c4_i32_107 = arith.constant 4 : i32
    %321 = arith.index_cast %c4_i32_107 : i32 to index
    %c0_108 = arith.constant 0 : index
    %c0_109 = arith.constant 0 : index
    %322 = vector.load %arg21[%321, %c0_108, %c0_109] : memref<8x16x32xf32, #tpu.memory_space<vmem>>, vector<1x16x32xf32>
    %323 = vector.shape_cast %322 : vector<1x16x32xf32> to vector<16x32xf32>
    %324 = vector.extract_strided_slice %323 {offsets = [0, 0], sizes = [8, 32], strides = [1, 1]} : vector<16x32xf32> to vector<8x32xf32>
    %cst_110 = arith.constant dense<0.000000e+00> : vector<8x32xf32>
    %325 = tpu.matmul %306, %22, %cst_110 {dimension_numbers = #tpu.dot_dimension_numbers<[1], [0], [0], [1], [0, 0, 1, 1], [], []>} : vector<8x32xf32>, vector<32x32xf32>, vector<8x32xf32> -> vector<8x32xf32>
    %326 = arith.addf %324, %325 : vector<8x32xf32>
    %327 = math.tanh %326 : vector<8x32xf32>
    %328 = vector.broadcast %c4_i32_107 : i32 to vector<8x1xi32>
    %329 = arith.cmpi slt, %328, %1 : vector<8x1xi32>
    %330 = vector.shape_cast %329 : vector<8x1xi1> to vector<8x1xi1>
    %331 = vector.broadcast %330 : vector<8x1xi1> to vector<8x32xi1>
    %332 = arith.select %331, %327, %306 : vector<8x32xi1>, vector<8x32xf32>
    %333 = vector.extract_strided_slice %323 {offsets = [8, 0], sizes = [8, 32], strides = [1, 1]} : vector<16x32xf32> to vector<8x32xf32>
    %cst_111 = arith.constant dense<0.000000e+00> : vector<8x32xf32>
    %334 = tpu.matmul %315, %22, %cst_111 {dimension_numbers = #tpu.dot_dimension_numbers<[1], [0], [0], [1], [0, 0, 1, 1], [], []>} : vector<8x32xf32>, vector<32x32xf32>, vector<8x32xf32> -> vector<8x32xf32>
    %335 = arith.addf %333, %334 : vector<8x32xf32>
    %336 = math.tanh %335 : vector<8x32xf32>
    %337 = vector.broadcast %c4_i32_107 : i32 to vector<8x1xi32>
    %338 = arith.cmpi slt, %337, %2 : vector<8x1xi32>
    %339 = vector.shape_cast %338 : vector<8x1xi1> to vector<8x1xi1>
    %340 = vector.broadcast %339 : vector<8x1xi1> to vector<8x32xi1>
    %341 = arith.select %340, %336, %315 : vector<8x32xi1>, vector<8x32xf32>
    %342 = tpu.concatenate %327, %336 in 0 : vector<8x32xf32>, vector<8x32xf32> -> vector<16x32xf32>
    %343 = arith.index_cast %c4_i32_107 : i32 to index
    %c0_112 = arith.constant 0 : index
    %c0_113 = arith.constant 0 : index
    %344 = vector.load %arg21[%343, %c0_112, %c0_113] : memref<8x16x32xf32, #tpu.memory_space<vmem>>, vector<1x16x32xf32>
    %345 = vector.shape_cast %344 : vector<1x16x32xf32> to vector<16x32xf32>
    %346 = vector.shape_cast %342 : vector<16x32xf32> to vector<1x16x32xf32>
    tpu.vector_store %arg21[%343, %c0_112, %c0_113], %346 {strides = array<i32>} : memref<8x16x32xf32, #tpu.memory_space<vmem>>, vector<1x16x32xf32>,
    %c5_i32_114 = arith.constant 5 : i32
    %347 = arith.index_cast %c5_i32_114 : i32 to index
    %c0_115 = arith.constant 0 : index
    %c0_116 = arith.constant 0 : index
    %348 = vector.load %arg21[%347, %c0_115, %c0_116] : memref<8x16x32xf32, #tpu.memory_space<vmem>>, vector<1x16x32xf32>
    %349 = vector.shape_cast %348 : vector<1x16x32xf32> to vector<16x32xf32>
    %350 = vector.extract_strided_slice %349 {offsets = [0, 0], sizes = [8, 32], strides = [1, 1]} : vector<16x32xf32> to vector<8x32xf32>
    %cst_117 = arith.constant dense<0.000000e+00> : vector<8x32xf32>
    %351 = tpu.matmul %332, %22, %cst_117 {dimension_numbers = #tpu.dot_dimension_numbers<[1], [0], [0], [1], [0, 0, 1, 1], [], []>} : vector<8x32xf32>, vector<32x32xf32>, vector<8x32xf32> -> vector<8x32xf32>
    %352 = arith.addf %350, %351 : vector<8x32xf32>
    %353 = math.tanh %352 : vector<8x32xf32>
    %354 = vector.broadcast %c5_i32_114 : i32 to vector<8x1xi32>
    %355 = arith.cmpi slt, %354, %1 : vector<8x1xi32>
    %356 = vector.shape_cast %355 : vector<8x1xi1> to vector<8x1xi1>
    %357 = vector.broadcast %356 : vector<8x1xi1> to vector<8x32xi1>
    %358 = arith.select %357, %353, %332 : vector<8x32xi1>, vector<8x32xf32>
    %359 = vector.extract_strided_slice %349 {offsets = [8, 0], sizes = [8, 32], strides = [1, 1]} : vector<16x32xf32> to vector<8x32xf32>
    %cst_118 = arith.constant dense<0.000000e+00> : vector<8x32xf32>
    %360 = tpu.matmul %341, %22, %cst_118 {dimension_numbers = #tpu.dot_dimension_numbers<[1], [0], [0], [1], [0, 0, 1, 1], [], []>} : vector<8x32xf32>, vector<32x32xf32>, vector<8x32xf32> -> vector<8x32xf32>
    %361 = arith.addf %359, %360 : vector<8x32xf32>
    %362 = math.tanh %361 : vector<8x32xf32>
    %363 = vector.broadcast %c5_i32_114 : i32 to vector<8x1xi32>
    %364 = arith.cmpi slt, %363, %2 : vector<8x1xi32>
    %365 = vector.shape_cast %364 : vector<8x1xi1> to vector<8x1xi1>
    %366 = vector.broadcast %365 : vector<8x1xi1> to vector<8x32xi1>
    %367 = arith.select %366, %362, %341 : vector<8x32xi1>, vector<8x32xf32>
    %368 = tpu.concatenate %353, %362 in 0 : vector<8x32xf32>, vector<8x32xf32> -> vector<16x32xf32>
    %369 = arith.index_cast %c5_i32_114 : i32 to index
    %c0_119 = arith.constant 0 : index
    %c0_120 = arith.constant 0 : index
    %370 = vector.load %arg21[%369, %c0_119, %c0_120] : memref<8x16x32xf32, #tpu.memory_space<vmem>>, vector<1x16x32xf32>
    %371 = vector.shape_cast %370 : vector<1x16x32xf32> to vector<16x32xf32>
    %372 = vector.shape_cast %368 : vector<16x32xf32> to vector<1x16x32xf32>
    tpu.vector_store %arg21[%369, %c0_119, %c0_120], %372 {strides = array<i32>} : memref<8x16x32xf32, #tpu.memory_space<vmem>>, vector<1x16x32xf32>,
    %c6_i32_121 = arith.constant 6 : i32
    %373 = arith.index_cast %c6_i32_121 : i32 to index
    %c0_122 = arith.constant 0 : index
    %c0_123 = arith.constant 0 : index
    %374 = vector.load %arg21[%373, %c0_122, %c0_123] : memref<8x16x32xf32, #tpu.memory_space<vmem>>, vector<1x16x32xf32>
    %375 = vector.shape_cast %374 : vector<1x16x32xf32> to vector<16x32xf32>
    %376 = vector.extract_strided_slice %375 {offsets = [0, 0], sizes = [8, 32], strides = [1, 1]} : vector<16x32xf32> to vector<8x32xf32>
    %cst_124 = arith.constant dense<0.000000e+00> : vector<8x32xf32>
    %377 = tpu.matmul %358, %22, %cst_124 {dimension_numbers = #tpu.dot_dimension_numbers<[1], [0], [0], [1], [0, 0, 1, 1], [], []>} : vector<8x32xf32>, vector<32x32xf32>, vector<8x32xf32> -> vector<8x32xf32>
    %378 = arith.addf %376, %377 : vector<8x32xf32>
    %379 = math.tanh %378 : vector<8x32xf32>
    %380 = vector.broadcast %c6_i32_121 : i32 to vector<8x1xi32>
    %381 = arith.cmpi slt, %380, %1 : vector<8x1xi32>
    %382 = vector.shape_cast %381 : vector<8x1xi1> to vector<8x1xi1>
    %383 = vector.broadcast %382 : vector<8x1xi1> to vector<8x32xi1>
    %384 = arith.select %383, %379, %358 : vector<8x32xi1>, vector<8x32xf32>
    %385 = vector.extract_strided_slice %375 {offsets = [8, 0], sizes = [8, 32], strides = [1, 1]} : vector<16x32xf32> to vector<8x32xf32>
    %cst_125 = arith.constant dense<0.000000e+00> : vector<8x32xf32>
    %386 = tpu.matmul %367, %22, %cst_125 {dimension_numbers = #tpu.dot_dimension_numbers<[1], [0], [0], [1], [0, 0, 1, 1], [], []>} : vector<8x32xf32>, vector<32x32xf32>, vector<8x32xf32> -> vector<8x32xf32>
    %387 = arith.addf %385, %386 : vector<8x32xf32>
    %388 = math.tanh %387 : vector<8x32xf32>
    %389 = vector.broadcast %c6_i32_121 : i32 to vector<8x1xi32>
    %390 = arith.cmpi slt, %389, %2 : vector<8x1xi32>
    %391 = vector.shape_cast %390 : vector<8x1xi1> to vector<8x1xi1>
    %392 = vector.broadcast %391 : vector<8x1xi1> to vector<8x32xi1>
    %393 = arith.select %392, %388, %367 : vector<8x32xi1>, vector<8x32xf32>
    %394 = tpu.concatenate %379, %388 in 0 : vector<8x32xf32>, vector<8x32xf32> -> vector<16x32xf32>
    %395 = arith.index_cast %c6_i32_121 : i32 to index
    %c0_126 = arith.constant 0 : index
    %c0_127 = arith.constant 0 : index
    %396 = vector.load %arg21[%395, %c0_126, %c0_127] : memref<8x16x32xf32, #tpu.memory_space<vmem>>, vector<1x16x32xf32>
    %397 = vector.shape_cast %396 : vector<1x16x32xf32> to vector<16x32xf32>
    %398 = vector.shape_cast %394 : vector<16x32xf32> to vector<1x16x32xf32>
    tpu.vector_store %arg21[%395, %c0_126, %c0_127], %398 {strides = array<i32>} : memref<8x16x32xf32, #tpu.memory_space<vmem>>, vector<1x16x32xf32>,
    %c7_i32_128 = arith.constant 7 : i32
    %399 = arith.index_cast %c7_i32_128 : i32 to index
    %c0_129 = arith.constant 0 : index
    %c0_130 = arith.constant 0 : index
    %400 = vector.load %arg21[%399, %c0_129, %c0_130] : memref<8x16x32xf32, #tpu.memory_space<vmem>>, vector<1x16x32xf32>
    %401 = vector.shape_cast %400 : vector<1x16x32xf32> to vector<16x32xf32>
    %402 = vector.extract_strided_slice %401 {offsets = [0, 0], sizes = [8, 32], strides = [1, 1]} : vector<16x32xf32> to vector<8x32xf32>
    %cst_131 = arith.constant dense<0.000000e+00> : vector<8x32xf32>
    %403 = tpu.matmul %384, %22, %cst_131 {dimension_numbers = #tpu.dot_dimension_numbers<[1], [0], [0], [1], [0, 0, 1, 1], [], []>} : vector<8x32xf32>, vector<32x32xf32>, vector<8x32xf32> -> vector<8x32xf32>
    %404 = arith.addf %402, %403 : vector<8x32xf32>
    %405 = math.tanh %404 : vector<8x32xf32>
    %406 = vector.broadcast %c7_i32_128 : i32 to vector<8x1xi32>
    %407 = arith.cmpi slt, %406, %1 : vector<8x1xi32>
    %408 = vector.shape_cast %407 : vector<8x1xi1> to vector<8x1xi1>
    %409 = vector.broadcast %408 : vector<8x1xi1> to vector<8x32xi1>
    %410 = arith.select %409, %405, %384 : vector<8x32xi1>, vector<8x32xf32>
    %411 = vector.extract_strided_slice %401 {offsets = [8, 0], sizes = [8, 32], strides = [1, 1]} : vector<16x32xf32> to vector<8x32xf32>
    %cst_132 = arith.constant dense<0.000000e+00> : vector<8x32xf32>
    %412 = tpu.matmul %393, %22, %cst_132 {dimension_numbers = #tpu.dot_dimension_numbers<[1], [0], [0], [1], [0, 0, 1, 1], [], []>} : vector<8x32xf32>, vector<32x32xf32>, vector<8x32xf32> -> vector<8x32xf32>
    %413 = arith.addf %411, %412 : vector<8x32xf32>
    %414 = math.tanh %413 : vector<8x32xf32>
    %415 = vector.broadcast %c7_i32_128 : i32 to vector<8x1xi32>
    %416 = arith.cmpi slt, %415, %2 : vector<8x1xi32>
    %417 = vector.shape_cast %416 : vector<8x1xi1> to vector<8x1xi1>
    %418 = vector.broadcast %417 : vector<8x1xi1> to vector<8x32xi1>
    %419 = arith.select %418, %414, %393 : vector<8x32xi1>, vector<8x32xf32>
    %420 = tpu.concatenate %405, %414 in 0 : vector<8x32xf32>, vector<8x32xf32> -> vector<16x32xf32>
    %421 = arith.index_cast %c7_i32_128 : i32 to index
    %c0_133 = arith.constant 0 : index
    %c0_134 = arith.constant 0 : index
    %422 = vector.load %arg21[%421, %c0_133, %c0_134] : memref<8x16x32xf32, #tpu.memory_space<vmem>>, vector<1x16x32xf32>
    %423 = vector.shape_cast %422 : vector<1x16x32xf32> to vector<16x32xf32>
    %424 = vector.shape_cast %420 : vector<16x32xf32> to vector<1x16x32xf32>
    tpu.vector_store %arg21[%421, %c0_133, %c0_134], %424 {strides = array<i32>} : memref<8x16x32xf32, #tpu.memory_space<vmem>>, vector<1x16x32xf32>,
    %c8_i32_135 = arith.constant 8 : i32
    %c0_136 = arith.constant 0 : index
    %c0_137 = arith.constant 0 : index
    %c0_138 = arith.constant 0 : index
    %425 = vector.load %arg21[%c0_136, %c0_137, %c0_138] : memref<8x16x32xf32, #tpu.memory_space<vmem>>, vector<8x16x32xf32>
    %426 = vector.shape_cast %425 : vector<8x16x32xf32> to vector<128x32xf32>
    %c0_139 = arith.constant 0 : index
    %c0_140 = arith.constant 0 : index
    %427 = vector.load %arg14[%c0_139, %c0_140] : memref<32x4xf32, #tpu.memory_space<vmem>>, vector<32x4xf32>
    %cst_141 = arith.constant dense<0.000000e+00> : vector<128x4xf32>
    %428 = tpu.matmul %426, %427, %cst_141 {dimension_numbers = #tpu.dot_dimension_numbers<[1], [0], [0], [1], [0, 0, 1, 1], [], []>} : vector<128x32xf32>, vector<32x4xf32>, vector<128x4xf32> -> vector<128x4xf32>
    %c0_142 = arith.constant 0 : index
    %c0_143 = arith.constant 0 : index
    %429 = vector.load %arg15[%c0_142, %c0_143] : memref<1x4xf32, #tpu.memory_space<vmem>>, vector<1x4xf32>
    %430 = vector.broadcast %429 : vector<1x4xf32> to vector<128x4xf32>
    %431 = arith.addf %428, %430 : vector<128x4xf32>
    %432 = vector.shape_cast %431 : vector<128x4xf32> to vector<8x16x4xf32>
    %433 = tpu.iota {dimensions = array<i32: 0>} : vector<8x16x1xi32>
    %434 = vector.shape_cast %0 : vector<16x1xi32> to vector<1x16x1xi32>
    %435 = vector.broadcast %434 : vector<1x16x1xi32> to vector<8x16x1xi32>
    %436 = arith.cmpi slt, %433, %435 : vector<8x16x1xi32>
    %cst_144 = arith.constant 0.000000e+00 : f32
    %437 = vector.shape_cast %436 : vector<8x16x1xi1> to vector<8x16x1xi1>
    %438 = vector.broadcast %437 : vector<8x16x1xi1> to vector<8x16x4xi1>
    %439 = vector.broadcast %cst_144 : f32 to vector<8x16x4xf32>
    %440 = arith.select %438, %432, %439 : vector<8x16x4xi1>, vector<8x16x4xf32>
    %c0_145 = arith.constant 0 : index
    %c0_146 = arith.constant 0 : index
    %c0_147 = arith.constant 0 : index
    %441 = vector.load %arg16[%c0_145, %c0_146, %c0_147] : memref<8x16x4xf32, #tpu.memory_space<vmem>>, vector<8x16x4xf32>
    tpu.vector_store %arg16[%c0_145, %c0_146, %c0_147], %440 {strides = array<i32>} : memref<8x16x4xf32, #tpu.memory_space<vmem>>, vector<8x16x4xf32>,
    return
  }
  func.func @transform_0(%arg0: i32) -> (i32, i32, i32) {
    %c0_i32 = arith.constant 0 : i32
    %c0_i32_0 = arith.constant 0 : i32
    %c0_i32_1 = arith.constant 0 : i32
    return %c0_i32, %arg0, %c0_i32_0 : i32, i32, i32
  }
  func.func @transform_1(%arg0: i32) -> (i32, i32, i32) {
    %c0_i32 = arith.constant 0 : i32
    %c0_i32_0 = arith.constant 0 : i32
    %c0_i32_1 = arith.constant 0 : i32
    return %c0_i32, %arg0, %c0_i32_0 : i32, i32, i32
  }
  func.func @transform_2(%arg0: i32) -> (i32, i32) {
    %c0_i32 = arith.constant 0 : i32
    %c0_i32_0 = arith.constant 0 : i32
    return %arg0, %c0_i32 : i32, i32
  }
  func.func @transform_3(%arg0: i32) -> (i32, i32) {
    %c0_i32 = arith.constant 0 : i32
    %c0_i32_0 = arith.constant 0 : i32
    %c0_i32_1 = arith.constant 0 : i32
    return %c0_i32, %c0_i32_0 : i32, i32
  }
  func.func @transform_4(%arg0: i32) -> (i32, i32) {
    %c0_i32 = arith.constant 0 : i32
    %c0_i32_0 = arith.constant 0 : i32
    %c0_i32_1 = arith.constant 0 : i32
    return %c0_i32, %c0_i32_0 : i32, i32
  }
  func.func @transform_5(%arg0: i32) -> (i32, i32) {
    %c0_i32 = arith.constant 0 : i32
    %c0_i32_0 = arith.constant 0 : i32
    %c0_i32_1 = arith.constant 0 : i32
    return %c0_i32, %c0_i32_0 : i32, i32
  }
  func.func @transform_6(%arg0: i32) -> (i32, i32) {
    %c0_i32 = arith.constant 0 : i32
    %c0_i32_0 = arith.constant 0 : i32
    %c0_i32_1 = arith.constant 0 : i32
    return %c0_i32, %c0_i32_0 : i32, i32
  }
  func.func @transform_7(%arg0: i32) -> (i32, i32) {
    %c0_i32 = arith.constant 0 : i32
    %c0_i32_0 = arith.constant 0 : i32
    %c0_i32_1 = arith.constant 0 : i32
    return %c0_i32, %c0_i32_0 : i32, i32
  }
  func.func @transform_8(%arg0: i32) -> (i32, i32) {
    %c0_i32 = arith.constant 0 : i32
    %c0_i32_0 = arith.constant 0 : i32
    %c0_i32_1 = arith.constant 0 : i32
    return %c0_i32, %c0_i32_0 : i32, i32
  }
  func.func @transform_9(%arg0: i32) -> (i32, i32) {
    %c0_i32 = arith.constant 0 : i32
    %c0_i32_0 = arith.constant 0 : i32
    %c0_i32_1 = arith.constant 0 : i32
    return %c0_i32, %c0_i32_0 : i32, i32
  }
  func.func @transform_10(%arg0: i32) -> (i32, i32) {
    %c0_i32 = arith.constant 0 : i32
    %c0_i32_0 = arith.constant 0 : i32
    %c0_i32_1 = arith.constant 0 : i32
    return %c0_i32, %c0_i32_0 : i32, i32
  }
  func.func @transform_11(%arg0: i32) -> (i32, i32) {
    %c0_i32 = arith.constant 0 : i32
    %c0_i32_0 = arith.constant 0 : i32
    %c0_i32_1 = arith.constant 0 : i32
    return %c0_i32, %c0_i32_0 : i32, i32
  }
  func.func @transform_12(%arg0: i32) -> (i32, i32) {
    %c0_i32 = arith.constant 0 : i32
    %c0_i32_0 = arith.constant 0 : i32
    %c0_i32_1 = arith.constant 0 : i32
    return %c0_i32, %c0_i32_0 : i32, i32
  }
  func.func @transform_13(%arg0: i32) -> (i32, i32) {
    %c0_i32 = arith.constant 0 : i32
    %c0_i32_0 = arith.constant 0 : i32
    %c0_i32_1 = arith.constant 0 : i32
    return %c0_i32, %c0_i32_0 : i32, i32
  }
  func.func @transform_14(%arg0: i32) -> (i32, i32) {
    %c0_i32 = arith.constant 0 : i32
    %c0_i32_0 = arith.constant 0 : i32
    %c0_i32_1 = arith.constant 0 : i32
    return %c0_i32, %c0_i32_0 : i32, i32
  }
  func.func @transform_15(%arg0: i32) -> (i32, i32, i32) {
    %c0_i32 = arith.constant 0 : i32
    %c0_i32_0 = arith.constant 0 : i32
    %c0_i32_1 = arith.constant 0 : i32
    return %c0_i32, %arg0, %c0_i32_0 : i32, i32, i32
  }
  func.func @transform_16(%arg0: i32) -> (i32, i32, i32) {
    %c0_i32 = arith.constant 0 : i32
    %c0_i32_0 = arith.constant 0 : i32
    %c0_i32_1 = arith.constant 0 : i32
    return %c0_i32, %arg0, %c0_i32_0 : i32, i32, i32
  }
  func.func @transform_17(%arg0: i32) -> (i32, i32, i32) {
    %c0_i32 = arith.constant 0 : i32
    %c0_i32_0 = arith.constant 0 : i32
    %c0_i32_1 = arith.constant 0 : i32
    return %c0_i32, %arg0, %c0_i32_0 : i32, i32, i32
  }
  func.func @transform_18(%arg0: i32) -> (i32, i32, i32) {
    %c0_i32 = arith.constant 0 : i32
    %c0_i32_0 = arith.constant 0 : i32
    %c0_i32_1 = arith.constant 0 : i32
    return %c0_i32, %arg0, %c0_i32_0 : i32, i32, i32
  }
}

</mosaic_0001>

<llo_original>
// kernel: rvae_forward.1
$region0: #{rvae_forward.1}
  #allocation0 [shape = 'u32[]', space=smem, size = 0x4, offset = 0x4, fixed_abs, tag = 'smem constant byte address 0x4 - core index']
  #allocation1 [shape = 'u32[144,128]{1,0:T(1,128)}', space=vmem, size = 0x12000, scoped, tag = 'internal scratch']
  #allocation2 [shape = 'f32[8,16,32]{2,1,0:T(8,128)}', space=vmem, size = 0x10000, scoped, tag = 'scratch operand']
  #allocation3 [shape = 'f32[8,16,32]{2,1,0:T(8,128)}', space=vmem, size = 0x10000, scoped, tag = 'scratch operand']
  %s0 = inlined_call_operand.vmem [shape: f32[8,32,7], index: 0, kind: input, shape index: {}]
  %s1 = inlined_call_operand.vmem [shape: f32[8,32,3], index: 1, kind: input, shape index: {}]
  %s2 = inlined_call_operand.vmem [shape: s32[32,1], index: 2, kind: input, shape index: {}]
  %s3 = inlined_call_operand.vmem [shape: f32[7,32], index: 3, kind: input, shape index: {}]
  %s4 = inlined_call_operand.vmem [shape: f32[32,32], index: 4, kind: input, shape index: {}]
  %s5 = inlined_call_operand.vmem [shape: f32[1,32], index: 5, kind: input, shape index: {}]
  %s6 = inlined_call_operand.vmem [shape: f32[3,32], index: 6, kind: input, shape index: {}]
  %s7 = inlined_call_operand.vmem [shape: f32[32,32], index: 7, kind: input, shape index: {}]
  %s8 = inlined_call_operand.vmem [shape: f32[1,32], index: 8, kind: input, shape index: {}]
  %s9 = inlined_call_operand.vmem [shape: f32[32,16], index: 9, kind: input, shape index: {}]
  %s10 = inlined_call_operand.vmem [shape: f32[1,16], index: 10, kind: input, shape index: {}]
  %s11 = inlined_call_operand.vmem [shape: f32[8,32], index: 11, kind: input, shape index: {}]
  %s12 = inlined_call_operand.vmem [shape: f32[1,32], index: 12, kind: input, shape index: {}]
  %s13 = inlined_call_operand.vmem [shape: f32[32,4], index: 13, kind: input, shape index: {}]
  %s14 = inlined_call_operand.vmem [shape: f32[1,4], index: 14, kind: input, shape index: {}]
  %s15 = inlined_call_operand.vmem [shape: f32[8,32,4], index: 15, kind: output, shape index: {0}]
  %s16 = inlined_call_operand.vmem [shape: f32[1,32,8], index: 16, kind: output, shape index: {1}]
  %s17 = inlined_call_operand.vmem [shape: f32[1,32,8], index: 17, kind: output, shape index: {2}]
  %s18 = inlined_call_operand.vmem [shape: f32[1,32,8], index: 18, kind: output, shape index: {3}]
  %19 = xla_tuple %s15, %s16, %s17, %s18
  %s20 = sld [smem:[#allocation0]]
  $region227: #{rvae_forward.1} parent=0
    _
  %s22 = ssub.s32 1, %s20
  %s23 = scalar_select 0, %s22, %s20
  $region1: #{rvae_forward.1} parent=0
    #allocation4 [shape = 'u8[131072]{0}', space=vmem, size = 0x20000, scoped, tag = 'input window, operand 0']
    #allocation5 [shape = 'u8[131072]{0}', space=vmem, size = 0x20000, scoped, tag = 'input window, operand 1']
    #allocation6 [shape = 'u8[131072]{0}', space=vmem, size = 0x20000, scoped, tag = 'output window, operand 0']
    loop: start=0, step=1, limit=4
    $region2: #{rvae_forward.1} parent=1 // loop_pre_header
      _
    $region3: #{rvae_forward.1} parent=1 // loop_header
      %s25 = sphi 0, %s29
      %p26 = scmp.ge.s32.totalorder %s25, 4
      %s35 = sphi 0, %s37
      %s38 = sphi 0, %s35
      %s39 = sphi 0, %s38
      %s55 = sphi 0, %s39
      %s61 = sphi 0, %s63
      %s64 = sphi 0, %s61
      %s65 = sphi 0, %s64
      %s81 = sphi 0, %s65
      %s87 = sphi 0, %s89
      %s90 = sphi 0, %s87
      %s91 = sphi 0, %s90
      %s107 = sphi 0, %s91
      %s111 = sphi 0, %s111
      %s113 = sphi 0, %s111
      %s114 = sphi 0, %s113
      %s128 = sphi 0, %s114
      %s132 = sphi 0, %s132
      %s134 = sphi 0, %s132
      %s135 = sphi 0, %s134
      %s149 = sphi 0, %s135
      %s153 = sphi 0, %s153
      %s155 = sphi 0, %s153
      %s156 = sphi 0, %s155
      %s170 = sphi 0, %s156
      %s174 = sphi 0, %s174
      %s176 = sphi 0, %s174
      %s177 = sphi 0, %s176
      %s191 = sphi 0, %s177
      %s195 = sphi 0, %s195
      %s197 = sphi 0, %s195
      %s198 = sphi 0, %s197
      %s212 = sphi 0, %s198
      %s216 = sphi 0, %s216
      %s218 = sphi 0, %s216
      %s219 = sphi 0, %s218
      %s233 = sphi 0, %s219
      %s237 = sphi 0, %s237
      %s239 = sphi 0, %s237
      %s240 = sphi 0, %s239
      %s254 = sphi 0, %s240
      %s258 = sphi 0, %s258
      %s260 = sphi 0, %s258
      %s261 = sphi 0, %s260
      %s275 = sphi 0, %s261
      %s279 = sphi 0, %s279
      %s281 = sphi 0, %s279
      %s282 = sphi 0, %s281
      %s296 = sphi 0, %s282
      %s300 = sphi 0, %s300
      %s302 = sphi 0, %s300
      %s303 = sphi 0, %s302
      %s317 = sphi 0, %s303
      %s321 = sphi 0, %s321
      %s323 = sphi 0, %s321
      %s324 = sphi 0, %s323
      %s338 = sphi 0, %s324
      %s342 = sphi 0, %s342
      %s344 = sphi 0, %s342
      %s345 = sphi 0, %s344
      %s359 = sphi 0, %s345
      %s365 = sphi 0, %s367
      %s368 = sphi 0, %s365
      %s369 = sphi 0, %s368
      %s385 = sphi 0, %s369
      %s391 = sphi 0, %s393
      %s394 = sphi 0, %s391
      %s395 = sphi 0, %s394
      %s411 = sphi 0, %s395
      %s417 = sphi 0, %s419
      %s420 = sphi 0, %s417
      %s421 = sphi 0, %s420
      %s437 = sphi 0, %s421
      %s443 = sphi 0, %s445
      %s446 = sphi 0, %s443
      %s447 = sphi 0, %s446
      %s463 = sphi 0, %s447
    $region4: #{rvae_forward.1} parent=1 // loop_header_branch
      %28 = sbr.rel (%p26) target = $region8
    $region5: #{rvae_forward.1} parent=1 // loop_body
      %s30 = ssub.s32 %s25, 1
      %s31 = ssub.s32 %s25, 2
      %s32 = sadd.s32 %s25, 1
      %s33 = ssub.s32 %s25, %s32
      %p34 = scmp.eq.s32.totalorder %s33, 0
      %s36 = sadd.s32 %s35, 1
      %s37 = scalar_select %p34, %s35, %s36
      %p40 = pneg %p34
      %p41 = scmp.eq.s32.totalorder %s25, 1
      %p42 = por %p40, %p41
      %p43 = scmp.ne.s32.totalorder %s35, %s38
      %p44 = scmp.eq.s32.totalorder %s25, 0
      %p45 = por %p43, %p44
      %p46 = scmp.ne.s32.totalorder %s35, %s38
      %p47 = scmp.eq.s32.totalorder %s30, 1
      %p48 = por %p46, %p47
      %p49 = scmp.ne.s32.totalorder %s38, %s39
      %p50 = scmp.eq.s32.totalorder %s30, 0
      %p51 = por %p49, %p50
      %p52 = scmp.ne.s32.totalorder %s38, %s39
      %p53 = scmp.eq.s32.totalorder %s31, 1
      %p54 = por %p52, %p53
      %p56 = scmp.ne.s32.totalorder %s39, %s55
      %p57 = scmp.eq.s32.totalorder %s31, 0
      %p58 = por %p56, %p57
      %s59 = ssub.s32 %s25, %s32
      %p60 = scmp.eq.s32.totalorder %s59, 0
      %s62 = sadd.s32 %s61, 1
      %s63 = scalar_select %p60, %s61, %s62
      %p66 = pneg %p60
      %p67 = scmp.eq.s32.totalorder %s25, 1
      %p68 = por %p66, %p67
      %p69 = scmp.ne.s32.totalorder %s61, %s64
      %p70 = scmp.eq.s32.totalorder %s25, 0
      %p71 = por %p69, %p70
      %p72 = scmp.ne.s32.totalorder %s61, %s64
      %p73 = scmp.eq.s32.totalorder %s30, 1
      %p74 = por %p72, %p73
      %p75 = scmp.ne.s32.totalorder %s64, %s65
      %p76 = scmp.eq.s32.totalorder %s30, 0
      %p77 = por %p75, %p76
      %p78 = scmp.ne.s32.totalorder %s64, %s65
      %p79 = scmp.eq.s32.totalorder %s31, 1
      %p80 = por %p78, %p79
      %p82 = scmp.ne.s32.totalorder %s65, %s81
      %p83 = scmp.eq.s32.totalorder %s31, 0
      %p84 = por %p82, %p83
      %s85 = ssub.s32 %s25, %s32
      %p86 = scmp.eq.s32.totalorder %s85, 0
      %s88 = sadd.s32 %s87, 1
      %s89 = scalar_select %p86, %s87, %s88
      %p92 = pneg %p86
      %p93 = scmp.eq.s32.totalorder %s25, 1
      %p94 = por %p92, %p93
      %p95 = scmp.ne.s32.totalorder %s87, %s90
      %p96 = scmp.eq.s32.totalorder %s25, 0
      %p97 = por %p95, %p96
      %p98 = scmp.ne.s32.totalorder %s87, %s90
      %p99 = scmp.eq.s32.totalorder %s30, 1
      %p100 = por %p98, %p99
      %p101 = scmp.ne.s32.totalorder %s90, %s91
      %p102 = scmp.eq.s32.totalorder %s30, 0
      %p103 = por %p101, %p102
      %p104 = scmp.ne.s32.totalorder %s90, %s91
      %p105 = scmp.eq.s32.totalorder %s31, 1
      %p106 = por %p104, %p105
      %p108 = scmp.ne.s32.totalorder %s91, %s107
      %p109 = scmp.eq.s32.totalorder %s31, 0
      %p110 = por %p108, %p109
      %s112 = sadd.s32 %s111, 1
      %p115 = scmp.eq.s32.totalorder %s25, 1
      %p116 = scmp.ne.s32.totalorder %s111, %s113
      %p117 = scmp.eq.s32.totalorder %s25, 0
      %p118 = por %p116, %p117
      %p119 = scmp.ne.s32.totalorder %s111, %s113
      %p120 = scmp.eq.s32.totalorder %s30, 1
      %p121 = por %p119, %p120
      %p122 = scmp.ne.s32.totalorder %s113, %s114
      %p123 = scmp.eq.s32.totalorder %s30, 0
      %p124 = por %p122, %p123
      %p125 = scmp.ne.s32.totalorder %s113, %s114
      %p126 = scmp.eq.s32.totalorder %s31, 1
      %p127 = por %p125, %p126
      %p129 = scmp.ne.s32.totalorder %s114, %s128
      %p130 = scmp.eq.s32.totalorder %s31, 0
      %p131 = por %p129, %p130
      %s133 = sadd.s32 %s132, 1
      %p136 = scmp.eq.s32.totalorder %s25, 1
      %p137 = scmp.ne.s32.totalorder %s132, %s134
      %p138 = scmp.eq.s32.totalorder %s25, 0
      %p139 = por %p137, %p138
      %p140 = scmp.ne.s32.totalorder %s132, %s134
      %p141 = scmp.eq.s32.totalorder %s30, 1
      %p142 = por %p140, %p141
      %p143 = scmp.ne.s32.totalorder %s134, %s135
      %p144 = scmp.eq.s32.totalorder %s30, 0
      %p145 = por %p143, %p144
      %p146 = scmp.ne.s32.totalorder %s134, %s135
      %p147 = scmp.eq.s32.totalorder %s31, 1
      %p148 = por %p146, %p147
      %p150 = scmp.ne.s32.totalorder %s135, %s149
      %p151 = scmp.eq.s32.totalorder %s31, 0
      %p152 = por %p150, %p151
      %s154 = sadd.s32 %s153, 1
      %p157 = scmp.eq.s32.totalorder %s25, 1
      %p158 = scmp.ne.s32.totalorder %s153, %s155
      %p159 = scmp.eq.s32.totalorder %s25, 0
      %p160 = por %p158, %p159
      %p161 = scmp.ne.s32.totalorder %s153, %s155
      %p162 = scmp.eq.s32.totalorder %s30, 1
      %p163 = por %p161, %p162
      %p164 = scmp.ne.s32.totalorder %s155, %s156
      %p165 = scmp.eq.s32.totalorder %s30, 0
      %p166 = por %p164, %p165
      %p167 = scmp.ne.s32.totalorder %s155, %s156
      %p168 = scmp.eq.s32.totalorder %s31, 1
      %p169 = por %p167, %p168
      %p171 = scmp.ne.s32.totalorder %s156, %s170
      %p172 = scmp.eq.s32.totalorder %s31, 0
      %p173 = por %p171, %p172
      %s175 = sadd.s32 %s174, 1
      %p178 = scmp.eq.s32.totalorder %s25, 1
      %p179 = scmp.ne.s32.totalorder %s174, %s176
      %p180 = scmp.eq.s32.totalorder %s25, 0
      %p181 = por %p179, %p180
      %p182 = scmp.ne.s32.totalorder %s174, %s176
      %p183 = scmp.eq.s32.totalorder %s30, 1
      %p184 = por %p182, %p183
      %p185 = scmp.ne.s32.totalorder %s176, %s177
      %p186 = scmp.eq.s32.totalorder %s30, 0
      %p187 = por %p185, %p186
      %p188 = scmp.ne.s32.totalorder %s176, %s177
      %p189 = scmp.eq.s32.totalorder %s31, 1
      %p190 = por %p188, %p189
      %p192 = scmp.ne.s32.totalorder %s177, %s191
      %p193 = scmp.eq.s32.totalorder %s31, 0
      %p194 = por %p192, %p193
      %s196 = sadd.s32 %s195, 1
      %p199 = scmp.eq.s32.totalorder %s25, 1
      %p200 = scmp.ne.s32.totalorder %s195, %s197
      %p201 = scmp.eq.s32.totalorder %s25, 0
      %p202 = por %p200, %p201
      %p203 = scmp.ne.s32.totalorder %s195, %s197
      %p204 = scmp.eq.s32.totalorder %s30, 1
      %p205 = por %p203, %p204
      %p206 = scmp.ne.s32.totalorder %s197, %s198
      %p207 = scmp.eq.s32.totalorder %s30, 0
      %p208 = por %p206, %p207
      %p209 = scmp.ne.s32.totalorder %s197, %s198
      %p210 = scmp.eq.s32.totalorder %s31, 1
      %p211 = por %p209, %p210
      %p213 = scmp.ne.s32.totalorder %s198, %s212
      %p214 = scmp.eq.s32.totalorder %s31, 0
      %p215 = por %p213, %p214
      %s217 = sadd.s32 %s216, 1
      %p220 = scmp.eq.s32.totalorder %s25, 1
      %p221 = scmp.ne.s32.totalorder %s216, %s218
      %p222 = scmp.eq.s32.totalorder %s25, 0
      %p223 = por %p221, %p222
      %p224 = scmp.ne.s32.totalorder %s216, %s218
      %p225 = scmp.eq.s32.totalorder %s30, 1
      %p226 = por %p224, %p225
      %p227 = scmp.ne.s32.totalorder %s218, %s219
      %p228 = scmp.eq.s32.totalorder %s30, 0
      %p229 = por %p227, %p228
      %p230 = scmp.ne.s32.totalorder %s218, %s219
      %p231 = scmp.eq.s32.totalorder %s31, 1
      %p232 = por %p230, %p231
      %p234 = scmp.ne.s32.totalorder %s219, %s233
      %p235 = scmp.eq.s32.totalorder %s31, 0
      %p236 = por %p234, %p235
      %s238 = sadd.s32 %s237, 1
      %p241 = scmp.eq.s32.totalorder %s25, 1
      %p242 = scmp.ne.s32.totalorder %s237, %s239
      %p243 = scmp.eq.s32.totalorder %s25, 0
      %p244 = por %p242, %p243
      %p245 = scmp.ne.s32.totalorder %s237, %s239
      %p246 = scmp.eq.s32.totalorder %s30, 1
      %p247 = por %p245, %p246
      %p248 = scmp.ne.s32.totalorder %s239, %s240
      %p249 = scmp.eq.s32.totalorder %s30, 0
      %p250 = por %p248, %p249
      %p251 = scmp.ne.s32.totalorder %s239, %s240
      %p252 = scmp.eq.s32.totalorder %s31, 1
      %p253 = por %p251, %p252
      %p255 = scmp.ne.s32.totalorder %s240, %s254
      %p256 = scmp.eq.s32.totalorder %s31, 0
      %p257 = por %p255, %p256
      %s259 = sadd.s32 %s258, 1
      %p262 = scmp.eq.s32.totalorder %s25, 1
      %p263 = scmp.ne.s32.totalorder %s258, %s260
      %p264 = scmp.eq.s32.totalorder %s25, 0
      %p265 = por %p263, %p264
      %p266 = scmp.ne.s32.totalorder %s258, %s260
      %p267 = scmp.eq.s32.totalorder %s30, 1
      %p268 = por %p266, %p267
      %p269 = scmp.ne.s32.totalorder %s260, %s261
      %p270 = scmp.eq.s32.totalorder %s30, 0
      %p271 = por %p269, %p270
      %p272 = scmp.ne.s32.totalorder %s260, %s261
      %p273 = scmp.eq.s32.totalorder %s31, 1
      %p274 = por %p272, %p273
      %p276 = scmp.ne.s32.totalorder %s261, %s275
      %p277 = scmp.eq.s32.totalorder %s31, 0
      %p278 = por %p276, %p277
      %s280 = sadd.s32 %s279, 1
      %p283 = scmp.eq.s32.totalorder %s25, 1
      %p284 = scmp.ne.s32.totalorder %s279, %s281
      %p285 = scmp.eq.s32.totalorder %s25, 0
      %p286 = por %p284, %p285
      %p287 = scmp.ne.s32.totalorder %s279, %s281
      %p288 = scmp.eq.s32.totalorder %s30, 1
      %p289 = por %p287, %p288
      %p290 = scmp.ne.s32.totalorder %s281, %s282
      %p291 = scmp.eq.s32.totalorder %s30, 0
      %p292 = por %p290, %p291
      %p293 = scmp.ne.s32.totalorder %s281, %s282
      %p294 = scmp.eq.s32.totalorder %s31, 1
      %p295 = por %p293, %p294
      %p297 = scmp.ne.s32.totalorder %s282, %s296
      %p298 = scmp.eq.s32.totalorder %s31, 0
      %p299 = por %p297, %p298
      %s301 = sadd.s32 %s300, 1
      %p304 = scmp.eq.s32.totalorder %s25, 1
      %p305 = scmp.ne.s32.totalorder %s300, %s302
      %p306 = scmp.eq.s32.totalorder %s25, 0
      %p307 = por %p305, %p306
      %p308 = scmp.ne.s32.totalorder %s300, %s302
      %p309 = scmp.eq.s32.totalorder %s30, 1
      %p310 = por %p308, %p309
      %p311 = scmp.ne.s32.totalorder %s302, %s303
      %p312 = scmp.eq.s32.totalorder %s30, 0
      %p313 = por %p311, %p312
      %p314 = scmp.ne.s32.totalorder %s302, %s303
      %p315 = scmp.eq.s32.totalorder %s31, 1
      %p316 = por %p314, %p315
      %p318 = scmp.ne.s32.totalorder %s303, %s317
      %p319 = scmp.eq.s32.totalorder %s31, 0
      %p320 = por %p318, %p319
      %s322 = sadd.s32 %s321, 1
      %p325 = scmp.eq.s32.totalorder %s25, 1
      %p326 = scmp.ne.s32.totalorder %s321, %s323
      %p327 = scmp.eq.s32.totalorder %s25, 0
      %p328 = por %p326, %p327
      %p329 = scmp.ne.s32.totalorder %s321, %s323
      %p330 = scmp.eq.s32.totalorder %s30, 1
      %p331 = por %p329, %p330
      %p332 = scmp.ne.s32.totalorder %s323, %s324
      %p333 = scmp.eq.s32.totalorder %s30, 0
      %p334 = por %p332, %p333
      %p335 = scmp.ne.s32.totalorder %s323, %s324
      %p336 = scmp.eq.s32.totalorder %s31, 1
      %p337 = por %p335, %p336
      %p339 = scmp.ne.s32.totalorder %s324, %s338
      %p340 = scmp.eq.s32.totalorder %s31, 0
      %p341 = por %p339, %p340
      %s343 = sadd.s32 %s342, 1
      %p346 = scmp.eq.s32.totalorder %s25, 1
      %p347 = scmp.ne.s32.totalorder %s342, %s344
      %p348 = scmp.eq.s32.totalorder %s25, 0
      %p349 = por %p347, %p348
      %p350 = scmp.ne.s32.totalorder %s342, %s344
      %p351 = scmp.eq.s32.totalorder %s30, 1
      %p352 = por %p350, %p351
      %p353 = scmp.ne.s32.totalorder %s344, %s345
      %p354 = scmp.eq.s32.totalorder %s30, 0
      %p355 = por %p353, %p354
      %p356 = scmp.ne.s32.totalorder %s344, %s345
      %p357 = scmp.eq.s32.totalorder %s31, 1
      %p358 = por %p356, %p357
      %p360 = scmp.ne.s32.totalorder %s345, %s359
      %p361 = scmp.eq.s32.totalorder %s31, 0
      %p362 = por %p360, %p361
      %s363 = ssub.s32 %s25, %s32
      %p364 = scmp.eq.s32.totalorder %s363, 0
      %s366 = sadd.s32 %s365, 1
      %s367 = scalar_select %p364, %s365, %s366
      %p370 = pneg %p364
      %p371 = scmp.eq.s32.totalorder %s25, 1
      %p372 = por %p370, %p371
      %p373 = scmp.ne.s32.totalorder %s365, %s368
      %p374 = scmp.eq.s32.totalorder %s25, 0
      %p375 = por %p373, %p374
      %p376 = scmp.ne.s32.totalorder %s365, %s368
      %p377 = scmp.eq.s32.totalorder %s30, 1
      %p378 = por %p376, %p377
      %p379 = scmp.ne.s32.totalorder %s368, %s369
      %p380 = scmp.eq.s32.totalorder %s30, 0
      %p381 = por %p379, %p380
      %p382 = scmp.ne.s32.totalorder %s368, %s369
      %p383 = scmp.eq.s32.totalorder %s31, 1
      %p384 = por %p382, %p383
      %p386 = scmp.ne.s32.totalorder %s369, %s385
      %p387 = scmp.eq.s32.totalorder %s31, 0
      %p388 = por %p386, %p387
      %s389 = ssub.s32 %s25, %s32
      %p390 = scmp.eq.s32.totalorder %s389, 0
      %s392 = sadd.s32 %s391, 1
      %s393 = scalar_select %p390, %s391, %s392
      %p396 = pneg %p390
      %p397 = scmp.eq.s32.totalorder %s25, 1
      %p398 = por %p396, %p397
      %p399 = scmp.ne.s32.totalorder %s391, %s394
      %p400 = scmp.eq.s32.totalorder %s25, 0
      %p401 = por %p399, %p400
      %p402 = scmp.ne.s32.totalorder %s391, %s394
      %p403 = scmp.eq.s32.totalorder %s30, 1
      %p404 = por %p402, %p403
      %p405 = scmp.ne.s32.totalorder %s394, %s395
      %p406 = scmp.eq.s32.totalorder %s30, 0
      %p407 = por %p405, %p406
      %p408 = scmp.ne.s32.totalorder %s394, %s395
      %p409 = scmp.eq.s32.totalorder %s31, 1
      %p410 = por %p408, %p409
      %p412 = scmp.ne.s32.totalorder %s395, %s411
      %p413 = scmp.eq.s32.totalorder %s31, 0
      %p414 = por %p412, %p413
      %s415 = ssub.s32 %s25, %s32
      %p416 = scmp.eq.s32.totalorder %s415, 0
      %s418 = sadd.s32 %s417, 1
      %s419 = scalar_select %p416, %s417, %s418
      %p422 = pneg %p416
      %p423 = scmp.eq.s32.totalorder %s25, 1
      %p424 = por %p422, %p423
      %p425 = scmp.ne.s32.totalorder %s417, %s420
      %p426 = scmp.eq.s32.totalorder %s25, 0
      %p427 = por %p425, %p426
      %p428 = scmp.ne.s32.totalorder %s417, %s420
      %p429 = scmp.eq.s32.totalorder %s30, 1
      %p430 = por %p428, %p429
      %p431 = scmp.ne.s32.totalorder %s420, %s421
      %p432 = scmp.eq.s32.totalorder %s30, 0
      %p433 = por %p431, %p432
      %p434 = scmp.ne.s32.totalorder %s420, %s421
      %p435 = scmp.eq.s32.totalorder %s31, 1
      %p436 = por %p434, %p435
      %p438 = scmp.ne.s32.totalorder %s421, %s437
      %p439 = scmp.eq.s32.totalorder %s31, 0
      %p440 = por %p438, %p439
      %s441 = ssub.s32 %s25, %s32
      %p442 = scmp.eq.s32.totalorder %s441, 0
      %s444 = sadd.s32 %s443, 1
      %s445 = scalar_select %p442, %s443, %s444
      %p448 = pneg %p442
      %p449 = scmp.eq.s32.totalorder %s25, 1
      %p450 = por %p448, %p449
      %p451 = scmp.ne.s32.totalorder %s443, %s446
      %p452 = scmp.eq.s32.totalorder %s25, 0
      %p453 = por %p451, %p452
      %p454 = scmp.ne.s32.totalorder %s443, %s446
      %p455 = scmp.eq.s32.totalorder %s30, 1
      %p456 = por %p454, %p455
      %p457 = scmp.ne.s32.totalorder %s446, %s447
      %p458 = scmp.eq.s32.totalorder %s30, 0
      %p459 = por %p457, %p458
      %p460 = scmp.ne.s32.totalorder %s446, %s447
      %p461 = scmp.eq.s32.totalorder %s31, 1
      %p462 = por %p460, %p461
      %p464 = scmp.ne.s32.totalorder %s447, %s463
      %p465 = scmp.eq.s32.totalorder %s31, 0
      %p466 = por %p464, %p465
      %p467 = scmp.le.s32.totalorder 1, %s25
      %p468 = scmp.lt.s32.totalorder %s25, 3
      %p469 = pnand %p467, %p468
      %p470 = pneg %p469
      // Predicated region
      $region9: #{rvae_forward.1} parent=5 // pred_check
        _
      $region10: #{rvae_forward.1} parent=5 // pred_check_branch
        %472 = sbr.rel (%p469) target = $region12
      $region11: #{rvae_forward.1} parent=5 // pred_region
        %s473 = ssub.s32 %s25, 1
        // Predicated region
        $region13: #{rvae_forward.1} parent=11 // pred_check
          %p474 = pneg %p124
        $region14: #{rvae_forward.1} parent=11 // pred_check_branch
          %476 = sbr.rel (%p474) target = $region16
        $region15: #{rvae_forward.1} parent=11 // pred_region
          _
        $region16: #{rvae_forward.1} parent=11 // pred_fallthru
          _
        // Predicated region
        $region17: #{rvae_forward.1} parent=11 // pred_check
          %p477 = pneg %p145
        $region18: #{rvae_forward.1} parent=11 // pred_check_branch
          %479 = sbr.rel (%p477) target = $region20
        $region19: #{rvae_forward.1} parent=11 // pred_region
          _
        $region20: #{rvae_forward.1} parent=11 // pred_fallthru
          _
        // Predicated region
        $region21: #{rvae_forward.1} parent=11 // pred_check
          %p480 = pneg %p166
        $region22: #{rvae_forward.1} parent=11 // pred_check_branch
          %482 = sbr.rel (%p480) target = $region24
        $region23: #{rvae_forward.1} parent=11 // pred_region
          _
        $region24: #{rvae_forward.1} parent=11 // pred_fallthru
          _
        // Predicated region
        $region25: #{rvae_forward.1} parent=11 // pred_check
          %p483 = pneg %p187
        $region26: #{rvae_forward.1} parent=11 // pred_check_branch
          %485 = sbr.rel (%p483) target = $region28
        $region27: #{rvae_forward.1} parent=11 // pred_region
          _
        $region28: #{rvae_forward.1} parent=11 // pred_fallthru
          _
        // Predicated region
        $region29: #{rvae_forward.1} parent=11 // pred_check
          %p486 = pneg %p208
        $region30: #{rvae_forward.1} parent=11 // pred_check_branch
          %488 = sbr.rel (%p486) target = $region32
        $region31: #{rvae_forward.1} parent=11 // pred_region
          _
        $region32: #{rvae_forward.1} parent=11 // pred_fallthru
          _
        // Predicated region
        $region33: #{rvae_forward.1} parent=11 // pred_check
          %p489 = pneg %p229
        $region34: #{rvae_forward.1} parent=11 // pred_check_branch
          %491 = sbr.rel (%p489) target = $region36
        $region35: #{rvae_forward.1} parent=11 // pred_region
          _
        $region36: #{rvae_forward.1} parent=11 // pred_fallthru
          _
        // Predicated region
        $region37: #{rvae_forward.1} parent=11 // pred_check
          %p492 = pneg %p250
        $region38: #{rvae_forward.1} parent=11 // pred_check_branch
          %494 = sbr.rel (%p492) target = $region40
        $region39: #{rvae_forward.1} parent=11 // pred_region
          _
        $region40: #{rvae_forward.1} parent=11 // pred_fallthru
          _
        // Predicated region
        $region41: #{rvae_forward.1} parent=11 // pred_check
          %p495 = pneg %p271
        $region42: #{rvae_forward.1} parent=11 // pred_check_branch
          %497 = sbr.rel (%p495) target = $region44
        $region43: #{rvae_forward.1} parent=11 // pred_region
          _
        $region44: #{rvae_forward.1} parent=11 // pred_fallthru
          _
        // Predicated region
        $region45: #{rvae_forward.1} parent=11 // pred_check
          %p498 = pneg %p292
        $region46: #{rvae_forward.1} parent=11 // pred_check_branch
          %500 = sbr.rel (%p498) target = $region48
        $region47: #{rvae_forward.1} parent=11 // pred_region
          _
        $region48: #{rvae_forward.1} parent=11 // pred_fallthru
          _
        // Predicated region
        $region49: #{rvae_forward.1} parent=11 // pred_check
          %p501 = pneg %p313
        $region50: #{rvae_forward.1} parent=11 // pred_check_branch
          %503 = sbr.rel (%p501) target = $region52
        $region51: #{rvae_forward.1} parent=11 // pred_region
          _
        $region52: #{rvae_forward.1} parent=11 // pred_fallthru
          _
        // Predicated region
        $region53: #{rvae_forward.1} parent=11 // pred_check
          %p504 = pneg %p334
        $region54: #{rvae_forward.1} parent=11 // pred_check_branch
          %506 = sbr.rel (%p504) target = $region56
        $region55: #{rvae_forward.1} parent=11 // pred_region
          _
        $region56: #{rvae_forward.1} parent=11 // pred_fallthru
          _
        // Predicated region
        $region57: #{rvae_forward.1} parent=11 // pred_check
          %p507 = pneg %p355
        $region58: #{rvae_forward.1} parent=11 // pred_check_branch
          %509 = sbr.rel (%p507) target = $region60
        $region59: #{rvae_forward.1} parent=11 // pred_region
          _
        $region60: #{rvae_forward.1} parent=11 // pred_fallthru
          _
      $region12: #{rvae_forward.1} parent=5 // pred_fallthru
        _
      %p510 = scmp.lt.s32.totalorder %s25, 2
      // Predicated region
      $region61: #{rvae_forward.1} parent=5 // pred_check
        %p511 = pneg %p510
      $region62: #{rvae_forward.1} parent=5 // pred_check_branch
        %513 = sbr.rel (%p511) target = $region64
      $region63: #{rvae_forward.1} parent=5 // pred_region
        // Predicated region
        $region65: #{rvae_forward.1} parent=63 // pred_check
          %p514 = pneg %p45
        $region66: #{rvae_forward.1} parent=63 // pred_check_branch
          %516 = sbr.rel (%p514) target = $region68
        $region67: #{rvae_forward.1} parent=63 // pred_region
          %s517 = sand.u32 %s35, 1
          %s518 = sand.u32 %s35, 1
          %s519 = smul.addr %s518, 128
          %s520 = scalar_lea.vmem [#allocation4], %s519
          %s521 = smul.u32 2, %s25
          %s522 = smul.addr %s521, 8
          %s523 = scalar_lea.vmem %s0, %s522
          // Predicated region
          $region69: #{rvae_forward.1} parent=67 // pred_check
            _
          $region70: #{rvae_forward.1} parent=67 // pred_check_branch
            %525 = sbr.rel (0) target = $region72
          $region71: #{rvae_forward.1} parent=67 // pred_region
            // Predicated region
            $region73: #{rvae_forward.1} parent=71 // pred_check
              _
            $region74: #{rvae_forward.1} parent=71 // pred_check_branch
              %527 = sbr.rel (0) target = $region76
            $region75: #{rvae_forward.1} parent=71 // pred_region
              // Predicated region
              $region88: #{rvae_forward.1} parent=75 // pred_check
                _
              $region89: #{rvae_forward.1} parent=75 // pred_check_branch
                %572 = sbr.rel (0) target = $region91
              $region90: #{rvae_forward.1} parent=75 // pred_region
                loop: start=0, step=1, limit=1
                $region92: #{rvae_forward.1} parent=90 // loop_pre_header
                  _
                $region93: #{rvae_forward.1} parent=90 // loop_header
                  %s574 = sphi 0, %s578
                  %p575 = scmp.ge.s32.totalorder %s574, 1
                  %s579 = sphi %s523, %s523
                  %s580 = sphi %s520, %s520
                $region94: #{rvae_forward.1} parent=90 // loop_header_branch
                  %577 = sbr.rel (%p575) target = $region98
                $region95: #{rvae_forward.1} parent=90 // loop_body
                  %v581 = vld [vmem:[%s579] sm:$0xff]
                  %582 = vst [vmem:[%s580] sm:$0xff] %v581
                  %v583 = vld [vmem:[%s579 + $0x8] sm:$0xff]
                  %584 = vst [vmem:[%s580 + $0x8] sm:$0xff] %v583
                  %v585 = vld [vmem:[%s579 + $0x20] sm:$0xff]
                  %586 = vst [vmem:[%s580 + $0x10] sm:$0xff] %v585
                  %v587 = vld [vmem:[%s579 + $0x28] sm:$0xff]
                  %588 = vst [vmem:[%s580 + $0x18] sm:$0xff] %v587
                  %v589 = vld [vmem:[%s579 + $0x40] sm:$0xff]
                  %590 = vst [vmem:[%s580 + $0x20] sm:$0xff] %v589
                  %v591 = vld [vmem:[%s579 + $0x48] sm:$0xff]
                  %592 = vst [vmem:[%s580 + $0x28] sm:$0xff] %v591
                  %v593 = vld [vmem:[%s579 + $0x60] sm:$0xff]
                  %594 = vst [vmem:[%s580 + $0x30] sm:$0xff] %v593
                  %v595 = vld [vmem:[%s579 + $0x68] sm:$0xff]
                  %596 = vst [vmem:[%s580 + $0x38] sm:$0xff] %v595
                  %v597 = vld [vmem:[%s579 + $0x80] sm:$0xff]
                  %598 = vst [vmem:[%s580 + $0x40] sm:$0xff] %v597
                  %v599 = vld [vmem:[%s579 + $0x88] sm:$0xff]
                  %600 = vst [vmem:[%s580 + $0x48] sm:$0xff] %v599
                  %v601 = vld [vmem:[%s579 + $0xa0] sm:$0xff]
                  %602 = vst [vmem:[%s580 + $0x50] sm:$0xff] %v601
                  %v603 = vld [vmem:[%s579 + $0xa8] sm:$0xff]
                  %604 = vst [vmem:[%s580 + $0x58] sm:$0xff] %v603
                  %v605 = vld [vmem:[%s579 + $0xc0] sm:$0xff]
                  %606 = vst [vmem:[%s580 + $0x60] sm:$0xff] %v605
                  %v607 = vld [vmem:[%s579 + $0xc8] sm:$0xff]
                  %608 = vst [vmem:[%s580 + $0x68] sm:$0xff] %v607
                  %v609 = vld [vmem:[%s579 + $0xe0] sm:$0xff]
                  %610 = vst [vmem:[%s580 + $0x70] sm:$0xff] %v609
                  %v611 = vld [vmem:[%s579 + $0xe8] sm:$0xff]
                  %612 = vst [vmem:[%s580 + $0x78] sm:$0xff] %v611
                $region96: #{rvae_forward.1} parent=90 // loop_footer
                  %s578 = sadd.s32 1, %s574
                $region97: #{rvae_forward.1} parent=90 // loop_footer_branch
                  %573 = sbr.rel target = $region93
                $region98: #{rvae_forward.1} parent=90 // loop_exit
                  _
              $region91: #{rvae_forward.1} parent=75 // pred_fallthru
                _
              // Predicated region
              $region99: #{rvae_forward.1} parent=75 // pred_check
                _
              $region100: #{rvae_forward.1} parent=75 // pred_check_branch
                %614 = sbr.rel target = $region102
              $region101: #{rvae_forward.1} parent=75 // pred_region
                _
              $region102: #{rvae_forward.1} parent=75 // pred_fallthru
                _
            $region76: #{rvae_forward.1} parent=71 // pred_fallthru
              _
            // Predicated region
            $region77: #{rvae_forward.1} parent=71 // pred_check
              _
            $region78: #{rvae_forward.1} parent=71 // pred_check_branch
              %529 = sbr.rel target = $region80
            $region79: #{rvae_forward.1} parent=71 // pred_region
              loop: start=0, step=1, limit=1
              $region81: #{rvae_forward.1} parent=79 // loop_pre_header
                _
              $region82: #{rvae_forward.1} parent=79 // loop_header
                %s532 = sphi 0, %s536
                %p533 = scmp.ge.s32.totalorder %s532, 1
                %s537 = sphi %s523, %s523
                %s538 = sphi %s520, %s520
              $region83: #{rvae_forward.1} parent=79 // loop_header_branch
                %535 = sbr.rel (%p533) target = $region87
              $region84: #{rvae_forward.1} parent=79 // loop_body
                %v539 = vld [vmem:[%s537] sm:$0xff]
                %540 = vst [vmem:[%s538] sm:$0xff] %v539
                %v541 = vld [vmem:[%s537 + $0x8] sm:$0xff]
                %542 = vst [vmem:[%s538 + $0x8] sm:$0xff] %v541
                %v543 = vld [vmem:[%s537 + $0x20] sm:$0xff]
                %544 = vst [vmem:[%s538 + $0x10] sm:$0xff] %v543
                %v545 = vld [vmem:[%s537 + $0x28] sm:$0xff]
                %546 = vst [vmem:[%s538 + $0x18] sm:$0xff] %v545
                %v547 = vld [vmem:[%s537 + $0x40] sm:$0xff]
                %548 = vst [vmem:[%s538 + $0x20] sm:$0xff] %v547
                %v549 = vld [vmem:[%s537 + $0x48] sm:$0xff]
                %550 = vst [vmem:[%s538 + $0x28] sm:$0xff] %v549
                %v551 = vld [vmem:[%s537 + $0x60] sm:$0xff]
                %552 = vst [vmem:[%s538 + $0x30] sm:$0xff] %v551
                %v553 = vld [vmem:[%s537 + $0x68] sm:$0xff]
                %554 = vst [vmem:[%s538 + $0x38] sm:$0xff] %v553
                %v555 = vld [vmem:[%s537 + $0x80] sm:$0xff]
                %556 = vst [vmem:[%s538 + $0x40] sm:$0xff] %v555
                %v557 = vld [vmem:[%s537 + $0x88] sm:$0xff]
                %558 = vst [vmem:[%s538 + $0x48] sm:$0xff] %v557
                %v559 = vld [vmem:[%s537 + $0xa0] sm:$0xff]
                %560 = vst [vmem:[%s538 + $0x50] sm:$0xff] %v559
                %v561 = vld [vmem:[%s537 + $0xa8] sm:$0xff]
                %562 = vst [vmem:[%s538 + $0x58] sm:$0xff] %v561
                %v563 = vld [vmem:[%s537 + $0xc0] sm:$0xff]
                %564 = vst [vmem:[%s538 + $0x60] sm:$0xff] %v563
                %v565 = vld [vmem:[%s537 + $0xc8] sm:$0xff]
                %566 = vst [vmem:[%s538 + $0x68] sm:$0xff] %v565
                %v567 = vld [vmem:[%s537 + $0xe0] sm:$0xff]
                %568 = vst [vmem:[%s538 + $0x70] sm:$0xff] %v567
                %v569 = vld [vmem:[%s537 + $0xe8] sm:$0xff]
                %570 = vst [vmem:[%s538 + $0x78] sm:$0xff] %v569
              $region85: #{rvae_forward.1} parent=79 // loop_footer
                %s536 = sadd.s32 1, %s532
              $region86: #{rvae_forward.1} parent=79 // loop_footer_branch
                %531 = sbr.rel target = $region82
              $region87: #{rvae_forward.1} parent=79 // loop_exit
                _
            $region80: #{rvae_forward.1} parent=71 // pred_fallthru
              _
          $region72: #{rvae_forward.1} parent=67 // pred_fallthru
            _
          %615 = vnop
        $region68: #{rvae_forward.1} parent=63 // pred_fallthru
          _
        // Predicated region
        $region103: #{rvae_forward.1} parent=63 // pred_check
          %p616 = pneg %p71
        $region104: #{rvae_forward.1} parent=63 // pred_check_branch
          %618 = sbr.rel (%p616) target = $region106
        $region105: #{rvae_forward.1} parent=63 // pred_region
          %s619 = sand.u32 %s61, 1
          %s620 = sand.u32 %s61, 1
          %s621 = smul.addr %s620, 128
          %s622 = scalar_lea.vmem [#allocation5], %s621
          %s623 = smul.u32 2, %s25
          %s624 = smul.addr %s623, 8
          %s625 = scalar_lea.vmem %s1, %s624
          // Predicated region
          $region107: #{rvae_forward.1} parent=105 // pred_check
            _
          $region108: #{rvae_forward.1} parent=105 // pred_check_branch
            %627 = sbr.rel (0) target = $region110
          $region109: #{rvae_forward.1} parent=105 // pred_region
            // Predicated region
            $region111: #{rvae_forward.1} parent=109 // pred_check
              _
            $region112: #{rvae_forward.1} parent=109 // pred_check_branch
              %629 = sbr.rel (0) target = $region114
            $region113: #{rvae_forward.1} parent=109 // pred_region
              // Predicated region
              $region126: #{rvae_forward.1} parent=113 // pred_check
                _
              $region127: #{rvae_forward.1} parent=113 // pred_check_branch
                %674 = sbr.rel (0) target = $region129
              $region128: #{rvae_forward.1} parent=113 // pred_region
                loop: start=0, step=1, limit=1
                $region130: #{rvae_forward.1} parent=128 // loop_pre_header
                  _
                $region131: #{rvae_forward.1} parent=128 // loop_header
                  %s676 = sphi 0, %s680
                  %p677 = scmp.ge.s32.totalorder %s676, 1
                  %s681 = sphi %s625, %s625
                  %s682 = sphi %s622, %s622
                $region132: #{rvae_forward.1} parent=128 // loop_header_branch
                  %679 = sbr.rel (%p677) target = $region136
                $region133: #{rvae_forward.1} parent=128 // loop_body
                  %v683 = vld [vmem:[%s681] sm:$0xff]
                  %684 = vst [vmem:[%s682] sm:$0xff] %v683
                  %v685 = vld [vmem:[%s681 + $0x8] sm:$0xff]
                  %686 = vst [vmem:[%s682 + $0x8] sm:$0xff] %v685
                  %v687 = vld [vmem:[%s681 + $0x20] sm:$0xff]
                  %688 = vst [vmem:[%s682 + $0x10] sm:$0xff] %v687
                  %v689 = vld [vmem:[%s681 + $0x28] sm:$0xff]
                  %690 = vst [vmem:[%s682 + $0x18] sm:$0xff] %v689
                  %v691 = vld [vmem:[%s681 + $0x40] sm:$0xff]
                  %692 = vst [vmem:[%s682 + $0x20] sm:$0xff] %v691
                  %v693 = vld [vmem:[%s681 + $0x48] sm:$0xff]
                  %694 = vst [vmem:[%s682 + $0x28] sm:$0xff] %v693
                  %v695 = vld [vmem:[%s681 + $0x60] sm:$0xff]
                  %696 = vst [vmem:[%s682 + $0x30] sm:$0xff] %v695
                  %v697 = vld [vmem:[%s681 + $0x68] sm:$0xff]
                  %698 = vst [vmem:[%s682 + $0x38] sm:$0xff] %v697
                  %v699 = vld [vmem:[%s681 + $0x80] sm:$0xff]
                  %700 = vst [vmem:[%s682 + $0x40] sm:$0xff] %v699
                  %v701 = vld [vmem:[%s681 + $0x88] sm:$0xff]
                  %702 = vst [vmem:[%s682 + $0x48] sm:$0xff] %v701
                  %v703 = vld [vmem:[%s681 + $0xa0] sm:$0xff]
                  %704 = vst [vmem:[%s682 + $0x50] sm:$0xff] %v703
                  %v705 = vld [vmem:[%s681 + $0xa8] sm:$0xff]
                  %706 = vst [vmem:[%s682 + $0x58] sm:$0xff] %v705
                  %v707 = vld [vmem:[%s681 + $0xc0] sm:$0xff]
                  %708 = vst [vmem:[%s682 + $0x60] sm:$0xff] %v707
                  %v709 = vld [vmem:[%s681 + $0xc8] sm:$0xff]
                  %710 = vst [vmem:[%s682 + $0x68] sm:$0xff] %v709
                  %v711 = vld [vmem:[%s681 + $0xe0] sm:$0xff]
                  %712 = vst [vmem:[%s682 + $0x70] sm:$0xff] %v711
                  %v713 = vld [vmem:[%s681 + $0xe8] sm:$0xff]
                  %714 = vst [vmem:[%s682 + $0x78] sm:$0xff] %v713
                $region134: #{rvae_forward.1} parent=128 // loop_footer
                  %s680 = sadd.s32 1, %s676
                $region135: #{rvae_forward.1} parent=128 // loop_footer_branch
                  %675 = sbr.rel target = $region131
                $region136: #{rvae_forward.1} parent=128 // loop_exit
                  _
              $region129: #{rvae_forward.1} parent=113 // pred_fallthru
                _
              // Predicated region
              $region137: #{rvae_forward.1} parent=113 // pred_check
                _
              $region138: #{rvae_forward.1} parent=113 // pred_check_branch
                %716 = sbr.rel target = $region140
              $region139: #{rvae_forward.1} parent=113 // pred_region
                _
              $region140: #{rvae_forward.1} parent=113 // pred_fallthru
                _
            $region114: #{rvae_forward.1} parent=109 // pred_fallthru
              _
            // Predicated region
            $region115: #{rvae_forward.1} parent=109 // pred_check
              _
            $region116: #{rvae_forward.1} parent=109 // pred_check_branch
              %631 = sbr.rel target = $region118
            $region117: #{rvae_forward.1} parent=109 // pred_region
              loop: start=0, step=1, limit=1
              $region119: #{rvae_forward.1} parent=117 // loop_pre_header
                _
              $region120: #{rvae_forward.1} parent=117 // loop_header
                %s634 = sphi 0, %s638
                %p635 = scmp.ge.s32.totalorder %s634, 1
                %s639 = sphi %s625, %s625
                %s640 = sphi %s622, %s622
              $region121: #{rvae_forward.1} parent=117 // loop_header_branch
                %637 = sbr.rel (%p635) target = $region125
              $region122: #{rvae_forward.1} parent=117 // loop_body
                %v641 = vld [vmem:[%s639] sm:$0xff]
                %642 = vst [vmem:[%s640] sm:$0xff] %v641
                %v643 = vld [vmem:[%s639 + $0x8] sm:$0xff]
                %644 = vst [vmem:[%s640 + $0x8] sm:$0xff] %v643
                %v645 = vld [vmem:[%s639 + $0x20] sm:$0xff]
                %646 = vst [vmem:[%s640 + $0x10] sm:$0xff] %v645
                %v647 = vld [vmem:[%s639 + $0x28] sm:$0xff]
                %648 = vst [vmem:[%s640 + $0x18] sm:$0xff] %v647
                %v649 = vld [vmem:[%s639 + $0x40] sm:$0xff]
                %650 = vst [vmem:[%s640 + $0x20] sm:$0xff] %v649
                %v651 = vld [vmem:[%s639 + $0x48] sm:$0xff]
                %652 = vst [vmem:[%s640 + $0x28] sm:$0xff] %v651
                %v653 = vld [vmem:[%s639 + $0x60] sm:$0xff]
                %654 = vst [vmem:[%s640 + $0x30] sm:$0xff] %v653
                %v655 = vld [vmem:[%s639 + $0x68] sm:$0xff]
                %656 = vst [vmem:[%s640 + $0x38] sm:$0xff] %v655
                %v657 = vld [vmem:[%s639 + $0x80] sm:$0xff]
                %658 = vst [vmem:[%s640 + $0x40] sm:$0xff] %v657
                %v659 = vld [vmem:[%s639 + $0x88] sm:$0xff]
                %660 = vst [vmem:[%s640 + $0x48] sm:$0xff] %v659
                %v661 = vld [vmem:[%s639 + $0xa0] sm:$0xff]
                %662 = vst [vmem:[%s640 + $0x50] sm:$0xff] %v661
                %v663 = vld [vmem:[%s639 + $0xa8] sm:$0xff]
                %664 = vst [vmem:[%s640 + $0x58] sm:$0xff] %v663
                %v665 = vld [vmem:[%s639 + $0xc0] sm:$0xff]
                %666 = vst [vmem:[%s640 + $0x60] sm:$0xff] %v665
                %v667 = vld [vmem:[%s639 + $0xc8] sm:$0xff]
                %668 = vst [vmem:[%s640 + $0x68] sm:$0xff] %v667
                %v669 = vld [vmem:[%s639 + $0xe0] sm:$0xff]
                %670 = vst [vmem:[%s640 + $0x70] sm:$0xff] %v669
                %v671 = vld [vmem:[%s639 + $0xe8] sm:$0xff]
                %672 = vst [vmem:[%s640 + $0x78] sm:$0xff] %v671
              $region123: #{rvae_forward.1} parent=117 // loop_footer
                %s638 = sadd.s32 1, %s634
              $region124: #{rvae_forward.1} parent=117 // loop_footer_branch
                %633 = sbr.rel target = $region120
              $region125: #{rvae_forward.1} parent=117 // loop_exit
                _
            $region118: #{rvae_forward.1} parent=109 // pred_fallthru
              _
          $region110: #{rvae_forward.1} parent=105 // pred_fallthru
            _
          %717 = vnop
        $region106: #{rvae_forward.1} parent=63 // pred_fallthru
          _
        // Predicated region
        $region141: #{rvae_forward.1} parent=63 // pred_check
          %p718 = pneg %p97
        $region142: #{rvae_forward.1} parent=63 // pred_check_branch
          %720 = sbr.rel (%p718) target = $region144
        $region143: #{rvae_forward.1} parent=63 // pred_region
          %s721 = smul.u32 2, %s25
          %p722 = scmp.lt.s32.totalorder %s721, 3
          %s723 = scalar_select %p722, %s721, 3
          %s724 = smul.addr %s723, 8
          %s725 = scalar_lea.vmem %s2, %s724
          %s726 = smul.u32 2, %s25
        $region144: #{rvae_forward.1} parent=63 // pred_fallthru
          _
      $region64: #{rvae_forward.1} parent=5 // pred_fallthru
        _
      %p727 = scmp.le.s32.totalorder 1, %s25
      %p728 = scmp.lt.s32.totalorder %s25, 3
      %p729 = pnand %p727, %p728
      %p730 = pneg %p729
      // Predicated region
      $region145: #{rvae_forward.1} parent=5 // pred_check
        _
      $region146: #{rvae_forward.1} parent=5 // pred_check_branch
        %732 = sbr.rel (%p729) target = $region148
      $region147: #{rvae_forward.1} parent=5 // pred_region
        %s733 = ssub.s32 %s25, 1
        %s734 = sand.u32 %s38, 1
        %s735 = sand.u32 %s38, 1
        %s736 = smul.addr %s735, 128
        %s737 = scalar_lea.vmem [#allocation4], %s736
        // Predicated region
        $region149: #{rvae_forward.1} parent=147 // pred_check
          %p738 = pneg %p51
        $region150: #{rvae_forward.1} parent=147 // pred_check_branch
          %740 = sbr.rel (%p738) target = $region152
        $region151: #{rvae_forward.1} parent=147 // pred_region
          _
        $region152: #{rvae_forward.1} parent=147 // pred_fallthru
          _
        %s741 = sand.u32 %s64, 1
        %s742 = sand.u32 %s64, 1
        %s743 = smul.addr %s742, 128
        %s744 = scalar_lea.vmem [#allocation5], %s743
        // Predicated region
        $region153: #{rvae_forward.1} parent=147 // pred_check
          %p745 = pneg %p77
        $region154: #{rvae_forward.1} parent=147 // pred_check_branch
          %747 = sbr.rel (%p745) target = $region156
        $region155: #{rvae_forward.1} parent=147 // pred_region
          _
        $region156: #{rvae_forward.1} parent=147 // pred_fallthru
          _
        %s748 = sand.u32 %s38, 1
        %s749 = sand.u32 %s38, 1
        %s750 = smul.addr %s749, 128
        %s751 = scalar_lea.vmem [#allocation4], %s750
        %p752 = pneg %p51
        %p753 = pneg %p48
        %s754 = sand.u32 %s64, 1
        %s755 = sand.u32 %s64, 1
        %s756 = smul.addr %s755, 128
        %s757 = scalar_lea.vmem [#allocation5], %s756
        %p758 = pneg %p77
        %p759 = pneg %p74
        %s760 = smul.u32 2, %s30
        %p761 = scmp.lt.s32.totalorder %s760, 3
        %s762 = scalar_select %p761, %s760, 3
        %s763 = smul.addr %s762, 8
        %s764 = scalar_lea.vmem %s2, %s763
        %p765 = pneg %p103
        %p766 = pneg %p100
        %p767 = pneg %p124
        %p768 = pneg %p121
        %p769 = pneg %p145
        %p770 = pneg %p142
        %p771 = pneg %p166
        %p772 = pneg %p163
        %p773 = pneg %p187
        %p774 = pneg %p184
        %p775 = pneg %p208
        %p776 = pneg %p205
        %p777 = pneg %p229
        %p778 = pneg %p226
        %p779 = pneg %p250
        %p780 = pneg %p247
        %p781 = pneg %p271
        %p782 = pneg %p268
        %p783 = pneg %p292
        %p784 = pneg %p289
        %p785 = pneg %p313
        %p786 = pneg %p310
        %p787 = pneg %p334
        %p788 = pneg %p331
        %p789 = pneg %p355
        %p790 = pneg %p352
        %p791 = pneg %p381
        %p792 = pneg %p378
        %s793 = sand.u32 %s368, 1
        %s794 = sand.u32 %s368, 1
        %s795 = smul.addr %s794, 128
        %s796 = scalar_lea.vmem [#allocation6], %s795
        %p797 = pneg %p407
        %p798 = pneg %p404
        %s799 = smul.u32 2, %s30
        %p800 = scmp.lt.s32.totalorder %s799, 3
        %s801 = scalar_select %p800, %s799, 3
        %s802 = smul.addr %s801, 8
        %s803 = scalar_lea.vmem %s16, %s802
        %p804 = pneg %p433
        %p805 = pneg %p430
        %s806 = smul.u32 2, %s30
        %p807 = scmp.lt.s32.totalorder %s806, 3
        %s808 = scalar_select %p807, %s806, 3
        %s809 = smul.addr %s808, 8
        %s810 = scalar_lea.vmem %s17, %s809
        %p811 = pneg %p459
        %p812 = pneg %p456
        %s813 = smul.u32 2, %s30
        %p814 = scmp.lt.s32.totalorder %s813, 3
        %s815 = scalar_select %p814, %s813, 3
        %s816 = smul.addr %s815, 8
        %s817 = scalar_lea.vmem %s18, %s816
        %s818 = smul.u32 2, %s30
        %s819 = smul.u32 2, %s30
        %s820 = smul.u32 2, %s30
        %p821 = scmp.lt.s32.totalorder %s820, 3
        %s822 = scalar_select %p821, %s820, 3
        %s823 = smul.addr %s822, 8
        %s824 = scalar_lea.vmem %s2, %s823
        %s825 = smul.u32 2, %s30
        %s826 = smul.u32 2, %s30
        %s827 = smul.u32 2, %s30
        %p828 = scmp.lt.s32.totalorder %s827, 3
        %s829 = scalar_select %p828, %s827, 3
        %s830 = smul.addr %s829, 8
        %s831 = scalar_lea.vmem %s16, %s830
        %s832 = smul.u32 2, %s30
        %s833 = smul.u32 2, %s30
        %p834 = scmp.lt.s32.totalorder %s833, 3
        %s835 = scalar_select %p834, %s833, 3
        %s836 = smul.addr %s835, 8
        %s837 = scalar_lea.vmem %s17, %s836
        %s838 = smul.u32 2, %s30
        %s839 = smul.u32 2, %s30
        %p840 = scmp.lt.s32.totalorder %s839, 3
        %s841 = scalar_select %p840, %s839, 3
        %s842 = smul.addr %s841, 8
        %s843 = scalar_lea.vmem %s18, %s842
        %s844 = smul.u32 2, %s30
        %v845 = vld [vmem:[%s824] sm:$0xff]
        %v846 = vld [vmem:[%s824 + $0x8] sm:$0xff]
        %v847 = vld [vmem:[%s737] sm:$0xff]
        %v848 = vld [vmem:[%s737 + $0x8] sm:$0xff]
        %v849 = vld [vmem:[%s737 + $0x10] sm:$0xff]
        %v850 = vld [vmem:[%s737 + $0x18] sm:$0xff]
        %v851 = vld [vmem:[%s737 + $0x20] sm:$0xff]
        %v852 = vld [vmem:[%s737 + $0x28] sm:$0xff]
        %v853 = vld [vmem:[%s737 + $0x30] sm:$0xff]
        %v854 = vld [vmem:[%s737 + $0x38] sm:$0xff]
        %v855 = vld [vmem:[%s737 + $0x40] sm:$0xff]
        %v856 = vld [vmem:[%s737 + $0x48] sm:$0xff]
        %v857 = vld [vmem:[%s737 + $0x50] sm:$0xff]
        %v858 = vld [vmem:[%s737 + $0x58] sm:$0xff]
        %v859 = vld [vmem:[%s737 + $0x60] sm:$0xff]
        %v860 = vld [vmem:[%s737 + $0x68] sm:$0xff]
        %v861 = vld [vmem:[%s737 + $0x70] sm:$0xff]
        %v862 = vld [vmem:[%s737 + $0x78] sm:$0xff]
        %v863 = vld [vmem:[%s3] sm:$0x7f]
        %v864 = vld [vmem:[%s5] sm:$0x1]
        %v866 = vlaneseq
        %v867 = vshrl.u32 %v866, 7
        %v868 = vsub.s32 0, %v867
        %v869 = vrot.slane %v864, %v868
        %vm871 = vcmask 56320
        %v873 = vsel %vm871, %v847, 0
        %v876 = vsel %vm871, %v848, 0
        %v879 = vsel %vm871, %v849, 0
        %v882 = vsel %vm871, %v850, 0
        %v885 = vsel %vm871, %v851, 0
        %v888 = vsel %vm871, %v852, 0
        %v891 = vsel %vm871, %v853, 0
        %v894 = vsel %vm871, %v854, 0
        %v897 = vsel %vm871, %v855, 0
        %v900 = vsel %vm871, %v856, 0
        %v903 = vsel %vm871, %v857, 0
        %v906 = vsel %vm871, %v858, 0
        %v909 = vsel %vm871, %v859, 0
        %v912 = vsel %vm871, %v860, 0
        %v915 = vsel %vm871, %v861, 0
        %v918 = vsel %vm871, %v862, 0
        %vm920 = vcmask 1046528
        %v922 = vsel %vm920, %v863, 0
        %924 = vmatprep.subr.mxu0 0.0
        %925 = vmatpush1.msra.mxu0 %v922
        %926 = vmatprep.subr.mxu0 0.0
        %927 = vmatpush1.msra.mxu0 0.0
        %928 = vmatprep.subr.mxu0 0.0
        %929 = vmatpush1.msra.mxu0 0.0
        %930 = vmatprep.subr.mxu0 0.0
        %931 = vmatpush1.msra.mxu0 0.0
        %932 = vmatprep.subr.mxu0 0.0
        %933 = vmatpush1.msra.mxu0 0.0
        %934 = vmatprep.subr.mxu0 0.0
        %935 = vmatpush1.msra.mxu0 0.0
        %936 = vmatprep.subr.mxu0 0.0
        %937 = vmatpush1.msra.mxu0 0.0
        %938 = vmatprep.subr.mxu0 0.0
        %939 = vmatpush1.msra.mxu0 0.0
        %940 = vmatprep.subr.mxu0 0.0
        %941 = vmatpush1.msra.mxu0 0.0
        %942 = vmatprep.subr.mxu0 0.0
        %943 = vmatpush1.msra.mxu0 0.0
        %944 = vmatprep.subr.mxu0 0.0
        %945 = vmatpush1.msra.mxu0 0.0
        %946 = vmatprep.subr.mxu0 0.0
        %947 = vmatpush1.msra.mxu0 0.0
        %948 = vmatprep.subr.mxu0 0.0
        %949 = vmatpush1.msra.mxu0 0.0
        %950 = vmatprep.subr.mxu0 0.0
        %951 = vmatpush1.msra.mxu0 0.0
        %952 = vmatprep.subr.mxu0 0.0
        %953 = vmatpush1.msra.mxu0 0.0
        %954 = vmatprep.subr.mxu0 0.0
        %955 = vmatpush1.msra.mxu0 0.0
        %956 = vmatprep.subr.mxu0 0.0
        %957 = vmatpush1.msra.mxu0 0.0
        %958 = vmatprep.subr.mxu0 0.0
        %959 = vmatpush1.msra.mxu0 0.0
        %960 = vmatprep.subr.mxu0 0.0
        %961 = vmatpush1.msra.mxu0 0.0
        %962 = vmatprep.subr.mxu0 0.0
        %963 = vmatpush1.msra.mxu0 0.0
        %964 = vmatprep.subr.mxu0 0.0
        %965 = vmatpush1.msra.mxu0 0.0
        %966 = vmatprep.subr.mxu0 0.0
        %967 = vmatpush1.msra.mxu0 0.0
        %968 = vmatprep.subr.mxu0 0.0
        %969 = vmatpush1.msra.mxu0 0.0
        %970 = vmatprep.subr.mxu0 0.0
        %971 = vmatpush1.msra.mxu0 0.0
        %972 = vmatprep.subr.mxu0 0.0
        %973 = vmatpush1.msra.mxu0 0.0
        %974 = vmatprep.subr.mxu0 0.0
        %975 = vmatpush1.msra.mxu0 0.0
        %976 = vmatprep.subr.mxu0 0.0
        %977 = vmatpush1.msra.mxu0 0.0
        %978 = vmatprep.subr.mxu0 0.0
        %979 = vmatpush1.msra.mxu0 0.0
        %980 = vmatprep.subr.mxu0 0.0
        %981 = vmatpush1.msra.mxu0 0.0
        %982 = vmatprep.subr.mxu0 0.0
        %983 = vmatpush1.msra.mxu0 0.0
        %984 = vmatprep.subr.mxu0 0.0
        %985 = vmatpush1.msra.mxu0 0.0
        %986 = vmatprep.subr.mxu0 0.0
        %987 = vmatpush1.msra.mxu0 0.0
        %988 = vmatprep.mubr.f32.mxu0 0.0
        %989 = vmatmul.mubr.f32.gmra.mrb[0].mxu0 %v873
        %v990 = vpop.f32.mrb[0].mxu0
        %v991 = vadd.f32 %v869, %v990
        %v992 = vpop.f32.mrb[0].mxu0
        %993 = vmatprep.mubr.f32.mxu0 0.0
        %994 = vmatmul.mubr.f32.gmra.mrb[0].mxu0 %v876
        %v995 = vpop.f32.mrb[0].mxu0
        %v996 = vadd.f32 %v869, %v995
        %v997 = vpop.f32.mrb[0].mxu0
        %998 = vmatprep.mubr.f32.mxu0 0.0
        %999 = vmatmul.mubr.f32.gmra.mrb[0].mxu0 %v879
        %v1000 = vpop.f32.mrb[0].mxu0
        %v1001 = vadd.f32 %v869, %v1000
        %v1002 = vpop.f32.mrb[0].mxu0
        %1003 = vmatprep.mubr.f32.mxu0 0.0
        %1004 = vmatmul.mubr.f32.gmra.mrb[0].mxu0 %v882
        %v1005 = vpop.f32.mrb[0].mxu0
        %v1006 = vadd.f32 %v869, %v1005
        %v1007 = vpop.f32.mrb[0].mxu0
        %1008 = vmatprep.mubr.f32.mxu0 0.0
        %1009 = vmatmul.mubr.f32.gmra.mrb[0].mxu0 %v885
        %v1010 = vpop.f32.mrb[0].mxu0
        %v1011 = vadd.f32 %v869, %v1010
        %v1012 = vpop.f32.mrb[0].mxu0
        %1013 = vmatprep.mubr.f32.mxu0 0.0
        %1014 = vmatmul.mubr.f32.gmra.mrb[0].mxu0 %v888
        %v1015 = vpop.f32.mrb[0].mxu0
        %v1016 = vadd.f32 %v869, %v1015
        %v1017 = vpop.f32.mrb[0].mxu0
        %1018 = vmatprep.mubr.f32.mxu0 0.0
        %1019 = vmatmul.mubr.f32.gmra.mrb[0].mxu0 %v891
        %v1020 = vpop.f32.mrb[0].mxu0
        %v1021 = vadd.f32 %v869, %v1020
        %v1022 = vpop.f32.mrb[0].mxu0
        %1023 = vmatprep.mubr.f32.mxu0 0.0
        %1024 = vmatmul.mubr.f32.gmra.mrb[0].mxu0 %v894
        %v1025 = vpop.f32.mrb[0].mxu0
        %v1026 = vadd.f32 %v869, %v1025
        %v1027 = vpop.f32.mrb[0].mxu0
        %1028 = vmatprep.mubr.f32.mxu0 0.0
        %1029 = vmatmul.mubr.f32.gmra.mrb[0].mxu0 %v897
        %v1030 = vpop.f32.mrb[0].mxu0
        %v1031 = vadd.f32 %v869, %v1030
        %v1032 = vpop.f32.mrb[0].mxu0
        %1033 = vmatprep.mubr.f32.mxu0 0.0
        %1034 = vmatmul.mubr.f32.gmra.mrb[0].mxu0 %v900
        %v1035 = vpop.f32.mrb[0].mxu0
        %v1036 = vadd.f32 %v869, %v1035
        %v1037 = vpop.f32.mrb[0].mxu0
        %1038 = vmatprep.mubr.f32.mxu0 0.0
        %1039 = vmatmul.mubr.f32.gmra.mrb[0].mxu0 %v903
        %v1040 = vpop.f32.mrb[0].mxu0
        %v1041 = vadd.f32 %v869, %v1040
        %v1042 = vpop.f32.mrb[0].mxu0
        %1043 = vmatprep.mubr.f32.mxu0 0.0
        %1044 = vmatmul.mubr.f32.gmra.mrb[0].mxu0 %v906
        %v1045 = vpop.f32.mrb[0].mxu0
        %v1046 = vadd.f32 %v869, %v1045
        %v1047 = vpop.f32.mrb[0].mxu0
        %1048 = vmatprep.mubr.f32.mxu0 0.0
        %1049 = vmatmul.mubr.f32.gmra.mrb[0].mxu0 %v909
        %v1050 = vpop.f32.mrb[0].mxu0
        %v1051 = vadd.f32 %v869, %v1050
        %v1052 = vpop.f32.mrb[0].mxu0
        %1053 = vmatprep.mubr.f32.mxu0 0.0
        %1054 = vmatmul.mubr.f32.gmra.mrb[0].mxu0 %v912
        %v1055 = vpop.f32.mrb[0].mxu0
        %v1056 = vadd.f32 %v869, %v1055
        %v1057 = vpop.f32.mrb[0].mxu0
        %1058 = vmatprep.mubr.f32.mxu0 0.0
        %1059 = vmatmul.mubr.f32.gmra.mrb[0].mxu0 %v915
        %v1060 = vpop.f32.mrb[0].mxu0
        %v1061 = vadd.f32 %v869, %v1060
        %v1062 = vpop.f32.mrb[0].mxu0
        %1063 = vmatprep.mubr.f32.mxu0 0.0
        %1064 = vmatmul.mubr.f32.gmra.mrb[0].mxu0 %v918
        %v1065 = vpop.f32.mrb[0].mxu0
        %v1066 = vadd.f32 %v869, %v1065
        %v1067 = vpop.f32.mrb[0].mxu0
        %1068 = vdwg.mxu0
        %vm1069 = vcmask 261120
        %1070 = vst.msk [vmem:[#allocation2] sm:$0xff] %vm1069, %v991
        %1071 = vst.msk [vmem:[#allocation2 + $0x8] sm:$0xff] %vm1069, %v996
        %1072 = vst.msk [vmem:[#allocation2 + $0x10] sm:$0xff] %vm1069, %v1001
        %1073 = vst.msk [vmem:[#allocation2 + $0x18] sm:$0xff] %vm1069, %v1006
        %1074 = vst.msk [vmem:[#allocation2 + $0x20] sm:$0xff] %vm1069, %v1011
        %1075 = vst.msk [vmem:[#allocation2 + $0x28] sm:$0xff] %vm1069, %v1016
        %1076 = vst.msk [vmem:[#allocation2 + $0x30] sm:$0xff] %vm1069, %v1021
        %1077 = vst.msk [vmem:[#allocation2 + $0x38] sm:$0xff] %vm1069, %v1026
        %1078 = vst.msk [vmem:[#allocation2 + $0x40] sm:$0xff] %vm1069, %v1031
        %1079 = vst.msk [vmem:[#allocation2 + $0x48] sm:$0xff] %vm1069, %v1036
        %1080 = vst.msk [vmem:[#allocation2 + $0x50] sm:$0xff] %vm1069, %v1041
        %1081 = vst.msk [vmem:[#allocation2 + $0x58] sm:$0xff] %vm1069, %v1046
        %1082 = vst.msk [vmem:[#allocation2 + $0x60] sm:$0xff] %vm1069, %v1051
        %1083 = vst.msk [vmem:[#allocation2 + $0x68] sm:$0xff] %vm1069, %v1056
        %1084 = vst.msk [vmem:[#allocation2 + $0x70] sm:$0xff] %vm1069, %v1061
        %1085 = vst.msk [vmem:[#allocation2 + $0x78] sm:$0xff] %vm1069, %v1066
        %v1086 = vld [vmem:[%s744] sm:$0xff]
        %v1087 = vld [vmem:[%s744 + $0x8] sm:$0xff]
        %v1088 = vld [vmem:[%s744 + $0x10] sm:$0xff]
        %v1089 = vld [vmem:[%s744 + $0x18] sm:$0xff]
        %v1090 = vld [vmem:[%s744 + $0x20] sm:$0xff]
        %v1091 = vld [vmem:[%s744 + $0x28] sm:$0xff]
        %v1092 = vld [vmem:[%s744 + $0x30] sm:$0xff]
        %v1093 = vld [vmem:[%s744 + $0x38] sm:$0xff]
        %v1094 = vld [vmem:[%s744 + $0x40] sm:$0xff]
        %v1095 = vld [vmem:[%s744 + $0x48] sm:$0xff]
        %v1096 = vld [vmem:[%s744 + $0x50] sm:$0xff]
        %v1097 = vld [vmem:[%s744 + $0x58] sm:$0xff]
        %v1098 = vld [vmem:[%s744 + $0x60] sm:$0xff]
        %v1099 = vld [vmem:[%s744 + $0x68] sm:$0xff]
        %v1100 = vld [vmem:[%s744 + $0x70] sm:$0xff]
        %v1101 = vld [vmem:[%s744 + $0x78] sm:$0xff]
        %v1102 = vld [vmem:[%s6] sm:$0x7]
        %v1103 = vld [vmem:[%s8] sm:$0x1]
        %v1105 = vlaneseq
        %v1106 = vshrl.u32 %v1105, 7
        %v1107 = vsub.s32 0, %v1106
        %v1108 = vrot.slane %v1103, %v1107
        %vm1110 = vcmask 23552
        %v1112 = vsel %vm1110, %v1086, 0
        %v1115 = vsel %vm1110, %v1087, 0
        %v1118 = vsel %vm1110, %v1088, 0
        %v1121 = vsel %vm1110, %v1089, 0
        %v1124 = vsel %vm1110, %v1090, 0
        %v1127 = vsel %vm1110, %v1091, 0
        %v1130 = vsel %vm1110, %v1092, 0
        %v1133 = vsel %vm1110, %v1093, 0
        %v1136 = vsel %vm1110, %v1094, 0
        %v1139 = vsel %vm1110, %v1095, 0
        %v1142 = vsel %vm1110, %v1096, 0
        %v1145 = vsel %vm1110, %v1097, 0
        %v1148 = vsel %vm1110, %v1098, 0
        %v1151 = vsel %vm1110, %v1099, 0
        %v1154 = vsel %vm1110, %v1100, 0
        %v1157 = vsel %vm1110, %v1101, 0
        %vm1159 = vcmask 1042432
        %v1161 = vsel %vm1159, %v1102, 0
        %1163 = vmatprep.subr.mxu0 0.0
        %1164 = vmatpush1.msra.mxu0 %v1161
        %1165 = vmatprep.subr.mxu0 0.0
        %1166 = vmatpush1.msra.mxu0 0.0
        %1167 = vmatprep.subr.mxu0 0.0
        %1168 = vmatpush1.msra.mxu0 0.0
        %1169 = vmatprep.subr.mxu0 0.0
        %1170 = vmatpush1.msra.mxu0 0.0
        %1171 = vmatprep.subr.mxu0 0.0
        %1172 = vmatpush1.msra.mxu0 0.0
        %1173 = vmatprep.subr.mxu0 0.0
        %1174 = vmatpush1.msra.mxu0 0.0
        %1175 = vmatprep.subr.mxu0 0.0
        %1176 = vmatpush1.msra.mxu0 0.0
        %1177 = vmatprep.subr.mxu0 0.0
        %1178 = vmatpush1.msra.mxu0 0.0
        %1179 = vmatprep.subr.mxu0 0.0
        %1180 = vmatpush1.msra.mxu0 0.0
        %1181 = vmatprep.subr.mxu0 0.0
        %1182 = vmatpush1.msra.mxu0 0.0
        %1183 = vmatprep.subr.mxu0 0.0
        %1184 = vmatpush1.msra.mxu0 0.0
        %1185 = vmatprep.subr.mxu0 0.0
        %1186 = vmatpush1.msra.mxu0 0.0
        %1187 = vmatprep.subr.mxu0 0.0
        %1188 = vmatpush1.msra.mxu0 0.0
        %1189 = vmatprep.subr.mxu0 0.0
        %1190 = vmatpush1.msra.mxu0 0.0
        %1191 = vmatprep.subr.mxu0 0.0
        %1192 = vmatpush1.msra.mxu0 0.0
        %1193 = vmatprep.subr.mxu0 0.0
        %1194 = vmatpush1.msra.mxu0 0.0
        %1195 = vmatprep.subr.mxu0 0.0
        %1196 = vmatpush1.msra.mxu0 0.0
        %1197 = vmatprep.subr.mxu0 0.0
        %1198 = vmatpush1.msra.mxu0 0.0
        %1199 = vmatprep.subr.mxu0 0.0
        %1200 = vmatpush1.msra.mxu0 0.0
        %1201 = vmatprep.subr.mxu0 0.0
        %1202 = vmatpush1.msra.mxu0 0.0
        %1203 = vmatprep.subr.mxu0 0.0
        %1204 = vmatpush1.msra.mxu0 0.0
        %1205 = vmatprep.subr.mxu0 0.0
        %1206 = vmatpush1.msra.mxu0 0.0
        %1207 = vmatprep.subr.mxu0 0.0
        %1208 = vmatpush1.msra.mxu0 0.0
        %1209 = vmatprep.subr.mxu0 0.0
        %1210 = vmatpush1.msra.mxu0 0.0
        %1211 = vmatprep.subr.mxu0 0.0
        %1212 = vmatpush1.msra.mxu0 0.0
        %1213 = vmatprep.subr.mxu0 0.0
        %1214 = vmatpush1.msra.mxu0 0.0
        %1215 = vmatprep.subr.mxu0 0.0
        %1216 = vmatpush1.msra.mxu0 0.0
        %1217 = vmatprep.subr.mxu0 0.0
        %1218 = vmatpush1.msra.mxu0 0.0
        %1219 = vmatprep.subr.mxu0 0.0
        %1220 = vmatpush1.msra.mxu0 0.0
        %1221 = vmatprep.subr.mxu0 0.0
        %1222 = vmatpush1.msra.mxu0 0.0
        %1223 = vmatprep.subr.mxu0 0.0
        %1224 = vmatpush1.msra.mxu0 0.0
        %1225 = vmatprep.subr.mxu0 0.0
        %1226 = vmatpush1.msra.mxu0 0.0
        %1227 = vmatprep.mubr.f32.mxu0 0.0
        %1228 = vmatmul.mubr.f32.gmra.mrb[0].mxu0 %v1112
        %v1229 = vpop.f32.mrb[0].mxu0
        %v1230 = vadd.f32 %v1108, %v1229
        %v1231 = vpop.f32.mrb[0].mxu0
        %1232 = vmatprep.mubr.f32.mxu0 0.0
        %1233 = vmatmul.mubr.f32.gmra.mrb[0].mxu0 %v1115
        %v1234 = vpop.f32.mrb[0].mxu0
        %v1235 = vadd.f32 %v1108, %v1234
        %v1236 = vpop.f32.mrb[0].mxu0
        %1237 = vmatprep.mubr.f32.mxu0 0.0
        %1238 = vmatmul.mubr.f32.gmra.mrb[0].mxu0 %v1118
        %v1239 = vpop.f32.mrb[0].mxu0
        %v1240 = vadd.f32 %v1108, %v1239
        %v1241 = vpop.f32.mrb[0].mxu0
        %1242 = vmatprep.mubr.f32.mxu0 0.0
        %1243 = vmatmul.mubr.f32.gmra.mrb[0].mxu0 %v1121
        %v1244 = vpop.f32.mrb[0].mxu0
        %v1245 = vadd.f32 %v1108, %v1244
        %v1246 = vpop.f32.mrb[0].mxu0
        %1247 = vmatprep.mubr.f32.mxu0 0.0
        %1248 = vmatmul.mubr.f32.gmra.mrb[0].mxu0 %v1124
        %v1249 = vpop.f32.mrb[0].mxu0
        %v1250 = vadd.f32 %v1108, %v1249
        %v1251 = vpop.f32.mrb[0].mxu0
        %1252 = vmatprep.mubr.f32.mxu0 0.0
        %1253 = vmatmul.mubr.f32.gmra.mrb[0].mxu0 %v1127
        %v1254 = vpop.f32.mrb[0].mxu0
        %v1255 = vadd.f32 %v1108, %v1254
        %v1256 = vpop.f32.mrb[0].mxu0
        %1257 = vmatprep.mubr.f32.mxu0 0.0
        %1258 = vmatmul.mubr.f32.gmra.mrb[0].mxu0 %v1130
        %v1259 = vpop.f32.mrb[0].mxu0
        %v1260 = vadd.f32 %v1108, %v1259
        %v1261 = vpop.f32.mrb[0].mxu0
        %1262 = vmatprep.mubr.f32.mxu0 0.0
        %1263 = vmatmul.mubr.f32.gmra.mrb[0].mxu0 %v1133
        %v1264 = vpop.f32.mrb[0].mxu0
        %v1265 = vadd.f32 %v1108, %v1264
        %v1266 = vpop.f32.mrb[0].mxu0
        %1267 = vmatprep.mubr.f32.mxu0 0.0
        %1268 = vmatmul.mubr.f32.gmra.mrb[0].mxu0 %v1136
        %v1269 = vpop.f32.mrb[0].mxu0
        %v1270 = vadd.f32 %v1108, %v1269
        %v1271 = vpop.f32.mrb[0].mxu0
        %1272 = vmatprep.mubr.f32.mxu0 0.0
        %1273 = vmatmul.mubr.f32.gmra.mrb[0].mxu0 %v1139
        %v1274 = vpop.f32.mrb[0].mxu0
        %v1275 = vadd.f32 %v1108, %v1274
        %v1276 = vpop.f32.mrb[0].mxu0
        %1277 = vmatprep.mubr.f32.mxu0 0.0
        %1278 = vmatmul.mubr.f32.gmra.mrb[0].mxu0 %v1142
        %v1279 = vpop.f32.mrb[0].mxu0
        %v1280 = vadd.f32 %v1108, %v1279
        %v1281 = vpop.f32.mrb[0].mxu0
        %1282 = vmatprep.mubr.f32.mxu0 0.0
        %1283 = vmatmul.mubr.f32.gmra.mrb[0].mxu0 %v1145
        %v1284 = vpop.f32.mrb[0].mxu0
        %v1285 = vadd.f32 %v1108, %v1284
        %v1286 = vpop.f32.mrb[0].mxu0
        %1287 = vmatprep.mubr.f32.mxu0 0.0
        %1288 = vmatmul.mubr.f32.gmra.mrb[0].mxu0 %v1148
        %v1289 = vpop.f32.mrb[0].mxu0
        %v1290 = vadd.f32 %v1108, %v1289
        %v1291 = vpop.f32.mrb[0].mxu0
        %1292 = vmatprep.mubr.f32.mxu0 0.0
        %1293 = vmatmul.mubr.f32.gmra.mrb[0].mxu0 %v1151
        %v1294 = vpop.f32.mrb[0].mxu0
        %v1295 = vadd.f32 %v1108, %v1294
        %v1296 = vpop.f32.mrb[0].mxu0
        %1297 = vmatprep.mubr.f32.mxu0 0.0
        %1298 = vmatmul.mubr.f32.gmra.mrb[0].mxu0 %v1154
        %v1299 = vpop.f32.mrb[0].mxu0
        %v1300 = vadd.f32 %v1108, %v1299
        %v1301 = vpop.f32.mrb[0].mxu0
        %1302 = vmatprep.mubr.f32.mxu0 0.0
        %1303 = vmatmul.mubr.f32.gmra.mrb[0].mxu0 %v1157
        %v1304 = vpop.f32.mrb[0].mxu0
        %v1305 = vadd.f32 %v1108, %v1304
        %v1306 = vpop.f32.mrb[0].mxu0
        %1307 = vdwg.mxu0
        %1308 = vst.msk [vmem:[#allocation3] sm:$0xff] %vm1069, %v1230
        %1309 = vst.msk [vmem:[#allocation3 + $0x8] sm:$0xff] %vm1069, %v1235
        %1310 = vst.msk [vmem:[#allocation3 + $0x10] sm:$0xff] %vm1069, %v1240
        %1311 = vst.msk [vmem:[#allocation3 + $0x18] sm:$0xff] %vm1069, %v1245
        %1312 = vst.msk [vmem:[#allocation3 + $0x20] sm:$0xff] %vm1069, %v1250
        %1313 = vst.msk [vmem:[#allocation3 + $0x28] sm:$0xff] %vm1069, %v1255
        %1314 = vst.msk [vmem:[#allocation3 + $0x30] sm:$0xff] %vm1069, %v1260
        %1315 = vst.msk [vmem:[#allocation3 + $0x38] sm:$0xff] %vm1069, %v1265
        %1316 = vst.msk [vmem:[#allocation3 + $0x40] sm:$0xff] %vm1069, %v1270
        %1317 = vst.msk [vmem:[#allocation3 + $0x48] sm:$0xff] %vm1069, %v1275
        %1318 = vst.msk [vmem:[#allocation3 + $0x50] sm:$0xff] %vm1069, %v1280
        %1319 = vst.msk [vmem:[#allocation3 + $0x58] sm:$0xff] %vm1069, %v1285
        %1320 = vst.msk [vmem:[#allocation3 + $0x60] sm:$0xff] %vm1069, %v1290
        %1321 = vst.msk [vmem:[#allocation3 + $0x68] sm:$0xff] %vm1069, %v1295
        %1322 = vst.msk [vmem:[#allocation3 + $0x70] sm:$0xff] %vm1069, %v1300
        %1323 = vst.msk [vmem:[#allocation3 + $0x78] sm:$0xff] %vm1069, %v1305
        %v1324 = vld [vmem:[%s4] sm:$0xff]
        %v1325 = vld [vmem:[%s4 + $0x8] sm:$0xff]
        %v1326 = vld [vmem:[%s4 + $0x10] sm:$0xff]
        %v1327 = vld [vmem:[%s4 + $0x18] sm:$0xff]
        %v1328 = vld [vmem:[%s7] sm:$0xff]
        %v1329 = vld [vmem:[%s7 + $0x8] sm:$0xff]
        %v1330 = vld [vmem:[%s7 + $0x10] sm:$0xff]
        %v1331 = vld [vmem:[%s7 + $0x18] sm:$0xff]
        %v1332 = vld [vmem:[#allocation2] sm:$0xff]
        %v1333 = vld [vmem:[#allocation2 + $0x8] sm:$0xff]
        %v1335 = vsel %vm1069, 0.0, 0
        %1337 = vmatprep.subr.mxu0 0.0
        %1338 = vmatpush1.msra.mxu0 %v1324
        %1339 = vmatprep.subr.mxu0 0.0
        %1340 = vmatpush1.msra.mxu0 %v1325
        %1341 = vmatprep.subr.mxu0 0.0
        %1342 = vmatpush1.msra.mxu0 %v1326
        %1343 = vmatprep.subr.mxu0 0.0
        %1344 = vmatpush1.msra.mxu0 %v1327
        %1345 = vmatprep.subr.mxu0 0.0
        %1346 = vmatpush1.msra.mxu0 0.0
        %1347 = vmatprep.subr.mxu0 0.0
        %1348 = vmatpush1.msra.mxu0 0.0
        %1349 = vmatprep.subr.mxu0 0.0
        %1350 = vmatpush1.msra.mxu0 0.0
        %1351 = vmatprep.subr.mxu0 0.0
        %1352 = vmatpush1.msra.mxu0 0.0
        %1353 = vmatprep.subr.mxu0 0.0
        %1354 = vmatpush1.msra.mxu0 0.0
        %1355 = vmatprep.subr.mxu0 0.0
        %1356 = vmatpush1.msra.mxu0 0.0
        %1357 = vmatprep.subr.mxu0 0.0
        %1358 = vmatpush1.msra.mxu0 0.0
        %1359 = vmatprep.subr.mxu0 0.0
        %1360 = vmatpush1.msra.mxu0 0.0
        %1361 = vmatprep.subr.mxu0 0.0
        %1362 = vmatpush1.msra.mxu0 0.0
        %1363 = vmatprep.subr.mxu0 0.0
        %1364 = vmatpush1.msra.mxu0 0.0
        %1365 = vmatprep.subr.mxu0 0.0
        %1366 = vmatpush1.msra.mxu0 0.0
        %1367 = vmatprep.subr.mxu0 0.0
        %1368 = vmatpush1.msra.mxu0 0.0
        %1369 = vmatprep.subr.mxu0 0.0
        %1370 = vmatpush1.msra.mxu0 0.0
        %1371 = vmatprep.subr.mxu0 0.0
        %1372 = vmatpush1.msra.mxu0 0.0
        %1373 = vmatprep.subr.mxu0 0.0
        %1374 = vmatpush1.msra.mxu0 0.0
        %1375 = vmatprep.subr.mxu0 0.0
        %1376 = vmatpush1.msra.mxu0 0.0
        %1377 = vmatprep.subr.mxu0 0.0
        %1378 = vmatpush1.msra.mxu0 0.0
        %1379 = vmatprep.subr.mxu0 0.0
        %1380 = vmatpush1.msra.mxu0 0.0
        %1381 = vmatprep.subr.mxu0 0.0
        %1382 = vmatpush1.msra.mxu0 0.0
        %1383 = vmatprep.subr.mxu0 0.0
        %1384 = vmatpush1.msra.mxu0 0.0
        %1385 = vmatprep.subr.mxu0 0.0
        %1386 = vmatpush1.msra.mxu0 0.0
        %1387 = vmatprep.subr.mxu0 0.0
        %1388 = vmatpush1.msra.mxu0 0.0
        %1389 = vmatprep.subr.mxu0 0.0
        %1390 = vmatpush1.msra.mxu0 0.0
        %1391 = vmatprep.subr.mxu0 0.0
        %1392 = vmatpush1.msra.mxu0 0.0
        %1393 = vmatprep.subr.mxu0 0.0
        %1394 = vmatpush1.msra.mxu0 0.0
        %1395 = vmatprep.subr.mxu0 0.0
        %1396 = vmatpush1.msra.mxu0 0.0
        %1397 = vmatprep.subr.mxu0 0.0
        %1398 = vmatpush1.msra.mxu0 0.0
        %1399 = vmatprep.subr.mxu0 0.0
        %1400 = vmatpush1.msra.mxu0 0.0
        %1401 = vmatprep.mubr.f32.mxu0 0.0
        %1402 = vmatmul.mubr.f32.gmra.mrb[0].mxu0 %v1335
        %v1403 = vpop.f32.mrb[0].mxu0
        %v1404 = vadd.f32 0.0, %v1403
        %v1405 = vpop.f32.mrb[0].mxu0
        %1406 = vdwg.mxu0
        %v1407 = vadd.f32 %v1332, %v1404
        %v1408 = vtanh.pop %v1407
        %vm1409 = vcmp.gt.s32.totalorder %v845, 0
        %v1410 = vsel %vm1409, 1, 0
        %1411 = vset.pattern.permute.xlu0 0
        %1412 = vperm.xlu0 %1411, %v1410
        %v1413 = vpop.permute.xlu0 %1412
        %vm1414 = vcmp.eq.s32.totalorder %v1413, 1
        %v1415 = vsel %vm1414, %v1408, 0.0
        %v1416 = vadd.f32 %v1333, %v1404
        %v1417 = vtanh.pop %v1416
        %vm1418 = vcmp.gt.s32.totalorder %v846, 0
        %v1419 = vsel %vm1418, 1, 0
        %1420 = vset.pattern.permute.xlu0 0
        %1421 = vperm.xlu0 %1420, %v1419
        %v1422 = vpop.permute.xlu0 %1421
        %vm1423 = vcmp.eq.s32.totalorder %v1422, 1
        %v1424 = vsel %vm1423, %v1417, 0.0
        %s1425 = scalar_lea.vmem [#allocation2], 16
        %v1426 = vld [vmem:[%s1425] sm:$0xff]
        %v1427 = vld [vmem:[%s1425 + $0x8] sm:$0xff]
        %v1429 = vsel %vm1069, %v1415, 0
        %1431 = vmatprep.subr.mxu0 0.0
        %1432 = vmatpush1.msra.mxu0 %v1324
        %1433 = vmatprep.subr.mxu0 0.0
        %1434 = vmatpush1.msra.mxu0 %v1325
        %1435 = vmatprep.subr.mxu0 0.0
        %1436 = vmatpush1.msra.mxu0 %v1326
        %1437 = vmatprep.subr.mxu0 0.0
        %1438 = vmatpush1.msra.mxu0 %v1327
        %1439 = vmatprep.subr.mxu0 0.0
        %1440 = vmatpush1.msra.mxu0 0.0
        %1441 = vmatprep.subr.mxu0 0.0
        %1442 = vmatpush1.msra.mxu0 0.0
        %1443 = vmatprep.subr.mxu0 0.0
        %1444 = vmatpush1.msra.mxu0 0.0
        %1445 = vmatprep.subr.mxu0 0.0
        %1446 = vmatpush1.msra.mxu0 0.0
        %1447 = vmatprep.subr.mxu0 0.0
        %1448 = vmatpush1.msra.mxu0 0.0
        %1449 = vmatprep.subr.mxu0 0.0
        %1450 = vmatpush1.msra.mxu0 0.0
        %1451 = vmatprep.subr.mxu0 0.0
        %1452 = vmatpush1.msra.mxu0 0.0
        %1453 = vmatprep.subr.mxu0 0.0
        %1454 = vmatpush1.msra.mxu0 0.0
        %1455 = vmatprep.subr.mxu0 0.0
        %1456 = vmatpush1.msra.mxu0 0.0
        %1457 = vmatprep.subr.mxu0 0.0
        %1458 = vmatpush1.msra.mxu0 0.0
        %1459 = vmatprep.subr.mxu0 0.0
        %1460 = vmatpush1.msra.mxu0 0.0
        %1461 = vmatprep.subr.mxu0 0.0
        %1462 = vmatpush1.msra.mxu0 0.0
        %1463 = vmatprep.subr.mxu0 0.0
        %1464 = vmatpush1.msra.mxu0 0.0
        %1465 = vmatprep.subr.mxu0 0.0
        %1466 = vmatpush1.msra.mxu0 0.0
        %1467 = vmatprep.subr.mxu0 0.0
        %1468 = vmatpush1.msra.mxu0 0.0
        %1469 = vmatprep.subr.mxu0 0.0
        %1470 = vmatpush1.msra.mxu0 0.0
        %1471 = vmatprep.subr.mxu0 0.0
        %1472 = vmatpush1.msra.mxu0 0.0
        %1473 = vmatprep.subr.mxu0 0.0
        %1474 = vmatpush1.msra.mxu0 0.0
        %1475 = vmatprep.subr.mxu0 0.0
        %1476 = vmatpush1.msra.mxu0 0.0
        %1477 = vmatprep.subr.mxu0 0.0
        %1478 = vmatpush1.msra.mxu0 0.0
        %1479 = vmatprep.subr.mxu0 0.0
        %1480 = vmatpush1.msra.mxu0 0.0
        %1481 = vmatprep.subr.mxu0 0.0
        %1482 = vmatpush1.msra.mxu0 0.0
        %1483 = vmatprep.subr.mxu0 0.0
        %1484 = vmatpush1.msra.mxu0 0.0
        %1485 = vmatprep.subr.mxu0 0.0
        %1486 = vmatpush1.msra.mxu0 0.0
        %1487 = vmatprep.subr.mxu0 0.0
        %1488 = vmatpush1.msra.mxu0 0.0
        %1489 = vmatprep.subr.mxu0 0.0
        %1490 = vmatpush1.msra.mxu0 0.0
        %1491 = vmatprep.subr.mxu0 0.0
        %1492 = vmatpush1.msra.mxu0 0.0
        %1493 = vmatprep.subr.mxu0 0.0
        %1494 = vmatpush1.msra.mxu0 0.0
        %1495 = vmatprep.mubr.f32.mxu0 0.0
        %1496 = vmatmul.mubr.f32.gmra.mrb[0].mxu0 %v1429
        %v1497 = vpop.f32.mrb[0].mxu0
        %v1498 = vadd.f32 0.0, %v1497
        %v1499 = vpop.f32.mrb[0].mxu0
        %1500 = vdwg.mxu0
        %v1501 = vadd.f32 %v1426, %v1498
        %v1502 = vtanh.pop %v1501
        %vm1503 = vcmp.gt.s32.totalorder %v845, 1
        %v1504 = vsel %vm1503, 1, 0
        %1505 = vset.pattern.permute.xlu0 0
        %1506 = vperm.xlu0 %1505, %v1504
        %v1507 = vpop.permute.xlu0 %1506
        %vm1508 = vcmp.eq.s32.totalorder %v1507, 1
        %v1509 = vsel %vm1508, %v1502, %v1415
        %v1511 = vsel %vm1069, %v1424, 0
        %1513 = vmatprep.subr.mxu0 0.0
        %1514 = vmatpush1.msra.mxu0 %v1324
        %1515 = vmatprep.subr.mxu0 0.0
        %1516 = vmatpush1.msra.mxu0 %v1325
        %1517 = vmatprep.subr.mxu0 0.0
        %1518 = vmatpush1.msra.mxu0 %v1326
        %1519 = vmatprep.subr.mxu0 0.0
        %1520 = vmatpush1.msra.mxu0 %v1327
        %1521 = vmatprep.subr.mxu0 0.0
        %1522 = vmatpush1.msra.mxu0 0.0
        %1523 = vmatprep.subr.mxu0 0.0
        %1524 = vmatpush1.msra.mxu0 0.0
        %1525 = vmatprep.subr.mxu0 0.0
        %1526 = vmatpush1.msra.mxu0 0.0
        %1527 = vmatprep.subr.mxu0 0.0
        %1528 = vmatpush1.msra.mxu0 0.0
        %1529 = vmatprep.subr.mxu0 0.0
        %1530 = vmatpush1.msra.mxu0 0.0
        %1531 = vmatprep.subr.mxu0 0.0
        %1532 = vmatpush1.msra.mxu0 0.0
        %1533 = vmatprep.subr.mxu0 0.0
        %1534 = vmatpush1.msra.mxu0 0.0
        %1535 = vmatprep.subr.mxu0 0.0
        %1536 = vmatpush1.msra.mxu0 0.0
        %1537 = vmatprep.subr.mxu0 0.0
        %1538 = vmatpush1.msra.mxu0 0.0
        %1539 = vmatprep.subr.mxu0 0.0
        %1540 = vmatpush1.msra.mxu0 0.0
        %1541 = vmatprep.subr.mxu0 0.0
        %1542 = vmatpush1.msra.mxu0 0.0
        %1543 = vmatprep.subr.mxu0 0.0
        %1544 = vmatpush1.msra.mxu0 0.0
        %1545 = vmatprep.subr.mxu0 0.0
        %1546 = vmatpush1.msra.mxu0 0.0
        %1547 = vmatprep.subr.mxu0 0.0
        %1548 = vmatpush1.msra.mxu0 0.0
        %1549 = vmatprep.subr.mxu0 0.0
        %1550 = vmatpush1.msra.mxu0 0.0
        %1551 = vmatprep.subr.mxu0 0.0
        %1552 = vmatpush1.msra.mxu0 0.0
        %1553 = vmatprep.subr.mxu0 0.0
        %1554 = vmatpush1.msra.mxu0 0.0
        %1555 = vmatprep.subr.mxu0 0.0
        %1556 = vmatpush1.msra.mxu0 0.0
        %1557 = vmatprep.subr.mxu0 0.0
        %1558 = vmatpush1.msra.mxu0 0.0
        %1559 = vmatprep.subr.mxu0 0.0
        %1560 = vmatpush1.msra.mxu0 0.0
        %1561 = vmatprep.subr.mxu0 0.0
        %1562 = vmatpush1.msra.mxu0 0.0
        %1563 = vmatprep.subr.mxu0 0.0
        %1564 = vmatpush1.msra.mxu0 0.0
        %1565 = vmatprep.subr.mxu0 0.0
        %1566 = vmatpush1.msra.mxu0 0.0
        %1567 = vmatprep.subr.mxu0 0.0
        %1568 = vmatpush1.msra.mxu0 0.0
        %1569 = vmatprep.subr.mxu0 0.0
        %1570 = vmatpush1.msra.mxu0 0.0
        %1571 = vmatprep.subr.mxu0 0.0
        %1572 = vmatpush1.msra.mxu0 0.0
        %1573 = vmatprep.subr.mxu0 0.0
        %1574 = vmatpush1.msra.mxu0 0.0
        %1575 = vmatprep.subr.mxu0 0.0
        %1576 = vmatpush1.msra.mxu0 0.0
        %1577 = vmatprep.mubr.f32.mxu0 0.0
        %1578 = vmatmul.mubr.f32.gmra.mrb[0].mxu0 %v1511
        %v1579 = vpop.f32.mrb[0].mxu0
        %v1580 = vadd.f32 0.0, %v1579
        %v1581 = vpop.f32.mrb[0].mxu0
        %1582 = vdwg.mxu0
        %v1583 = vadd.f32 %v1427, %v1580
        %v1584 = vtanh.pop %v1583
        %vm1585 = vcmp.gt.s32.totalorder %v846, 1
        %v1586 = vsel %vm1585, 1, 0
        %1587 = vset.pattern.permute.xlu0 0
        %1588 = vperm.xlu0 %1587, %v1586
        %v1589 = vpop.permute.xlu0 %1588
        %vm1590 = vcmp.eq.s32.totalorder %v1589, 1
        %v1591 = vsel %vm1590, %v1584, %v1424
        %s1592 = scalar_lea.vmem [#allocation2], 32
        %v1593 = vld [vmem:[%s1592] sm:$0xff]
        %v1594 = vld [vmem:[%s1592 + $0x8] sm:$0xff]
        %v1596 = vsel %vm1069, %v1509, 0
        %1598 = vmatprep.subr.mxu0 0.0
        %1599 = vmatpush1.msra.mxu0 %v1324
        %1600 = vmatprep.subr.mxu0 0.0
        %1601 = vmatpush1.msra.mxu0 %v1325
        %1602 = vmatprep.subr.mxu0 0.0
        %1603 = vmatpush1.msra.mxu0 %v1326
        %1604 = vmatprep.subr.mxu0 0.0
        %1605 = vmatpush1.msra.mxu0 %v1327
        %1606 = vmatprep.subr.mxu0 0.0
        %1607 = vmatpush1.msra.mxu0 0.0
        %1608 = vmatprep.subr.mxu0 0.0
        %1609 = vmatpush1.msra.mxu0 0.0
        %1610 = vmatprep.subr.mxu0 0.0
        %1611 = vmatpush1.msra.mxu0 0.0
        %1612 = vmatprep.subr.mxu0 0.0
        %1613 = vmatpush1.msra.mxu0 0.0
        %1614 = vmatprep.subr.mxu0 0.0
        %1615 = vmatpush1.msra.mxu0 0.0
        %1616 = vmatprep.subr.mxu0 0.0
        %1617 = vmatpush1.msra.mxu0 0.0
        %1618 = vmatprep.subr.mxu0 0.0
        %1619 = vmatpush1.msra.mxu0 0.0
        %1620 = vmatprep.subr.mxu0 0.0
        %1621 = vmatpush1.msra.mxu0 0.0
        %1622 = vmatprep.subr.mxu0 0.0
        %1623 = vmatpush1.msra.mxu0 0.0
        %1624 = vmatprep.subr.mxu0 0.0
        %1625 = vmatpush1.msra.mxu0 0.0
        %1626 = vmatprep.subr.mxu0 0.0
        %1627 = vmatpush1.msra.mxu0 0.0
        %1628 = vmatprep.subr.mxu0 0.0
        %1629 = vmatpush1.msra.mxu0 0.0
        %1630 = vmatprep.subr.mxu0 0.0
        %1631 = vmatpush1.msra.mxu0 0.0
        %1632 = vmatprep.subr.mxu0 0.0
        %1633 = vmatpush1.msra.mxu0 0.0
        %1634 = vmatprep.subr.mxu0 0.0
        %1635 = vmatpush1.msra.mxu0 0.0
        %1636 = vmatprep.subr.mxu0 0.0
        %1637 = vmatpush1.msra.mxu0 0.0
        %1638 = vmatprep.subr.mxu0 0.0
        %1639 = vmatpush1.msra.mxu0 0.0
        %1640 = vmatprep.subr.mxu0 0.0
        %1641 = vmatpush1.msra.mxu0 0.0
        %1642 = vmatprep.subr.mxu0 0.0
        %1643 = vmatpush1.msra.mxu0 0.0
        %1644 = vmatprep.subr.mxu0 0.0
        %1645 = vmatpush1.msra.mxu0 0.0
        %1646 = vmatprep.subr.mxu0 0.0
        %1647 = vmatpush1.msra.mxu0 0.0
        %1648 = vmatprep.subr.mxu0 0.0
        %1649 = vmatpush1.msra.mxu0 0.0
        %1650 = vmatprep.subr.mxu0 0.0
        %1651 = vmatpush1.msra.mxu0 0.0
        %1652 = vmatprep.subr.mxu0 0.0
        %1653 = vmatpush1.msra.mxu0 0.0
        %1654 = vmatprep.subr.mxu0 0.0
        %1655 = vmatpush1.msra.mxu0 0.0
        %1656 = vmatprep.subr.mxu0 0.0
        %1657 = vmatpush1.msra.mxu0 0.0
        %1658 = vmatprep.subr.mxu0 0.0
        %1659 = vmatpush1.msra.mxu0 0.0
        %1660 = vmatprep.subr.mxu0 0.0
        %1661 = vmatpush1.msra.mxu0 0.0
        %1662 = vmatprep.mubr.f32.mxu0 0.0
        %1663 = vmatmul.mubr.f32.gmra.mrb[0].mxu0 %v1596
        %v1664 = vpop.f32.mrb[0].mxu0
        %v1665 = vadd.f32 0.0, %v1664
        %v1666 = vpop.f32.mrb[0].mxu0
        %1667 = vdwg.mxu0
        %v1668 = vadd.f32 %v1593, %v1665
        %v1669 = vtanh.pop %v1668
        %vm1670 = vcmp.gt.s32.totalorder %v845, 2
        %v1671 = vsel %vm1670, 1, 0
        %1672 = vset.pattern.permute.xlu0 0
        %1673 = vperm.xlu0 %1672, %v1671
        %v1674 = vpop.permute.xlu0 %1673
        %vm1675 = vcmp.eq.s32.totalorder %v1674, 1
        %v1676 = vsel %vm1675, %v1669, %v1509
        %v1678 = vsel %vm1069, %v1591, 0
        %1680 = vmatprep.subr.mxu0 0.0
        %1681 = vmatpush1.msra.mxu0 %v1324
        %1682 = vmatprep.subr.mxu0 0.0
        %1683 = vmatpush1.msra.mxu0 %v1325
        %1684 = vmatprep.subr.mxu0 0.0
        %1685 = vmatpush1.msra.mxu0 %v1326
        %1686 = vmatprep.subr.mxu0 0.0
        %1687 = vmatpush1.msra.mxu0 %v1327
        %1688 = vmatprep.subr.mxu0 0.0
        %1689 = vmatpush1.msra.mxu0 0.0
        %1690 = vmatprep.subr.mxu0 0.0
        %1691 = vmatpush1.msra.mxu0 0.0
        %1692 = vmatprep.subr.mxu0 0.0
        %1693 = vmatpush1.msra.mxu0 0.0
        %1694 = vmatprep.subr.mxu0 0.0
        %1695 = vmatpush1.msra.mxu0 0.0
        %1696 = vmatprep.subr.mxu0 0.0
        %1697 = vmatpush1.msra.mxu0 0.0
        %1698 = vmatprep.subr.mxu0 0.0
        %1699 = vmatpush1.msra.mxu0 0.0
        %1700 = vmatprep.subr.mxu0 0.0
        %1701 = vmatpush1.msra.mxu0 0.0
        %1702 = vmatprep.subr.mxu0 0.0
        %1703 = vmatpush1.msra.mxu0 0.0
        %1704 = vmatprep.subr.mxu0 0.0
        %1705 = vmatpush1.msra.mxu0 0.0
        %1706 = vmatprep.subr.mxu0 0.0
        %1707 = vmatpush1.msra.mxu0 0.0
        %1708 = vmatprep.subr.mxu0 0.0
        %1709 = vmatpush1.msra.mxu0 0.0
        %1710 = vmatprep.subr.mxu0 0.0
        %1711 = vmatpush1.msra.mxu0 0.0
        %1712 = vmatprep.subr.mxu0 0.0
        %1713 = vmatpush1.msra.mxu0 0.0
        %1714 = vmatprep.subr.mxu0 0.0
        %1715 = vmatpush1.msra.mxu0 0.0
        %1716 = vmatprep.subr.mxu0 0.0
        %1717 = vmatpush1.msra.mxu0 0.0
        %1718 = vmatprep.subr.mxu0 0.0
        %1719 = vmatpush1.msra.mxu0 0.0
        %1720 = vmatprep.subr.mxu0 0.0
        %1721 = vmatpush1.msra.mxu0 0.0
        %1722 = vmatprep.subr.mxu0 0.0
        %1723 = vmatpush1.msra.mxu0 0.0
        %1724 = vmatprep.subr.mxu0 0.0
        %1725 = vmatpush1.msra.mxu0 0.0
        %1726 = vmatprep.subr.mxu0 0.0
        %1727 = vmatpush1.msra.mxu0 0.0
        %1728 = vmatprep.subr.mxu0 0.0
        %1729 = vmatpush1.msra.mxu0 0.0
        %1730 = vmatprep.subr.mxu0 0.0
        %1731 = vmatpush1.msra.mxu0 0.0
        %1732 = vmatprep.subr.mxu0 0.0
        %1733 = vmatpush1.msra.mxu0 0.0
        %1734 = vmatprep.subr.mxu0 0.0
        %1735 = vmatpush1.msra.mxu0 0.0
        %1736 = vmatprep.subr.mxu0 0.0
        %1737 = vmatpush1.msra.mxu0 0.0
        %1738 = vmatprep.subr.mxu0 0.0
        %1739 = vmatpush1.msra.mxu0 0.0
        %1740 = vmatprep.subr.mxu0 0.0
        %1741 = vmatpush1.msra.mxu0 0.0
        %1742 = vmatprep.subr.mxu0 0.0
        %1743 = vmatpush1.msra.mxu0 0.0
        %1744 = vmatprep.mubr.f32.mxu0 0.0
        %1745 = vmatmul.mubr.f32.gmra.mrb[0].mxu0 %v1678
        %v1746 = vpop.f32.mrb[0].mxu0
        %v1747 = vadd.f32 0.0, %v1746
        %v1748 = vpop.f32.mrb[0].mxu0
        %1749 = vdwg.mxu0
        %v1750 = vadd.f32 %v1594, %v1747
        %v1751 = vtanh.pop %v1750
        %vm1752 = vcmp.gt.s32.totalorder %v846, 2
        %v1753 = vsel %vm1752, 1, 0
        %1754 = vset.pattern.permute.xlu0 0
        %1755 = vperm.xlu0 %1754, %v1753
        %v1756 = vpop.permute.xlu0 %1755
        %vm1757 = vcmp.eq.s32.totalorder %v1756, 1
        %v1758 = vsel %vm1757, %v1751, %v1591
        %s1759 = scalar_lea.vmem [#allocation2], 48
        %v1760 = vld [vmem:[%s1759] sm:$0xff]
        %v1761 = vld [vmem:[%s1759 + $0x8] sm:$0xff]
        %v1763 = vsel %vm1069, %v1676, 0
        %1765 = vmatprep.subr.mxu0 0.0
        %1766 = vmatpush1.msra.mxu0 %v1324
        %1767 = vmatprep.subr.mxu0 0.0
        %1768 = vmatpush1.msra.mxu0 %v1325
        %1769 = vmatprep.subr.mxu0 0.0
        %1770 = vmatpush1.msra.mxu0 %v1326
        %1771 = vmatprep.subr.mxu0 0.0
        %1772 = vmatpush1.msra.mxu0 %v1327
        %1773 = vmatprep.subr.mxu0 0.0
        %1774 = vmatpush1.msra.mxu0 0.0
        %1775 = vmatprep.subr.mxu0 0.0
        %1776 = vmatpush1.msra.mxu0 0.0
        %1777 = vmatprep.subr.mxu0 0.0
        %1778 = vmatpush1.msra.mxu0 0.0
        %1779 = vmatprep.subr.mxu0 0.0
        %1780 = vmatpush1.msra.mxu0 0.0
        %1781 = vmatprep.subr.mxu0 0.0
        %1782 = vmatpush1.msra.mxu0 0.0
        %1783 = vmatprep.subr.mxu0 0.0
        %1784 = vmatpush1.msra.mxu0 0.0
        %1785 = vmatprep.subr.mxu0 0.0
        %1786 = vmatpush1.msra.mxu0 0.0
        %1787 = vmatprep.subr.mxu0 0.0
        %1788 = vmatpush1.msra.mxu0 0.0
        %1789 = vmatprep.subr.mxu0 0.0
        %1790 = vmatpush1.msra.mxu0 0.0
        %1791 = vmatprep.subr.mxu0 0.0
        %1792 = vmatpush1.msra.mxu0 0.0
        %1793 = vmatprep.subr.mxu0 0.0
        %1794 = vmatpush1.msra.mxu0 0.0
        %1795 = vmatprep.subr.mxu0 0.0
        %1796 = vmatpush1.msra.mxu0 0.0
        %1797 = vmatprep.subr.mxu0 0.0
        %1798 = vmatpush1.msra.mxu0 0.0
        %1799 = vmatprep.subr.mxu0 0.0
        %1800 = vmatpush1.msra.mxu0 0.0
        %1801 = vmatprep.subr.mxu0 0.0
        %1802 = vmatpush1.msra.mxu0 0.0
        %1803 = vmatprep.subr.mxu0 0.0
        %1804 = vmatpush1.msra.mxu0 0.0
        %1805 = vmatprep.subr.mxu0 0.0
        %1806 = vmatpush1.msra.mxu0 0.0
        %1807 = vmatprep.subr.mxu0 0.0
        %1808 = vmatpush1.msra.mxu0 0.0
        %1809 = vmatprep.subr.mxu0 0.0
        %1810 = vmatpush1.msra.mxu0 0.0
        %1811 = vmatprep.subr.mxu0 0.0
        %1812 = vmatpush1.msra.mxu0 0.0
        %1813 = vmatprep.subr.mxu0 0.0
        %1814 = vmatpush1.msra.mxu0 0.0
        %1815 = vmatprep.subr.mxu0 0.0
        %1816 = vmatpush1.msra.mxu0 0.0
        %1817 = vmatprep.subr.mxu0 0.0
        %1818 = vmatpush1.msra.mxu0 0.0
        %1819 = vmatprep.subr.mxu0 0.0
        %1820 = vmatpush1.msra.mxu0 0.0
        %1821 = vmatprep.subr.mxu0 0.0
        %1822 = vmatpush1.msra.mxu0 0.0
        %1823 = vmatprep.subr.mxu0 0.0
        %1824 = vmatpush1.msra.mxu0 0.0
        %1825 = vmatprep.subr.mxu0 0.0
        %1826 = vmatpush1.msra.mxu0 0.0
        %1827 = vmatprep.subr.mxu0 0.0
        %1828 = vmatpush1.msra.mxu0 0.0
        %1829 = vmatprep.mubr.f32.mxu0 0.0
        %1830 = vmatmul.mubr.f32.gmra.mrb[0].mxu0 %v1763
        %v1831 = vpop.f32.mrb[0].mxu0
        %v1832 = vadd.f32 0.0, %v1831
        %v1833 = vpop.f32.mrb[0].mxu0
        %1834 = vdwg.mxu0
        %v1835 = vadd.f32 %v1760, %v1832
        %v1836 = vtanh.pop %v1835
        %vm1837 = vcmp.gt.s32.totalorder %v845, 3
        %v1838 = vsel %vm1837, 1, 0
        %1839 = vset.pattern.permute.xlu0 0
        %1840 = vperm.xlu0 %1839, %v1838
        %v1841 = vpop.permute.xlu0 %1840
        %vm1842 = vcmp.eq.s32.totalorder %v1841, 1
        %v1843 = vsel %vm1842, %v1836, %v1676
        %v1845 = vsel %vm1069, %v1758, 0
        %1847 = vmatprep.subr.mxu0 0.0
        %1848 = vmatpush1.msra.mxu0 %v1324
        %1849 = vmatprep.subr.mxu0 0.0
        %1850 = vmatpush1.msra.mxu0 %v1325
        %1851 = vmatprep.subr.mxu0 0.0
        %1852 = vmatpush1.msra.mxu0 %v1326
        %1853 = vmatprep.subr.mxu0 0.0
        %1854 = vmatpush1.msra.mxu0 %v1327
        %1855 = vmatprep.subr.mxu0 0.0
        %1856 = vmatpush1.msra.mxu0 0.0
        %1857 = vmatprep.subr.mxu0 0.0
        %1858 = vmatpush1.msra.mxu0 0.0
        %1859 = vmatprep.subr.mxu0 0.0
        %1860 = vmatpush1.msra.mxu0 0.0
        %1861 = vmatprep.subr.mxu0 0.0
        %1862 = vmatpush1.msra.mxu0 0.0
        %1863 = vmatprep.subr.mxu0 0.0
        %1864 = vmatpush1.msra.mxu0 0.0
        %1865 = vmatprep.subr.mxu0 0.0
        %1866 = vmatpush1.msra.mxu0 0.0
        %1867 = vmatprep.subr.mxu0 0.0
        %1868 = vmatpush1.msra.mxu0 0.0
        %1869 = vmatprep.subr.mxu0 0.0
        %1870 = vmatpush1.msra.mxu0 0.0
        %1871 = vmatprep.subr.mxu0 0.0
        %1872 = vmatpush1.msra.mxu0 0.0
        %1873 = vmatprep.subr.mxu0 0.0
        %1874 = vmatpush1.msra.mxu0 0.0
        %1875 = vmatprep.subr.mxu0 0.0
        %1876 = vmatpush1.msra.mxu0 0.0
        %1877 = vmatprep.subr.mxu0 0.0
        %1878 = vmatpush1.msra.mxu0 0.0
        %1879 = vmatprep.subr.mxu0 0.0
        %1880 = vmatpush1.msra.mxu0 0.0
        %1881 = vmatprep.subr.mxu0 0.0
        %1882 = vmatpush1.msra.mxu0 0.0
        %1883 = vmatprep.subr.mxu0 0.0
        %1884 = vmatpush1.msra.mxu0 0.0
        %1885 = vmatprep.subr.mxu0 0.0
        %1886 = vmatpush1.msra.mxu0 0.0
        %1887 = vmatprep.subr.mxu0 0.0
        %1888 = vmatpush1.msra.mxu0 0.0
        %1889 = vmatprep.subr.mxu0 0.0
        %1890 = vmatpush1.msra.mxu0 0.0
        %1891 = vmatprep.subr.mxu0 0.0
        %1892 = vmatpush1.msra.mxu0 0.0
        %1893 = vmatprep.subr.mxu0 0.0
        %1894 = vmatpush1.msra.mxu0 0.0
        %1895 = vmatprep.subr.mxu0 0.0
        %1896 = vmatpush1.msra.mxu0 0.0
        %1897 = vmatprep.subr.mxu0 0.0
        %1898 = vmatpush1.msra.mxu0 0.0
        %1899 = vmatprep.subr.mxu0 0.0
        %1900 = vmatpush1.msra.mxu0 0.0
        %1901 = vmatprep.subr.mxu0 0.0
        %1902 = vmatpush1.msra.mxu0 0.0
        %1903 = vmatprep.subr.mxu0 0.0
        %1904 = vmatpush1.msra.mxu0 0.0
        %1905 = vmatprep.subr.mxu0 0.0
        %1906 = vmatpush1.msra.mxu0 0.0
        %1907 = vmatprep.subr.mxu0 0.0
        %1908 = vmatpush1.msra.mxu0 0.0
        %1909 = vmatprep.subr.mxu0 0.0
        %1910 = vmatpush1.msra.mxu0 0.0
        %1911 = vmatprep.mubr.f32.mxu0 0.0
        %1912 = vmatmul.mubr.f32.gmra.mrb[0].mxu0 %v1845
        %v1913 = vpop.f32.mrb[0].mxu0
        %v1914 = vadd.f32 0.0, %v1913
        %v1915 = vpop.f32.mrb[0].mxu0
        %1916 = vdwg.mxu0
        %v1917 = vadd.f32 %v1761, %v1914
        %v1918 = vtanh.pop %v1917
        %vm1919 = vcmp.gt.s32.totalorder %v846, 3
        %v1920 = vsel %vm1919, 1, 0
        %1921 = vset.pattern.permute.xlu0 0
        %1922 = vperm.xlu0 %1921, %v1920
        %v1923 = vpop.permute.xlu0 %1922
        %vm1924 = vcmp.eq.s32.totalorder %v1923, 1
        %v1925 = vsel %vm1924, %v1918, %v1758
        %s1926 = scalar_lea.vmem [#allocation2], 64
        %v1927 = vld [vmem:[%s1926] sm:$0xff]
        %v1928 = vld [vmem:[%s1926 + $0x8] sm:$0xff]
        %v1930 = vsel %vm1069, %v1843, 0
        %1932 = vmatprep.subr.mxu0 0.0
        %1933 = vmatpush1.msra.mxu0 %v1324
        %1934 = vmatprep.subr.mxu0 0.0
        %1935 = vmatpush1.msra.mxu0 %v1325
        %1936 = vmatprep.subr.mxu0 0.0
        %1937 = vmatpush1.msra.mxu0 %v1326
        %1938 = vmatprep.subr.mxu0 0.0
        %1939 = vmatpush1.msra.mxu0 %v1327
        %1940 = vmatprep.subr.mxu0 0.0
        %1941 = vmatpush1.msra.mxu0 0.0
        %1942 = vmatprep.subr.mxu0 0.0
        %1943 = vmatpush1.msra.mxu0 0.0
        %1944 = vmatprep.subr.mxu0 0.0
        %1945 = vmatpush1.msra.mxu0 0.0
        %1946 = vmatprep.subr.mxu0 0.0
        %1947 = vmatpush1.msra.mxu0 0.0
        %1948 = vmatprep.subr.mxu0 0.0
        %1949 = vmatpush1.msra.mxu0 0.0
        %1950 = vmatprep.subr.mxu0 0.0
        %1951 = vmatpush1.msra.mxu0 0.0
        %1952 = vmatprep.subr.mxu0 0.0
        %1953 = vmatpush1.msra.mxu0 0.0
        %1954 = vmatprep.subr.mxu0 0.0
        %1955 = vmatpush1.msra.mxu0 0.0
        %1956 = vmatprep.subr.mxu0 0.0
        %1957 = vmatpush1.msra.mxu0 0.0
        %1958 = vmatprep.subr.mxu0 0.0
        %1959 = vmatpush1.msra.mxu0 0.0
        %1960 = vmatprep.subr.mxu0 0.0
        %1961 = vmatpush1.msra.mxu0 0.0
        %1962 = vmatprep.subr.mxu0 0.0
        %1963 = vmatpush1.msra.mxu0 0.0
        %1964 = vmatprep.subr.mxu0 0.0
        %1965 = vmatpush1.msra.mxu0 0.0
        %1966 = vmatprep.subr.mxu0 0.0
        %1967 = vmatpush1.msra.mxu0 0.0
        %1968 = vmatprep.subr.mxu0 0.0
        %1969 = vmatpush1.msra.mxu0 0.0
        %1970 = vmatprep.subr.mxu0 0.0
        %1971 = vmatpush1.msra.mxu0 0.0
        %1972 = vmatprep.subr.mxu0 0.0
        %1973 = vmatpush1.msra.mxu0 0.0
        %1974 = vmatprep.subr.mxu0 0.0
        %1975 = vmatpush1.msra.mxu0 0.0
        %1976 = vmatprep.subr.mxu0 0.0
        %1977 = vmatpush1.msra.mxu0 0.0
        %1978 = vmatprep.subr.mxu0 0.0
        %1979 = vmatpush1.msra.mxu0 0.0
        %1980 = vmatprep.subr.mxu0 0.0
        %1981 = vmatpush1.msra.mxu0 0.0
        %1982 = vmatprep.subr.mxu0 0.0
        %1983 = vmatpush1.msra.mxu0 0.0
        %1984 = vmatprep.subr.mxu0 0.0
        %1985 = vmatpush1.msra.mxu0 0.0
        %1986 = vmatprep.subr.mxu0 0.0
        %1987 = vmatpush1.msra.mxu0 0.0
        %1988 = vmatprep.subr.mxu0 0.0
        %1989 = vmatpush1.msra.mxu0 0.0
        %1990 = vmatprep.subr.mxu0 0.0
        %1991 = vmatpush1.msra.mxu0 0.0
        %1992 = vmatprep.subr.mxu0 0.0
        %1993 = vmatpush1.msra.mxu0 0.0
        %1994 = vmatprep.subr.mxu0 0.0
        %1995 = vmatpush1.msra.mxu0 0.0
        %1996 = vmatprep.mubr.f32.mxu0 0.0
        %1997 = vmatmul.mubr.f32.gmra.mrb[0].mxu0 %v1930
        %v1998 = vpop.f32.mrb[0].mxu0
        %v1999 = vadd.f32 0.0, %v1998
        %v2000 = vpop.f32.mrb[0].mxu0
        %2001 = vdwg.mxu0
        %v2002 = vadd.f32 %v1927, %v1999
        %v2003 = vtanh.pop %v2002
        %vm2004 = vcmp.gt.s32.totalorder %v845, 4
        %v2005 = vsel %vm2004, 1, 0
        %2006 = vset.pattern.permute.xlu0 0
        %2007 = vperm.xlu0 %2006, %v2005
        %v2008 = vpop.permute.xlu0 %2007
        %vm2009 = vcmp.eq.s32.totalorder %v2008, 1
        %v2010 = vsel %vm2009, %v2003, %v1843
        %v2012 = vsel %vm1069, %v1925, 0
        %2014 = vmatprep.subr.mxu0 0.0
        %2015 = vmatpush1.msra.mxu0 %v1324
        %2016 = vmatprep.subr.mxu0 0.0
        %2017 = vmatpush1.msra.mxu0 %v1325
        %2018 = vmatprep.subr.mxu0 0.0
        %2019 = vmatpush1.msra.mxu0 %v1326
        %2020 = vmatprep.subr.mxu0 0.0
        %2021 = vmatpush1.msra.mxu0 %v1327
        %2022 = vmatprep.subr.mxu0 0.0
        %2023 = vmatpush1.msra.mxu0 0.0
        %2024 = vmatprep.subr.mxu0 0.0
        %2025 = vmatpush1.msra.mxu0 0.0
        %2026 = vmatprep.subr.mxu0 0.0
        %2027 = vmatpush1.msra.mxu0 0.0
        %2028 = vmatprep.subr.mxu0 0.0
        %2029 = vmatpush1.msra.mxu0 0.0
        %2030 = vmatprep.subr.mxu0 0.0
        %2031 = vmatpush1.msra.mxu0 0.0
        %2032 = vmatprep.subr.mxu0 0.0
        %2033 = vmatpush1.msra.mxu0 0.0
        %2034 = vmatprep.subr.mxu0 0.0
        %2035 = vmatpush1.msra.mxu0 0.0
        %2036 = vmatprep.subr.mxu0 0.0
        %2037 = vmatpush1.msra.mxu0 0.0
        %2038 = vmatprep.subr.mxu0 0.0
        %2039 = vmatpush1.msra.mxu0 0.0
        %2040 = vmatprep.subr.mxu0 0.0
        %2041 = vmatpush1.msra.mxu0 0.0
        %2042 = vmatprep.subr.mxu0 0.0
        %2043 = vmatpush1.msra.mxu0 0.0
        %2044 = vmatprep.subr.mxu0 0.0
        %2045 = vmatpush1.msra.mxu0 0.0
        %2046 = vmatprep.subr.mxu0 0.0
        %2047 = vmatpush1.msra.mxu0 0.0
        %2048 = vmatprep.subr.mxu0 0.0
        %2049 = vmatpush1.msra.mxu0 0.0
        %2050 = vmatprep.subr.mxu0 0.0
        %2051 = vmatpush1.msra.mxu0 0.0
        %2052 = vmatprep.subr.mxu0 0.0
        %2053 = vmatpush1.msra.mxu0 0.0
        %2054 = vmatprep.subr.mxu0 0.0
        %2055 = vmatpush1.msra.mxu0 0.0
        %2056 = vmatprep.subr.mxu0 0.0
        %2057 = vmatpush1.msra.mxu0 0.0
        %2058 = vmatprep.subr.mxu0 0.0
        %2059 = vmatpush1.msra.mxu0 0.0
        %2060 = vmatprep.subr.mxu0 0.0
        %2061 = vmatpush1.msra.mxu0 0.0
        %2062 = vmatprep.subr.mxu0 0.0
        %2063 = vmatpush1.msra.mxu0 0.0
        %2064 = vmatprep.subr.mxu0 0.0
        %2065 = vmatpush1.msra.mxu0 0.0
        %2066 = vmatprep.subr.mxu0 0.0
        %2067 = vmatpush1.msra.mxu0 0.0
        %2068 = vmatprep.subr.mxu0 0.0
        %2069 = vmatpush1.msra.mxu0 0.0
        %2070 = vmatprep.subr.mxu0 0.0
        %2071 = vmatpush1.msra.mxu0 0.0
        %2072 = vmatprep.subr.mxu0 0.0
        %2073 = vmatpush1.msra.mxu0 0.0
        %2074 = vmatprep.subr.mxu0 0.0
        %2075 = vmatpush1.msra.mxu0 0.0
        %2076 = vmatprep.subr.mxu0 0.0
        %2077 = vmatpush1.msra.mxu0 0.0
        %2078 = vmatprep.mubr.f32.mxu0 0.0
        %2079 = vmatmul.mubr.f32.gmra.mrb[0].mxu0 %v2012
        %v2080 = vpop.f32.mrb[0].mxu0
        %v2081 = vadd.f32 0.0, %v2080
        %v2082 = vpop.f32.mrb[0].mxu0
        %2083 = vdwg.mxu0
        %v2084 = vadd.f32 %v1928, %v2081
        %v2085 = vtanh.pop %v2084
        %vm2086 = vcmp.gt.s32.totalorder %v846, 4
        %v2087 = vsel %vm2086, 1, 0
        %2088 = vset.pattern.permute.xlu0 0
        %2089 = vperm.xlu0 %2088, %v2087
        %v2090 = vpop.permute.xlu0 %2089
        %vm2091 = vcmp.eq.s32.totalorder %v2090, 1
        %v2092 = vsel %vm2091, %v2085, %v1925
        %s2093 = scalar_lea.vmem [#allocation2], 80
        %v2094 = vld [vmem:[%s2093] sm:$0xff]
        %v2095 = vld [vmem:[%s2093 + $0x8] sm:$0xff]
        %v2097 = vsel %vm1069, %v2010, 0
        %2099 = vmatprep.subr.mxu0 0.0
        %2100 = vmatpush1.msra.mxu0 %v1324
        %2101 = vmatprep.subr.mxu0 0.0
        %2102 = vmatpush1.msra.mxu0 %v1325
        %2103 = vmatprep.subr.mxu0 0.0
        %2104 = vmatpush1.msra.mxu0 %v1326
        %2105 = vmatprep.subr.mxu0 0.0
        %2106 = vmatpush1.msra.mxu0 %v1327
        %2107 = vmatprep.subr.mxu0 0.0
        %2108 = vmatpush1.msra.mxu0 0.0
        %2109 = vmatprep.subr.mxu0 0.0
        %2110 = vmatpush1.msra.mxu0 0.0
        %2111 = vmatprep.subr.mxu0 0.0
        %2112 = vmatpush1.msra.mxu0 0.0
        %2113 = vmatprep.subr.mxu0 0.0
        %2114 = vmatpush1.msra.mxu0 0.0
        %2115 = vmatprep.subr.mxu0 0.0
        %2116 = vmatpush1.msra.mxu0 0.0
        %2117 = vmatprep.subr.mxu0 0.0
        %2118 = vmatpush1.msra.mxu0 0.0
        %2119 = vmatprep.subr.mxu0 0.0
        %2120 = vmatpush1.msra.mxu0 0.0
        %2121 = vmatprep.subr.mxu0 0.0
        %2122 = vmatpush1.msra.mxu0 0.0
        %2123 = vmatprep.subr.mxu0 0.0
        %2124 = vmatpush1.msra.mxu0 0.0
        %2125 = vmatprep.subr.mxu0 0.0
        %2126 = vmatpush1.msra.mxu0 0.0
        %2127 = vmatprep.subr.mxu0 0.0
        %2128 = vmatpush1.msra.mxu0 0.0
        %2129 = vmatprep.subr.mxu0 0.0
        %2130 = vmatpush1.msra.mxu0 0.0
        %2131 = vmatprep.subr.mxu0 0.0
        %2132 = vmatpush1.msra.mxu0 0.0
        %2133 = vmatprep.subr.mxu0 0.0
        %2134 = vmatpush1.msra.mxu0 0.0
        %2135 = vmatprep.subr.mxu0 0.0
        %2136 = vmatpush1.msra.mxu0 0.0
        %2137 = vmatprep.subr.mxu0 0.0
        %2138 = vmatpush1.msra.mxu0 0.0
        %2139 = vmatprep.subr.mxu0 0.0
        %2140 = vmatpush1.msra.mxu0 0.0
        %2141 = vmatprep.subr.mxu0 0.0
        %2142 = vmatpush1.msra.mxu0 0.0
        %2143 = vmatprep.subr.mxu0 0.0
        %2144 = vmatpush1.msra.mxu0 0.0
        %2145 = vmatprep.subr.mxu0 0.0
        %2146 = vmatpush1.msra.mxu0 0.0
        %2147 = vmatprep.subr.mxu0 0.0
        %2148 = vmatpush1.msra.mxu0 0.0
        %2149 = vmatprep.subr.mxu0 0.0
        %2150 = vmatpush1.msra.mxu0 0.0
        %2151 = vmatprep.subr.mxu0 0.0
        %2152 = vmatpush1.msra.mxu0 0.0
        %2153 = vmatprep.subr.mxu0 0.0
        %2154 = vmatpush1.msra.mxu0 0.0
        %2155 = vmatprep.subr.mxu0 0.0
        %2156 = vmatpush1.msra.mxu0 0.0
        %2157 = vmatprep.subr.mxu0 0.0
        %2158 = vmatpush1.msra.mxu0 0.0
        %2159 = vmatprep.subr.mxu0 0.0
        %2160 = vmatpush1.msra.mxu0 0.0
        %2161 = vmatprep.subr.mxu0 0.0
        %2162 = vmatpush1.msra.mxu0 0.0
        %2163 = vmatprep.mubr.f32.mxu0 0.0
        %2164 = vmatmul.mubr.f32.gmra.mrb[0].mxu0 %v2097
        %v2165 = vpop.f32.mrb[0].mxu0
        %v2166 = vadd.f32 0.0, %v2165
        %v2167 = vpop.f32.mrb[0].mxu0
        %2168 = vdwg.mxu0
        %v2169 = vadd.f32 %v2094, %v2166
        %v2170 = vtanh.pop %v2169
        %vm2171 = vcmp.gt.s32.totalorder %v845, 5
        %v2172 = vsel %vm2171, 1, 0
        %2173 = vset.pattern.permute.xlu0 0
        %2174 = vperm.xlu0 %2173, %v2172
        %v2175 = vpop.permute.xlu0 %2174
        %vm2176 = vcmp.eq.s32.totalorder %v2175, 1
        %v2177 = vsel %vm2176, %v2170, %v2010
        %v2179 = vsel %vm1069, %v2092, 0
        %2181 = vmatprep.subr.mxu0 0.0
        %2182 = vmatpush1.msra.mxu0 %v1324
        %2183 = vmatprep.subr.mxu0 0.0
        %2184 = vmatpush1.msra.mxu0 %v1325
        %2185 = vmatprep.subr.mxu0 0.0
        %2186 = vmatpush1.msra.mxu0 %v1326
        %2187 = vmatprep.subr.mxu0 0.0
        %2188 = vmatpush1.msra.mxu0 %v1327
        %2189 = vmatprep.subr.mxu0 0.0
        %2190 = vmatpush1.msra.mxu0 0.0
        %2191 = vmatprep.subr.mxu0 0.0
        %2192 = vmatpush1.msra.mxu0 0.0
        %2193 = vmatprep.subr.mxu0 0.0
        %2194 = vmatpush1.msra.mxu0 0.0
        %2195 = vmatprep.subr.mxu0 0.0
        %2196 = vmatpush1.msra.mxu0 0.0
        %2197 = vmatprep.subr.mxu0 0.0
        %2198 = vmatpush1.msra.mxu0 0.0
        %2199 = vmatprep.subr.mxu0 0.0
        %2200 = vmatpush1.msra.mxu0 0.0
        %2201 = vmatprep.subr.mxu0 0.0
        %2202 = vmatpush1.msra.mxu0 0.0
        %2203 = vmatprep.subr.mxu0 0.0
        %2204 = vmatpush1.msra.mxu0 0.0
        %2205 = vmatprep.subr.mxu0 0.0
        %2206 = vmatpush1.msra.mxu0 0.0
        %2207 = vmatprep.subr.mxu0 0.0
        %2208 = vmatpush1.msra.mxu0 0.0
        %2209 = vmatprep.subr.mxu0 0.0
        %2210 = vmatpush1.msra.mxu0 0.0
        %2211 = vmatprep.subr.mxu0 0.0
        %2212 = vmatpush1.msra.mxu0 0.0
        %2213 = vmatprep.subr.mxu0 0.0
        %2214 = vmatpush1.msra.mxu0 0.0
        %2215 = vmatprep.subr.mxu0 0.0
        %2216 = vmatpush1.msra.mxu0 0.0
        %2217 = vmatprep.subr.mxu0 0.0
        %2218 = vmatpush1.msra.mxu0 0.0
        %2219 = vmatprep.subr.mxu0 0.0
        %2220 = vmatpush1.msra.mxu0 0.0
        %2221 = vmatprep.subr.mxu0 0.0
        %2222 = vmatpush1.msra.mxu0 0.0
        %2223 = vmatprep.subr.mxu0 0.0
        %2224 = vmatpush1.msra.mxu0 0.0
        %2225 = vmatprep.subr.mxu0 0.0
        %2226 = vmatpush1.msra.mxu0 0.0
        %2227 = vmatprep.subr.mxu0 0.0
        %2228 = vmatpush1.msra.mxu0 0.0
        %2229 = vmatprep.subr.mxu0 0.0
        %2230 = vmatpush1.msra.mxu0 0.0
        %2231 = vmatprep.subr.mxu0 0.0
        %2232 = vmatpush1.msra.mxu0 0.0
        %2233 = vmatprep.subr.mxu0 0.0
        %2234 = vmatpush1.msra.mxu0 0.0
        %2235 = vmatprep.subr.mxu0 0.0
        %2236 = vmatpush1.msra.mxu0 0.0
        %2237 = vmatprep.subr.mxu0 0.0
        %2238 = vmatpush1.msra.mxu0 0.0
        %2239 = vmatprep.subr.mxu0 0.0
        %2240 = vmatpush1.msra.mxu0 0.0
        %2241 = vmatprep.subr.mxu0 0.0
        %2242 = vmatpush1.msra.mxu0 0.0
        %2243 = vmatprep.subr.mxu0 0.0
        %2244 = vmatpush1.msra.mxu0 0.0
        %2245 = vmatprep.mubr.f32.mxu0 0.0
        %2246 = vmatmul.mubr.f32.gmra.mrb[0].mxu0 %v2179
        %v2247 = vpop.f32.mrb[0].mxu0
        %v2248 = vadd.f32 0.0, %v2247
        %v2249 = vpop.f32.mrb[0].mxu0
        %2250 = vdwg.mxu0
        %v2251 = vadd.f32 %v2095, %v2248
        %v2252 = vtanh.pop %v2251
        %vm2253 = vcmp.gt.s32.totalorder %v846, 5
        %v2254 = vsel %vm2253, 1, 0
        %2255 = vset.pattern.permute.xlu0 0
        %2256 = vperm.xlu0 %2255, %v2254
        %v2257 = vpop.permute.xlu0 %2256
        %vm2258 = vcmp.eq.s32.totalorder %v2257, 1
        %v2259 = vsel %vm2258, %v2252, %v2092
        %s2260 = scalar_lea.vmem [#allocation2], 96
        %v2261 = vld [vmem:[%s2260] sm:$0xff]
        %v2262 = vld [vmem:[%s2260 + $0x8] sm:$0xff]
        %v2264 = vsel %vm1069, %v2177, 0
        %2266 = vmatprep.subr.mxu0 0.0
        %2267 = vmatpush1.msra.mxu0 %v1324
        %2268 = vmatprep.subr.mxu0 0.0
        %2269 = vmatpush1.msra.mxu0 %v1325
        %2270 = vmatprep.subr.mxu0 0.0
        %2271 = vmatpush1.msra.mxu0 %v1326
        %2272 = vmatprep.subr.mxu0 0.0
        %2273 = vmatpush1.msra.mxu0 %v1327
        %2274 = vmatprep.subr.mxu0 0.0
        %2275 = vmatpush1.msra.mxu0 0.0
        %2276 = vmatprep.subr.mxu0 0.0
        %2277 = vmatpush1.msra.mxu0 0.0
        %2278 = vmatprep.subr.mxu0 0.0
        %2279 = vmatpush1.msra.mxu0 0.0
        %2280 = vmatprep.subr.mxu0 0.0
        %2281 = vmatpush1.msra.mxu0 0.0
        %2282 = vmatprep.subr.mxu0 0.0
        %2283 = vmatpush1.msra.mxu0 0.0
        %2284 = vmatprep.subr.mxu0 0.0
        %2285 = vmatpush1.msra.mxu0 0.0
        %2286 = vmatprep.subr.mxu0 0.0
        %2287 = vmatpush1.msra.mxu0 0.0
        %2288 = vmatprep.subr.mxu0 0.0
        %2289 = vmatpush1.msra.mxu0 0.0
        %2290 = vmatprep.subr.mxu0 0.0
        %2291 = vmatpush1.msra.mxu0 0.0
        %2292 = vmatprep.subr.mxu0 0.0
        %2293 = vmatpush1.msra.mxu0 0.0
        %2294 = vmatprep.subr.mxu0 0.0
        %2295 = vmatpush1.msra.mxu0 0.0
        %2296 = vmatprep.subr.mxu0 0.0
        %2297 = vmatpush1.msra.mxu0 0.0
        %2298 = vmatprep.subr.mxu0 0.0
        %2299 = vmatpush1.msra.mxu0 0.0
        %2300 = vmatprep.subr.mxu0 0.0
        %2301 = vmatpush1.msra.mxu0 0.0
        %2302 = vmatprep.subr.mxu0 0.0
        %2303 = vmatpush1.msra.mxu0 0.0
        %2304 = vmatprep.subr.mxu0 0.0
        %2305 = vmatpush1.msra.mxu0 0.0
        %2306 = vmatprep.subr.mxu0 0.0
        %2307 = vmatpush1.msra.mxu0 0.0
        %2308 = vmatprep.subr.mxu0 0.0
        %2309 = vmatpush1.msra.mxu0 0.0
        %2310 = vmatprep.subr.mxu0 0.0
        %2311 = vmatpush1.msra.mxu0 0.0
        %2312 = vmatprep.subr.mxu0 0.0
        %2313 = vmatpush1.msra.mxu0 0.0
        %2314 = vmatprep.subr.mxu0 0.0
        %2315 = vmatpush1.msra.mxu0 0.0
        %2316 = vmatprep.subr.mxu0 0.0
        %2317 = vmatpush1.msra.mxu0 0.0
        %2318 = vmatprep.subr.mxu0 0.0
        %2319 = vmatpush1.msra.mxu0 0.0
        %2320 = vmatprep.subr.mxu0 0.0
        %2321 = vmatpush1.msra.mxu0 0.0
        %2322 = vmatprep.subr.mxu0 0.0
        %2323 = vmatpush1.msra.mxu0 0.0
        %2324 = vmatprep.subr.mxu0 0.0
        %2325 = vmatpush1.msra.mxu0 0.0
        %2326 = vmatprep.subr.mxu0 0.0
        %2327 = vmatpush1.msra.mxu0 0.0
        %2328 = vmatprep.subr.mxu0 0.0
        %2329 = vmatpush1.msra.mxu0 0.0
        %2330 = vmatprep.mubr.f32.mxu0 0.0
        %2331 = vmatmul.mubr.f32.gmra.mrb[0].mxu0 %v2264
        %v2332 = vpop.f32.mrb[0].mxu0
        %v2333 = vadd.f32 0.0, %v2332
        %v2334 = vpop.f32.mrb[0].mxu0
        %2335 = vdwg.mxu0
        %v2336 = vadd.f32 %v2261, %v2333
        %v2337 = vtanh.pop %v2336
        %vm2338 = vcmp.gt.s32.totalorder %v845, 6
        %v2339 = vsel %vm2338, 1, 0
        %2340 = vset.pattern.permute.xlu0 0
        %2341 = vperm.xlu0 %2340, %v2339
        %v2342 = vpop.permute.xlu0 %2341
        %vm2343 = vcmp.eq.s32.totalorder %v2342, 1
        %v2344 = vsel %vm2343, %v2337, %v2177
        %v2346 = vsel %vm1069, %v2259, 0
        %2348 = vmatprep.subr.mxu0 0.0
        %2349 = vmatpush1.msra.mxu0 %v1324
        %2350 = vmatprep.subr.mxu0 0.0
        %2351 = vmatpush1.msra.mxu0 %v1325
        %2352 = vmatprep.subr.mxu0 0.0
        %2353 = vmatpush1.msra.mxu0 %v1326
        %2354 = vmatprep.subr.mxu0 0.0
        %2355 = vmatpush1.msra.mxu0 %v1327
        %2356 = vmatprep.subr.mxu0 0.0
        %2357 = vmatpush1.msra.mxu0 0.0
        %2358 = vmatprep.subr.mxu0 0.0
        %2359 = vmatpush1.msra.mxu0 0.0
        %2360 = vmatprep.subr.mxu0 0.0
        %2361 = vmatpush1.msra.mxu0 0.0
        %2362 = vmatprep.subr.mxu0 0.0
        %2363 = vmatpush1.msra.mxu0 0.0
        %2364 = vmatprep.subr.mxu0 0.0
        %2365 = vmatpush1.msra.mxu0 0.0
        %2366 = vmatprep.subr.mxu0 0.0
        %2367 = vmatpush1.msra.mxu0 0.0
        %2368 = vmatprep.subr.mxu0 0.0
        %2369 = vmatpush1.msra.mxu0 0.0
        %2370 = vmatprep.subr.mxu0 0.0
        %2371 = vmatpush1.msra.mxu0 0.0
        %2372 = vmatprep.subr.mxu0 0.0
        %2373 = vmatpush1.msra.mxu0 0.0
        %2374 = vmatprep.subr.mxu0 0.0
        %2375 = vmatpush1.msra.mxu0 0.0
        %2376 = vmatprep.subr.mxu0 0.0
        %2377 = vmatpush1.msra.mxu0 0.0
        %2378 = vmatprep.subr.mxu0 0.0
        %2379 = vmatpush1.msra.mxu0 0.0
        %2380 = vmatprep.subr.mxu0 0.0
        %2381 = vmatpush1.msra.mxu0 0.0
        %2382 = vmatprep.subr.mxu0 0.0
        %2383 = vmatpush1.msra.mxu0 0.0
        %2384 = vmatprep.subr.mxu0 0.0
        %2385 = vmatpush1.msra.mxu0 0.0
        %2386 = vmatprep.subr.mxu0 0.0
        %2387 = vmatpush1.msra.mxu0 0.0
        %2388 = vmatprep.subr.mxu0 0.0
        %2389 = vmatpush1.msra.mxu0 0.0
        %2390 = vmatprep.subr.mxu0 0.0
        %2391 = vmatpush1.msra.mxu0 0.0
        %2392 = vmatprep.subr.mxu0 0.0
        %2393 = vmatpush1.msra.mxu0 0.0
        %2394 = vmatprep.subr.mxu0 0.0
        %2395 = vmatpush1.msra.mxu0 0.0
        %2396 = vmatprep.subr.mxu0 0.0
        %2397 = vmatpush1.msra.mxu0 0.0
        %2398 = vmatprep.subr.mxu0 0.0
        %2399 = vmatpush1.msra.mxu0 0.0
        %2400 = vmatprep.subr.mxu0 0.0
        %2401 = vmatpush1.msra.mxu0 0.0
        %2402 = vmatprep.subr.mxu0 0.0
        %2403 = vmatpush1.msra.mxu0 0.0
        %2404 = vmatprep.subr.mxu0 0.0
        %2405 = vmatpush1.msra.mxu0 0.0
        %2406 = vmatprep.subr.mxu0 0.0
        %2407 = vmatpush1.msra.mxu0 0.0
        %2408 = vmatprep.subr.mxu0 0.0
        %2409 = vmatpush1.msra.mxu0 0.0
        %2410 = vmatprep.subr.mxu0 0.0
        %2411 = vmatpush1.msra.mxu0 0.0
        %2412 = vmatprep.mubr.f32.mxu0 0.0
        %2413 = vmatmul.mubr.f32.gmra.mrb[0].mxu0 %v2346
        %v2414 = vpop.f32.mrb[0].mxu0
        %v2415 = vadd.f32 0.0, %v2414
        %v2416 = vpop.f32.mrb[0].mxu0
        %2417 = vdwg.mxu0
        %v2418 = vadd.f32 %v2262, %v2415
        %v2419 = vtanh.pop %v2418
        %vm2420 = vcmp.gt.s32.totalorder %v846, 6
        %v2421 = vsel %vm2420, 1, 0
        %2422 = vset.pattern.permute.xlu0 0
        %2423 = vperm.xlu0 %2422, %v2421
        %v2424 = vpop.permute.xlu0 %2423
        %vm2425 = vcmp.eq.s32.totalorder %v2424, 1
        %v2426 = vsel %vm2425, %v2419, %v2259
        %s2427 = scalar_lea.vmem [#allocation2], 112
        %v2428 = vld [vmem:[%s2427] sm:$0xff]
        %v2429 = vld [vmem:[%s2427 + $0x8] sm:$0xff]
        %v2431 = vsel %vm1069, %v2344, 0
        %2433 = vmatprep.subr.mxu0 0.0
        %2434 = vmatpush1.msra.mxu0 %v1324
        %2435 = vmatprep.subr.mxu0 0.0
        %2436 = vmatpush1.msra.mxu0 %v1325
        %2437 = vmatprep.subr.mxu0 0.0
        %2438 = vmatpush1.msra.mxu0 %v1326
        %2439 = vmatprep.subr.mxu0 0.0
        %2440 = vmatpush1.msra.mxu0 %v1327
        %2441 = vmatprep.subr.mxu0 0.0
        %2442 = vmatpush1.msra.mxu0 0.0
        %2443 = vmatprep.subr.mxu0 0.0
        %2444 = vmatpush1.msra.mxu0 0.0
        %2445 = vmatprep.subr.mxu0 0.0
        %2446 = vmatpush1.msra.mxu0 0.0
        %2447 = vmatprep.subr.mxu0 0.0
        %2448 = vmatpush1.msra.mxu0 0.0
        %2449 = vmatprep.subr.mxu0 0.0
        %2450 = vmatpush1.msra.mxu0 0.0
        %2451 = vmatprep.subr.mxu0 0.0
        %2452 = vmatpush1.msra.mxu0 0.0
        %2453 = vmatprep.subr.mxu0 0.0
        %2454 = vmatpush1.msra.mxu0 0.0
        %2455 = vmatprep.subr.mxu0 0.0
        %2456 = vmatpush1.msra.mxu0 0.0
        %2457 = vmatprep.subr.mxu0 0.0
        %2458 = vmatpush1.msra.mxu0 0.0
        %2459 = vmatprep.subr.mxu0 0.0
        %2460 = vmatpush1.msra.mxu0 0.0
        %2461 = vmatprep.subr.mxu0 0.0
        %2462 = vmatpush1.msra.mxu0 0.0
        %2463 = vmatprep.subr.mxu0 0.0
        %2464 = vmatpush1.msra.mxu0 0.0
        %2465 = vmatprep.subr.mxu0 0.0
        %2466 = vmatpush1.msra.mxu0 0.0
        %2467 = vmatprep.subr.mxu0 0.0
        %2468 = vmatpush1.msra.mxu0 0.0
        %2469 = vmatprep.subr.mxu0 0.0
        %2470 = vmatpush1.msra.mxu0 0.0
        %2471 = vmatprep.subr.mxu0 0.0
        %2472 = vmatpush1.msra.mxu0 0.0
        %2473 = vmatprep.subr.mxu0 0.0
        %2474 = vmatpush1.msra.mxu0 0.0
        %2475 = vmatprep.subr.mxu0 0.0
        %2476 = vmatpush1.msra.mxu0 0.0
        %2477 = vmatprep.subr.mxu0 0.0
        %2478 = vmatpush1.msra.mxu0 0.0
        %2479 = vmatprep.subr.mxu0 0.0
        %2480 = vmatpush1.msra.mxu0 0.0
        %2481 = vmatprep.subr.mxu0 0.0
        %2482 = vmatpush1.msra.mxu0 0.0
        %2483 = vmatprep.subr.mxu0 0.0
        %2484 = vmatpush1.msra.mxu0 0.0
        %2485 = vmatprep.subr.mxu0 0.0
        %2486 = vmatpush1.msra.mxu0 0.0
        %2487 = vmatprep.subr.mxu0 0.0
        %2488 = vmatpush1.msra.mxu0 0.0
        %2489 = vmatprep.subr.mxu0 0.0
        %2490 = vmatpush1.msra.mxu0 0.0
        %2491 = vmatprep.subr.mxu0 0.0
        %2492 = vmatpush1.msra.mxu0 0.0
        %2493 = vmatprep.subr.mxu0 0.0
        %2494 = vmatpush1.msra.mxu0 0.0
        %2495 = vmatprep.subr.mxu0 0.0
        %2496 = vmatpush1.msra.mxu0 0.0
        %2497 = vmatprep.mubr.f32.mxu0 0.0
        %2498 = vmatmul.mubr.f32.gmra.mrb[0].mxu0 %v2431
        %v2499 = vpop.f32.mrb[0].mxu0
        %v2500 = vadd.f32 0.0, %v2499
        %v2501 = vpop.f32.mrb[0].mxu0
        %2502 = vdwg.mxu0
        %v2503 = vadd.f32 %v2428, %v2500
        %v2504 = vtanh.pop %v2503
        %vm2505 = vcmp.gt.s32.totalorder %v845, 7
        %v2506 = vsel %vm2505, 1, 0
        %2507 = vset.pattern.permute.xlu0 0
        %2508 = vperm.xlu0 %2507, %v2506
        %v2509 = vpop.permute.xlu0 %2508
        %vm2510 = vcmp.eq.s32.totalorder %v2509, 1
        %v2511 = vsel %vm2510, %v2504, %v2344
        %v2513 = vsel %vm1069, %v2426, 0
        %2515 = vmatprep.subr.mxu0 0.0
        %2516 = vmatpush1.msra.mxu0 %v1324
        %2517 = vmatprep.subr.mxu0 0.0
        %2518 = vmatpush1.msra.mxu0 %v1325
        %2519 = vmatprep.subr.mxu0 0.0
        %2520 = vmatpush1.msra.mxu0 %v1326
        %2521 = vmatprep.subr.mxu0 0.0
        %2522 = vmatpush1.msra.mxu0 %v1327
        %2523 = vmatprep.subr.mxu0 0.0
        %2524 = vmatpush1.msra.mxu0 0.0
        %2525 = vmatprep.subr.mxu0 0.0
        %2526 = vmatpush1.msra.mxu0 0.0
        %2527 = vmatprep.subr.mxu0 0.0
        %2528 = vmatpush1.msra.mxu0 0.0
        %2529 = vmatprep.subr.mxu0 0.0
        %2530 = vmatpush1.msra.mxu0 0.0
        %2531 = vmatprep.subr.mxu0 0.0
        %2532 = vmatpush1.msra.mxu0 0.0
        %2533 = vmatprep.subr.mxu0 0.0
        %2534 = vmatpush1.msra.mxu0 0.0
        %2535 = vmatprep.subr.mxu0 0.0
        %2536 = vmatpush1.msra.mxu0 0.0
        %2537 = vmatprep.subr.mxu0 0.0
        %2538 = vmatpush1.msra.mxu0 0.0
        %2539 = vmatprep.subr.mxu0 0.0
        %2540 = vmatpush1.msra.mxu0 0.0
        %2541 = vmatprep.subr.mxu0 0.0
        %2542 = vmatpush1.msra.mxu0 0.0
        %2543 = vmatprep.subr.mxu0 0.0
        %2544 = vmatpush1.msra.mxu0 0.0
        %2545 = vmatprep.subr.mxu0 0.0
        %2546 = vmatpush1.msra.mxu0 0.0
        %2547 = vmatprep.subr.mxu0 0.0
        %2548 = vmatpush1.msra.mxu0 0.0
        %2549 = vmatprep.subr.mxu0 0.0
        %2550 = vmatpush1.msra.mxu0 0.0
        %2551 = vmatprep.subr.mxu0 0.0
        %2552 = vmatpush1.msra.mxu0 0.0
        %2553 = vmatprep.subr.mxu0 0.0
        %2554 = vmatpush1.msra.mxu0 0.0
        %2555 = vmatprep.subr.mxu0 0.0
        %2556 = vmatpush1.msra.mxu0 0.0
        %2557 = vmatprep.subr.mxu0 0.0
        %2558 = vmatpush1.msra.mxu0 0.0
        %2559 = vmatprep.subr.mxu0 0.0
        %2560 = vmatpush1.msra.mxu0 0.0
        %2561 = vmatprep.subr.mxu0 0.0
        %2562 = vmatpush1.msra.mxu0 0.0
        %2563 = vmatprep.subr.mxu0 0.0
        %2564 = vmatpush1.msra.mxu0 0.0
        %2565 = vmatprep.subr.mxu0 0.0
        %2566 = vmatpush1.msra.mxu0 0.0
        %2567 = vmatprep.subr.mxu0 0.0
        %2568 = vmatpush1.msra.mxu0 0.0
        %2569 = vmatprep.subr.mxu0 0.0
        %2570 = vmatpush1.msra.mxu0 0.0
        %2571 = vmatprep.subr.mxu0 0.0
        %2572 = vmatpush1.msra.mxu0 0.0
        %2573 = vmatprep.subr.mxu0 0.0
        %2574 = vmatpush1.msra.mxu0 0.0
        %2575 = vmatprep.subr.mxu0 0.0
        %2576 = vmatpush1.msra.mxu0 0.0
        %2577 = vmatprep.subr.mxu0 0.0
        %2578 = vmatpush1.msra.mxu0 0.0
        %2579 = vmatprep.mubr.f32.mxu0 0.0
        %2580 = vmatmul.mubr.f32.gmra.mrb[0].mxu0 %v2513
        %v2581 = vpop.f32.mrb[0].mxu0
        %v2582 = vadd.f32 0.0, %v2581
        %v2583 = vpop.f32.mrb[0].mxu0
        %2584 = vdwg.mxu0
        %v2585 = vadd.f32 %v2429, %v2582
        %v2586 = vtanh.pop %v2585
        %vm2587 = vcmp.gt.s32.totalorder %v846, 7
        %v2588 = vsel %vm2587, 1, 0
        %2589 = vset.pattern.permute.xlu0 0
        %2590 = vperm.xlu0 %2589, %v2588
        %v2591 = vpop.permute.xlu0 %2590
        %vm2592 = vcmp.eq.s32.totalorder %v2591, 1
        %v2593 = vsel %vm2592, %v2586, %v2426
        %v2594 = vld [vmem:[%s9] sm:$0xff]
        %v2595 = vld [vmem:[%s9 + $0x8] sm:$0xff]
        %v2596 = vld [vmem:[%s9 + $0x10] sm:$0xff]
        %v2597 = vld [vmem:[%s9 + $0x18] sm:$0xff]
        %v2598 = vld [vmem:[%s10] sm:$0x1]
        %v2600 = vlaneseq
        %v2601 = vshrl.u32 %v2600, 7
        %v2602 = vsub.s32 0, %v2601
        %v2603 = vrot.slane %v2598, %v2602
        %v2606 = vsel %vm1069, %v2511, 0
        %v2609 = vsel %vm1069, %v2593, 0
        %2611 = vmatprep.subr.mxu0 0.0
        %2612 = vmatpush1.msra.mxu0 %v2594
        %2613 = vmatprep.subr.mxu0 0.0
        %2614 = vmatpush1.msra.mxu0 %v2595
        %2615 = vmatprep.subr.mxu0 0.0
        %2616 = vmatpush1.msra.mxu0 %v2596
        %2617 = vmatprep.subr.mxu0 0.0
        %2618 = vmatpush1.msra.mxu0 %v2597
        %2619 = vmatprep.subr.mxu0 0.0
        %2620 = vmatpush1.msra.mxu0 0.0
        %2621 = vmatprep.subr.mxu0 0.0
        %2622 = vmatpush1.msra.mxu0 0.0
        %2623 = vmatprep.subr.mxu0 0.0
        %2624 = vmatpush1.msra.mxu0 0.0
        %2625 = vmatprep.subr.mxu0 0.0
        %2626 = vmatpush1.msra.mxu0 0.0
        %2627 = vmatprep.subr.mxu0 0.0
        %2628 = vmatpush1.msra.mxu0 0.0
        %2629 = vmatprep.subr.mxu0 0.0
        %2630 = vmatpush1.msra.mxu0 0.0
        %2631 = vmatprep.subr.mxu0 0.0
        %2632 = vmatpush1.msra.mxu0 0.0
        %2633 = vmatprep.subr.mxu0 0.0
        %2634 = vmatpush1.msra.mxu0 0.0
        %2635 = vmatprep.subr.mxu0 0.0
        %2636 = vmatpush1.msra.mxu0 0.0
        %2637 = vmatprep.subr.mxu0 0.0
        %2638 = vmatpush1.msra.mxu0 0.0
        %2639 = vmatprep.subr.mxu0 0.0
        %2640 = vmatpush1.msra.mxu0 0.0
        %2641 = vmatprep.subr.mxu0 0.0
        %2642 = vmatpush1.msra.mxu0 0.0
        %2643 = vmatprep.subr.mxu0 0.0
        %2644 = vmatpush1.msra.mxu0 0.0
        %2645 = vmatprep.subr.mxu0 0.0
        %2646 = vmatpush1.msra.mxu0 0.0
        %2647 = vmatprep.subr.mxu0 0.0
        %2648 = vmatpush1.msra.mxu0 0.0
        %2649 = vmatprep.subr.mxu0 0.0
        %2650 = vmatpush1.msra.mxu0 0.0
        %2651 = vmatprep.subr.mxu0 0.0
        %2652 = vmatpush1.msra.mxu0 0.0
        %2653 = vmatprep.subr.mxu0 0.0
        %2654 = vmatpush1.msra.mxu0 0.0
        %2655 = vmatprep.subr.mxu0 0.0
        %2656 = vmatpush1.msra.mxu0 0.0
        %2657 = vmatprep.subr.mxu0 0.0
        %2658 = vmatpush1.msra.mxu0 0.0
        %2659 = vmatprep.subr.mxu0 0.0
        %2660 = vmatpush1.msra.mxu0 0.0
        %2661 = vmatprep.subr.mxu0 0.0
        %2662 = vmatpush1.msra.mxu0 0.0
        %2663 = vmatprep.subr.mxu0 0.0
        %2664 = vmatpush1.msra.mxu0 0.0
        %2665 = vmatprep.subr.mxu0 0.0
        %2666 = vmatpush1.msra.mxu0 0.0
        %2667 = vmatprep.subr.mxu0 0.0
        %2668 = vmatpush1.msra.mxu0 0.0
        %2669 = vmatprep.subr.mxu0 0.0
        %2670 = vmatpush1.msra.mxu0 0.0
        %2671 = vmatprep.subr.mxu0 0.0
        %2672 = vmatpush1.msra.mxu0 0.0
        %2673 = vmatprep.subr.mxu0 0.0
        %2674 = vmatpush1.msra.mxu0 0.0
        %2675 = vmatprep.mubr.f32.mxu0 0.0
        %2676 = vmatmul.mubr.f32.gmra.mrb[0].mxu0 %v2606
        %v2677 = vpop.f32.mrb[0].mxu0
        %v2678 = vadd.f32 %v2603, %v2677
        %v2679 = vpop.f32.mrb[0].mxu0
        %2680 = vmatprep.mubr.f32.mxu0 0.0
        %2681 = vmatmul.mubr.f32.gmra.mrb[0].mxu0 %v2609
        %v2682 = vpop.f32.mrb[0].mxu0
        %v2683 = vadd.f32 %v2603, %v2682
        %v2684 = vpop.f32.mrb[0].mxu0
        %2685 = vdwg.mxu0
        %vm2686 = vcmask 64512
        %2687 = vst.msk [vmem:[%s837] sm:$0xff] %vm2686, %v2678
        %2688 = vst.msk [vmem:[%s837 + $0x8] sm:$0xff] %vm2686, %v2683
        %2691 = vrot.lane.b32.xlu0 %v2678, 120
        %v2692 = vpop.permute.xlu0 %2691
        %2693 = vrot.lane.b32.xlu0 %v2683, 120
        %v2694 = vpop.permute.xlu0 %2693
        %2697 = vst.msk [vmem:[%s843] sm:$0xff] %vm2686, %v2692
        %2698 = vst.msk [vmem:[%s843 + $0x8] sm:$0xff] %vm2686, %v2694
        %2699 = vst.msk [vmem:[%s831] sm:$0xff] %vm2686, %v2678
        %2700 = vst.msk [vmem:[%s831 + $0x8] sm:$0xff] %vm2686, %v2683
        %v2701 = vld [vmem:[%s11] sm:$0xff]
        %v2702 = vld [vmem:[%s12] sm:$0x1]
        %v2704 = vlaneseq
        %v2705 = vshrl.u32 %v2704, 7
        %v2706 = vsub.s32 0, %v2705
        %v2707 = vrot.slane %v2702, %v2706
        %v2709 = vsel %vm2686, %v2678, 0
        %v2711 = vsel %vm2686, %v2683, 0
        %2713 = vmatprep.subr.mxu0 0.0
        %2714 = vmatpush1.msra.mxu0 %v2701
        %2715 = vmatprep.subr.mxu0 0.0
        %2716 = vmatpush1.msra.mxu0 0.0
        %2717 = vmatprep.subr.mxu0 0.0
        %2718 = vmatpush1.msra.mxu0 0.0
        %2719 = vmatprep.subr.mxu0 0.0
        %2720 = vmatpush1.msra.mxu0 0.0
        %2721 = vmatprep.subr.mxu0 0.0
        %2722 = vmatpush1.msra.mxu0 0.0
        %2723 = vmatprep.subr.mxu0 0.0
        %2724 = vmatpush1.msra.mxu0 0.0
        %2725 = vmatprep.subr.mxu0 0.0
        %2726 = vmatpush1.msra.mxu0 0.0
        %2727 = vmatprep.subr.mxu0 0.0
        %2728 = vmatpush1.msra.mxu0 0.0
        %2729 = vmatprep.subr.mxu0 0.0
        %2730 = vmatpush1.msra.mxu0 0.0
        %2731 = vmatprep.subr.mxu0 0.0
        %2732 = vmatpush1.msra.mxu0 0.0
        %2733 = vmatprep.subr.mxu0 0.0
        %2734 = vmatpush1.msra.mxu0 0.0
        %2735 = vmatprep.subr.mxu0 0.0
        %2736 = vmatpush1.msra.mxu0 0.0
        %2737 = vmatprep.subr.mxu0 0.0
        %2738 = vmatpush1.msra.mxu0 0.0
        %2739 = vmatprep.subr.mxu0 0.0
        %2740 = vmatpush1.msra.mxu0 0.0
        %2741 = vmatprep.subr.mxu0 0.0
        %2742 = vmatpush1.msra.mxu0 0.0
        %2743 = vmatprep.subr.mxu0 0.0
        %2744 = vmatpush1.msra.mxu0 0.0
        %2745 = vmatprep.subr.mxu0 0.0
        %2746 = vmatpush1.msra.mxu0 0.0
        %2747 = vmatprep.subr.mxu0 0.0
        %2748 = vmatpush1.msra.mxu0 0.0
        %2749 = vmatprep.subr.mxu0 0.0
        %2750 = vmatpush1.msra.mxu0 0.0
        %2751 = vmatprep.subr.mxu0 0.0
        %2752 = vmatpush1.msra.mxu0 0.0
        %2753 = vmatprep.subr.mxu0 0.0
        %2754 = vmatpush1.msra.mxu0 0.0
        %2755 = vmatprep.subr.mxu0 0.0
        %2756 = vmatpush1.msra.mxu0 0.0
        %2757 = vmatprep.subr.mxu0 0.0
        %2758 = vmatpush1.msra.mxu0 0.0
        %2759 = vmatprep.subr.mxu0 0.0
        %2760 = vmatpush1.msra.mxu0 0.0
        %2761 = vmatprep.subr.mxu0 0.0
        %2762 = vmatpush1.msra.mxu0 0.0
        %2763 = vmatprep.subr.mxu0 0.0
        %2764 = vmatpush1.msra.mxu0 0.0
        %2765 = vmatprep.subr.mxu0 0.0
        %2766 = vmatpush1.msra.mxu0 0.0
        %2767 = vmatprep.subr.mxu0 0.0
        %2768 = vmatpush1.msra.mxu0 0.0
        %2769 = vmatprep.subr.mxu0 0.0
        %2770 = vmatpush1.msra.mxu0 0.0
        %2771 = vmatprep.subr.mxu0 0.0
        %2772 = vmatpush1.msra.mxu0 0.0
        %2773 = vmatprep.subr.mxu0 0.0
        %2774 = vmatpush1.msra.mxu0 0.0
        %2775 = vmatprep.subr.mxu0 0.0
        %2776 = vmatpush1.msra.mxu0 0.0
        %2777 = vmatprep.mubr.f32.mxu0 0.0
        %2778 = vmatmul.mubr.f32.gmra.mrb[0].mxu0 %v2709
        %v2779 = vpop.f32.mrb[0].mxu0
        %v2780 = vadd.f32 %v2707, %v2779
        %v2781 = vpop.f32.mrb[0].mxu0
        %2782 = vmatprep.mubr.f32.mxu0 0.0
        %2783 = vmatmul.mubr.f32.gmra.mrb[0].mxu0 %v2711
        %v2784 = vpop.f32.mrb[0].mxu0
        %v2785 = vadd.f32 %v2707, %v2784
        %v2786 = vpop.f32.mrb[0].mxu0
        %2787 = vdwg.mxu0
        %v2788 = vld [vmem:[#allocation3] sm:$0xff]
        %v2789 = vld [vmem:[#allocation3 + $0x8] sm:$0xff]
        %v2791 = vsel %vm1069, %v2780, 0
        %2793 = vmatprep.subr.mxu0 0.0
        %2794 = vmatpush1.msra.mxu0 %v1328
        %2795 = vmatprep.subr.mxu0 0.0
        %2796 = vmatpush1.msra.mxu0 %v1329
        %2797 = vmatprep.subr.mxu0 0.0
        %2798 = vmatpush1.msra.mxu0 %v1330
        %2799 = vmatprep.subr.mxu0 0.0
        %2800 = vmatpush1.msra.mxu0 %v1331
        %2801 = vmatprep.subr.mxu0 0.0
        %2802 = vmatpush1.msra.mxu0 0.0
        %2803 = vmatprep.subr.mxu0 0.0
        %2804 = vmatpush1.msra.mxu0 0.0
        %2805 = vmatprep.subr.mxu0 0.0
        %2806 = vmatpush1.msra.mxu0 0.0
        %2807 = vmatprep.subr.mxu0 0.0
        %2808 = vmatpush1.msra.mxu0 0.0
        %2809 = vmatprep.subr.mxu0 0.0
        %2810 = vmatpush1.msra.mxu0 0.0
        %2811 = vmatprep.subr.mxu0 0.0
        %2812 = vmatpush1.msra.mxu0 0.0
        %2813 = vmatprep.subr.mxu0 0.0
        %2814 = vmatpush1.msra.mxu0 0.0
        %2815 = vmatprep.subr.mxu0 0.0
        %2816 = vmatpush1.msra.mxu0 0.0
        %2817 = vmatprep.subr.mxu0 0.0
        %2818 = vmatpush1.msra.mxu0 0.0
        %2819 = vmatprep.subr.mxu0 0.0
        %2820 = vmatpush1.msra.mxu0 0.0
        %2821 = vmatprep.subr.mxu0 0.0
        %2822 = vmatpush1.msra.mxu0 0.0
        %2823 = vmatprep.subr.mxu0 0.0
        %2824 = vmatpush1.msra.mxu0 0.0
        %2825 = vmatprep.subr.mxu0 0.0
        %2826 = vmatpush1.msra.mxu0 0.0
        %2827 = vmatprep.subr.mxu0 0.0
        %2828 = vmatpush1.msra.mxu0 0.0
        %2829 = vmatprep.subr.mxu0 0.0
        %2830 = vmatpush1.msra.mxu0 0.0
        %2831 = vmatprep.subr.mxu0 0.0
        %2832 = vmatpush1.msra.mxu0 0.0
        %2833 = vmatprep.subr.mxu0 0.0
        %2834 = vmatpush1.msra.mxu0 0.0
        %2835 = vmatprep.subr.mxu0 0.0
        %2836 = vmatpush1.msra.mxu0 0.0
        %2837 = vmatprep.subr.mxu0 0.0
        %2838 = vmatpush1.msra.mxu0 0.0
        %2839 = vmatprep.subr.mxu0 0.0
        %2840 = vmatpush1.msra.mxu0 0.0
        %2841 = vmatprep.subr.mxu0 0.0
        %2842 = vmatpush1.msra.mxu0 0.0
        %2843 = vmatprep.subr.mxu0 0.0
        %2844 = vmatpush1.msra.mxu0 0.0
        %2845 = vmatprep.subr.mxu0 0.0
        %2846 = vmatpush1.msra.mxu0 0.0
        %2847 = vmatprep.subr.mxu0 0.0
        %2848 = vmatpush1.msra.mxu0 0.0
        %2849 = vmatprep.subr.mxu0 0.0
        %2850 = vmatpush1.msra.mxu0 0.0
        %2851 = vmatprep.subr.mxu0 0.0
        %2852 = vmatpush1.msra.mxu0 0.0
        %2853 = vmatprep.subr.mxu0 0.0
        %2854 = vmatpush1.msra.mxu0 0.0
        %2855 = vmatprep.subr.mxu0 0.0
        %2856 = vmatpush1.msra.mxu0 0.0
        %2857 = vmatprep.mubr.f32.mxu0 0.0
        %2858 = vmatmul.mubr.f32.gmra.mrb[0].mxu0 %v2791
        %v2859 = vpop.f32.mrb[0].mxu0
        %v2860 = vadd.f32 0.0, %v2859
        %v2861 = vpop.f32.mrb[0].mxu0
        %2862 = vdwg.mxu0
        %v2863 = vadd.f32 %v2788, %v2860
        %v2864 = vtanh.pop %v2863
        %v2865 = vsel %vm1414, %v2864, %v2780
        %v2867 = vsel %vm1069, %v2785, 0
        %2869 = vmatprep.subr.mxu0 0.0
        %2870 = vmatpush1.msra.mxu0 %v1328
        %2871 = vmatprep.subr.mxu0 0.0
        %2872 = vmatpush1.msra.mxu0 %v1329
        %2873 = vmatprep.subr.mxu0 0.0
        %2874 = vmatpush1.msra.mxu0 %v1330
        %2875 = vmatprep.subr.mxu0 0.0
        %2876 = vmatpush1.msra.mxu0 %v1331
        %2877 = vmatprep.subr.mxu0 0.0
        %2878 = vmatpush1.msra.mxu0 0.0
        %2879 = vmatprep.subr.mxu0 0.0
        %2880 = vmatpush1.msra.mxu0 0.0
        %2881 = vmatprep.subr.mxu0 0.0
        %2882 = vmatpush1.msra.mxu0 0.0
        %2883 = vmatprep.subr.mxu0 0.0
        %2884 = vmatpush1.msra.mxu0 0.0
        %2885 = vmatprep.subr.mxu0 0.0
        %2886 = vmatpush1.msra.mxu0 0.0
        %2887 = vmatprep.subr.mxu0 0.0
        %2888 = vmatpush1.msra.mxu0 0.0
        %2889 = vmatprep.subr.mxu0 0.0
        %2890 = vmatpush1.msra.mxu0 0.0
        %2891 = vmatprep.subr.mxu0 0.0
        %2892 = vmatpush1.msra.mxu0 0.0
        %2893 = vmatprep.subr.mxu0 0.0
        %2894 = vmatpush1.msra.mxu0 0.0
        %2895 = vmatprep.subr.mxu0 0.0
        %2896 = vmatpush1.msra.mxu0 0.0
        %2897 = vmatprep.subr.mxu0 0.0
        %2898 = vmatpush1.msra.mxu0 0.0
        %2899 = vmatprep.subr.mxu0 0.0
        %2900 = vmatpush1.msra.mxu0 0.0
        %2901 = vmatprep.subr.mxu0 0.0
        %2902 = vmatpush1.msra.mxu0 0.0
        %2903 = vmatprep.subr.mxu0 0.0
        %2904 = vmatpush1.msra.mxu0 0.0
        %2905 = vmatprep.subr.mxu0 0.0
        %2906 = vmatpush1.msra.mxu0 0.0
        %2907 = vmatprep.subr.mxu0 0.0
        %2908 = vmatpush1.msra.mxu0 0.0
        %2909 = vmatprep.subr.mxu0 0.0
        %2910 = vmatpush1.msra.mxu0 0.0
        %2911 = vmatprep.subr.mxu0 0.0
        %2912 = vmatpush1.msra.mxu0 0.0
        %2913 = vmatprep.subr.mxu0 0.0
        %2914 = vmatpush1.msra.mxu0 0.0
        %2915 = vmatprep.subr.mxu0 0.0
        %2916 = vmatpush1.msra.mxu0 0.0
        %2917 = vmatprep.subr.mxu0 0.0
        %2918 = vmatpush1.msra.mxu0 0.0
        %2919 = vmatprep.subr.mxu0 0.0
        %2920 = vmatpush1.msra.mxu0 0.0
        %2921 = vmatprep.subr.mxu0 0.0
        %2922 = vmatpush1.msra.mxu0 0.0
        %2923 = vmatprep.subr.mxu0 0.0
        %2924 = vmatpush1.msra.mxu0 0.0
        %2925 = vmatprep.subr.mxu0 0.0
        %2926 = vmatpush1.msra.mxu0 0.0
        %2927 = vmatprep.subr.mxu0 0.0
        %2928 = vmatpush1.msra.mxu0 0.0
        %2929 = vmatprep.subr.mxu0 0.0
        %2930 = vmatpush1.msra.mxu0 0.0
        %2931 = vmatprep.subr.mxu0 0.0
        %2932 = vmatpush1.msra.mxu0 0.0
        %2933 = vmatprep.mubr.f32.mxu0 0.0
        %2934 = vmatmul.mubr.f32.gmra.mrb[0].mxu0 %v2867
        %v2935 = vpop.f32.mrb[0].mxu0
        %v2936 = vadd.f32 0.0, %v2935
        %v2937 = vpop.f32.mrb[0].mxu0
        %2938 = vdwg.mxu0
        %v2939 = vadd.f32 %v2789, %v2936
        %v2940 = vtanh.pop %v2939
        %v2941 = vsel %vm1423, %v2940, %v2785
        %2942 = vst.msk [vmem:[#allocation3] sm:$0xff] %vm1069, %v2864
        %2943 = vst.msk [vmem:[#allocation3 + $0x8] sm:$0xff] %vm1069, %v2940
        %s2944 = scalar_lea.vmem [#allocation3], 16
        %v2945 = vld [vmem:[%s2944] sm:$0xff]
        %v2946 = vld [vmem:[%s2944 + $0x8] sm:$0xff]
        %v2948 = vsel %vm1069, %v2865, 0
        %2950 = vmatprep.subr.mxu0 0.0
        %2951 = vmatpush1.msra.mxu0 %v1328
        %2952 = vmatprep.subr.mxu0 0.0
        %2953 = vmatpush1.msra.mxu0 %v1329
        %2954 = vmatprep.subr.mxu0 0.0
        %2955 = vmatpush1.msra.mxu0 %v1330
        %2956 = vmatprep.subr.mxu0 0.0
        %2957 = vmatpush1.msra.mxu0 %v1331
        %2958 = vmatprep.subr.mxu0 0.0
        %2959 = vmatpush1.msra.mxu0 0.0
        %2960 = vmatprep.subr.mxu0 0.0
        %2961 = vmatpush1.msra.mxu0 0.0
        %2962 = vmatprep.subr.mxu0 0.0
        %2963 = vmatpush1.msra.mxu0 0.0
        %2964 = vmatprep.subr.mxu0 0.0
        %2965 = vmatpush1.msra.mxu0 0.0
        %2966 = vmatprep.subr.mxu0 0.0
        %2967 = vmatpush1.msra.mxu0 0.0
        %2968 = vmatprep.subr.mxu0 0.0
        %2969 = vmatpush1.msra.mxu0 0.0
        %2970 = vmatprep.subr.mxu0 0.0
        %2971 = vmatpush1.msra.mxu0 0.0
        %2972 = vmatprep.subr.mxu0 0.0
        %2973 = vmatpush1.msra.mxu0 0.0
        %2974 = vmatprep.subr.mxu0 0.0
        %2975 = vmatpush1.msra.mxu0 0.0
        %2976 = vmatprep.subr.mxu0 0.0
        %2977 = vmatpush1.msra.mxu0 0.0
        %2978 = vmatprep.subr.mxu0 0.0
        %2979 = vmatpush1.msra.mxu0 0.0
        %2980 = vmatprep.subr.mxu0 0.0
        %2981 = vmatpush1.msra.mxu0 0.0
        %2982 = vmatprep.subr.mxu0 0.0
        %2983 = vmatpush1.msra.mxu0 0.0
        %2984 = vmatprep.subr.mxu0 0.0
        %2985 = vmatpush1.msra.mxu0 0.0
        %2986 = vmatprep.subr.mxu0 0.0
        %2987 = vmatpush1.msra.mxu0 0.0
        %2988 = vmatprep.subr.mxu0 0.0
        %2989 = vmatpush1.msra.mxu0 0.0
        %2990 = vmatprep.subr.mxu0 0.0
        %2991 = vmatpush1.msra.mxu0 0.0
        %2992 = vmatprep.subr.mxu0 0.0
        %2993 = vmatpush1.msra.mxu0 0.0
        %2994 = vmatprep.subr.mxu0 0.0
        %2995 = vmatpush1.msra.mxu0 0.0
        %2996 = vmatprep.subr.mxu0 0.0
        %2997 = vmatpush1.msra.mxu0 0.0
        %2998 = vmatprep.subr.mxu0 0.0
        %2999 = vmatpush1.msra.mxu0 0.0
        %3000 = vmatprep.subr.mxu0 0.0
        %3001 = vmatpush1.msra.mxu0 0.0
        %3002 = vmatprep.subr.mxu0 0.0
        %3003 = vmatpush1.msra.mxu0 0.0
        %3004 = vmatprep.subr.mxu0 0.0
        %3005 = vmatpush1.msra.mxu0 0.0
        %3006 = vmatprep.subr.mxu0 0.0
        %3007 = vmatpush1.msra.mxu0 0.0
        %3008 = vmatprep.subr.mxu0 0.0
        %3009 = vmatpush1.msra.mxu0 0.0
        %3010 = vmatprep.subr.mxu0 0.0
        %3011 = vmatpush1.msra.mxu0 0.0
        %3012 = vmatprep.subr.mxu0 0.0
        %3013 = vmatpush1.msra.mxu0 0.0
        %3014 = vmatprep.mubr.f32.mxu0 0.0
        %3015 = vmatmul.mubr.f32.gmra.mrb[0].mxu0 %v2948
        %v3016 = vpop.f32.mrb[0].mxu0
        %v3017 = vadd.f32 0.0, %v3016
        %v3018 = vpop.f32.mrb[0].mxu0
        %3019 = vdwg.mxu0
        %v3020 = vadd.f32 %v2945, %v3017
        %v3021 = vtanh.pop %v3020
        %v3022 = vsel %vm1508, %v3021, %v2865
        %v3024 = vsel %vm1069, %v2941, 0
        %3026 = vmatprep.subr.mxu0 0.0
        %3027 = vmatpush1.msra.mxu0 %v1328
        %3028 = vmatprep.subr.mxu0 0.0
        %3029 = vmatpush1.msra.mxu0 %v1329
        %3030 = vmatprep.subr.mxu0 0.0
        %3031 = vmatpush1.msra.mxu0 %v1330
        %3032 = vmatprep.subr.mxu0 0.0
        %3033 = vmatpush1.msra.mxu0 %v1331
        %3034 = vmatprep.subr.mxu0 0.0
        %3035 = vmatpush1.msra.mxu0 0.0
        %3036 = vmatprep.subr.mxu0 0.0
        %3037 = vmatpush1.msra.mxu0 0.0
        %3038 = vmatprep.subr.mxu0 0.0
        %3039 = vmatpush1.msra.mxu0 0.0
        %3040 = vmatprep.subr.mxu0 0.0
        %3041 = vmatpush1.msra.mxu0 0.0
        %3042 = vmatprep.subr.mxu0 0.0
        %3043 = vmatpush1.msra.mxu0 0.0
        %3044 = vmatprep.subr.mxu0 0.0
        %3045 = vmatpush1.msra.mxu0 0.0
        %3046 = vmatprep.subr.mxu0 0.0
        %3047 = vmatpush1.msra.mxu0 0.0
        %3048 = vmatprep.subr.mxu0 0.0
        %3049 = vmatpush1.msra.mxu0 0.0
        %3050 = vmatprep.subr.mxu0 0.0
        %3051 = vmatpush1.msra.mxu0 0.0
        %3052 = vmatprep.subr.mxu0 0.0
        %3053 = vmatpush1.msra.mxu0 0.0
        %3054 = vmatprep.subr.mxu0 0.0
        %3055 = vmatpush1.msra.mxu0 0.0
        %3056 = vmatprep.subr.mxu0 0.0
        %3057 = vmatpush1.msra.mxu0 0.0
        %3058 = vmatprep.subr.mxu0 0.0
        %3059 = vmatpush1.msra.mxu0 0.0
        %3060 = vmatprep.subr.mxu0 0.0
        %3061 = vmatpush1.msra.mxu0 0.0
        %3062 = vmatprep.subr.mxu0 0.0
        %3063 = vmatpush1.msra.mxu0 0.0
        %3064 = vmatprep.subr.mxu0 0.0
        %3065 = vmatpush1.msra.mxu0 0.0
        %3066 = vmatprep.subr.mxu0 0.0
        %3067 = vmatpush1.msra.mxu0 0.0
        %3068 = vmatprep.subr.mxu0 0.0
        %3069 = vmatpush1.msra.mxu0 0.0
        %3070 = vmatprep.subr.mxu0 0.0
        %3071 = vmatpush1.msra.mxu0 0.0
        %3072 = vmatprep.subr.mxu0 0.0
        %3073 = vmatpush1.msra.mxu0 0.0
        %3074 = vmatprep.subr.mxu0 0.0
        %3075 = vmatpush1.msra.mxu0 0.0
        %3076 = vmatprep.subr.mxu0 0.0
        %3077 = vmatpush1.msra.mxu0 0.0
        %3078 = vmatprep.subr.mxu0 0.0
        %3079 = vmatpush1.msra.mxu0 0.0
        %3080 = vmatprep.subr.mxu0 0.0
        %3081 = vmatpush1.msra.mxu0 0.0
        %3082 = vmatprep.subr.mxu0 0.0
        %3083 = vmatpush1.msra.mxu0 0.0
        %3084 = vmatprep.subr.mxu0 0.0
        %3085 = vmatpush1.msra.mxu0 0.0
        %3086 = vmatprep.subr.mxu0 0.0
        %3087 = vmatpush1.msra.mxu0 0.0
        %3088 = vmatprep.subr.mxu0 0.0
        %3089 = vmatpush1.msra.mxu0 0.0
        %3090 = vmatprep.mubr.f32.mxu0 0.0
        %3091 = vmatmul.mubr.f32.gmra.mrb[0].mxu0 %v3024
        %v3092 = vpop.f32.mrb[0].mxu0
        %v3093 = vadd.f32 0.0, %v3092
        %v3094 = vpop.f32.mrb[0].mxu0
        %3095 = vdwg.mxu0
        %v3096 = vadd.f32 %v2946, %v3093
        %v3097 = vtanh.pop %v3096
        %v3098 = vsel %vm1590, %v3097, %v2941
        %3099 = vst.msk [vmem:[%s2944] sm:$0xff] %vm1069, %v3021
        %3100 = vst.msk [vmem:[%s2944 + $0x8] sm:$0xff] %vm1069, %v3097
        %s3101 = scalar_lea.vmem [#allocation3], 32
        %v3102 = vld [vmem:[%s3101] sm:$0xff]
        %v3103 = vld [vmem:[%s3101 + $0x8] sm:$0xff]
        %v3105 = vsel %vm1069, %v3022, 0
        %3107 = vmatprep.subr.mxu0 0.0
        %3108 = vmatpush1.msra.mxu0 %v1328
        %3109 = vmatprep.subr.mxu0 0.0
        %3110 = vmatpush1.msra.mxu0 %v1329
        %3111 = vmatprep.subr.mxu0 0.0
        %3112 = vmatpush1.msra.mxu0 %v1330
        %3113 = vmatprep.subr.mxu0 0.0
        %3114 = vmatpush1.msra.mxu0 %v1331
        %3115 = vmatprep.subr.mxu0 0.0
        %3116 = vmatpush1.msra.mxu0 0.0
        %3117 = vmatprep.subr.mxu0 0.0
        %3118 = vmatpush1.msra.mxu0 0.0
        %3119 = vmatprep.subr.mxu0 0.0
        %3120 = vmatpush1.msra.mxu0 0.0
        %3121 = vmatprep.subr.mxu0 0.0
        %3122 = vmatpush1.msra.mxu0 0.0
        %3123 = vmatprep.subr.mxu0 0.0
        %3124 = vmatpush1.msra.mxu0 0.0
        %3125 = vmatprep.subr.mxu0 0.0
        %3126 = vmatpush1.msra.mxu0 0.0
        %3127 = vmatprep.subr.mxu0 0.0
        %3128 = vmatpush1.msra.mxu0 0.0
        %3129 = vmatprep.subr.mxu0 0.0
        %3130 = vmatpush1.msra.mxu0 0.0
        %3131 = vmatprep.subr.mxu0 0.0
        %3132 = vmatpush1.msra.mxu0 0.0
        %3133 = vmatprep.subr.mxu0 0.0
        %3134 = vmatpush1.msra.mxu0 0.0
        %3135 = vmatprep.subr.mxu0 0.0
        %3136 = vmatpush1.msra.mxu0 0.0
        %3137 = vmatprep.subr.mxu0 0.0
        %3138 = vmatpush1.msra.mxu0 0.0
        %3139 = vmatprep.subr.mxu0 0.0
        %3140 = vmatpush1.msra.mxu0 0.0
        %3141 = vmatprep.subr.mxu0 0.0
        %3142 = vmatpush1.msra.mxu0 0.0
        %3143 = vmatprep.subr.mxu0 0.0
        %3144 = vmatpush1.msra.mxu0 0.0
        %3145 = vmatprep.subr.mxu0 0.0
        %3146 = vmatpush1.msra.mxu0 0.0
        %3147 = vmatprep.subr.mxu0 0.0
        %3148 = vmatpush1.msra.mxu0 0.0
        %3149 = vmatprep.subr.mxu0 0.0
        %3150 = vmatpush1.msra.mxu0 0.0
        %3151 = vmatprep.subr.mxu0 0.0
        %3152 = vmatpush1.msra.mxu0 0.0
        %3153 = vmatprep.subr.mxu0 0.0
        %3154 = vmatpush1.msra.mxu0 0.0
        %3155 = vmatprep.subr.mxu0 0.0
        %3156 = vmatpush1.msra.mxu0 0.0
        %3157 = vmatprep.subr.mxu0 0.0
        %3158 = vmatpush1.msra.mxu0 0.0
        %3159 = vmatprep.subr.mxu0 0.0
        %3160 = vmatpush1.msra.mxu0 0.0
        %3161 = vmatprep.subr.mxu0 0.0
        %3162 = vmatpush1.msra.mxu0 0.0
        %3163 = vmatprep.subr.mxu0 0.0
        %3164 = vmatpush1.msra.mxu0 0.0
        %3165 = vmatprep.subr.mxu0 0.0
        %3166 = vmatpush1.msra.mxu0 0.0
        %3167 = vmatprep.subr.mxu0 0.0
        %3168 = vmatpush1.msra.mxu0 0.0
        %3169 = vmatprep.subr.mxu0 0.0
        %3170 = vmatpush1.msra.mxu0 0.0
        %3171 = vmatprep.mubr.f32.mxu0 0.0
        %3172 = vmatmul.mubr.f32.gmra.mrb[0].mxu0 %v3105
        %v3173 = vpop.f32.mrb[0].mxu0
        %v3174 = vadd.f32 0.0, %v3173
        %v3175 = vpop.f32.mrb[0].mxu0
        %3176 = vdwg.mxu0
        %v3177 = vadd.f32 %v3102, %v3174
        %v3178 = vtanh.pop %v3177
        %v3179 = vsel %vm1675, %v3178, %v3022
        %v3181 = vsel %vm1069, %v3098, 0
        %3183 = vmatprep.subr.mxu0 0.0
        %3184 = vmatpush1.msra.mxu0 %v1328
        %3185 = vmatprep.subr.mxu0 0.0
        %3186 = vmatpush1.msra.mxu0 %v1329
        %3187 = vmatprep.subr.mxu0 0.0
        %3188 = vmatpush1.msra.mxu0 %v1330
        %3189 = vmatprep.subr.mxu0 0.0
        %3190 = vmatpush1.msra.mxu0 %v1331
        %3191 = vmatprep.subr.mxu0 0.0
        %3192 = vmatpush1.msra.mxu0 0.0
        %3193 = vmatprep.subr.mxu0 0.0
        %3194 = vmatpush1.msra.mxu0 0.0
        %3195 = vmatprep.subr.mxu0 0.0
        %3196 = vmatpush1.msra.mxu0 0.0
        %3197 = vmatprep.subr.mxu0 0.0
        %3198 = vmatpush1.msra.mxu0 0.0
        %3199 = vmatprep.subr.mxu0 0.0
        %3200 = vmatpush1.msra.mxu0 0.0
        %3201 = vmatprep.subr.mxu0 0.0
        %3202 = vmatpush1.msra.mxu0 0.0
        %3203 = vmatprep.subr.mxu0 0.0
        %3204 = vmatpush1.msra.mxu0 0.0
        %3205 = vmatprep.subr.mxu0 0.0
        %3206 = vmatpush1.msra.mxu0 0.0
        %3207 = vmatprep.subr.mxu0 0.0
        %3208 = vmatpush1.msra.mxu0 0.0
        %3209 = vmatprep.subr.mxu0 0.0
        %3210 = vmatpush1.msra.mxu0 0.0
        %3211 = vmatprep.subr.mxu0 0.0
        %3212 = vmatpush1.msra.mxu0 0.0
        %3213 = vmatprep.subr.mxu0 0.0
        %3214 = vmatpush1.msra.mxu0 0.0
        %3215 = vmatprep.subr.mxu0 0.0
        %3216 = vmatpush1.msra.mxu0 0.0
        %3217 = vmatprep.subr.mxu0 0.0
        %3218 = vmatpush1.msra.mxu0 0.0
        %3219 = vmatprep.subr.mxu0 0.0
        %3220 = vmatpush1.msra.mxu0 0.0
        %3221 = vmatprep.subr.mxu0 0.0
        %3222 = vmatpush1.msra.mxu0 0.0
        %3223 = vmatprep.subr.mxu0 0.0
        %3224 = vmatpush1.msra.mxu0 0.0
        %3225 = vmatprep.subr.mxu0 0.0
        %3226 = vmatpush1.msra.mxu0 0.0
        %3227 = vmatprep.subr.mxu0 0.0
        %3228 = vmatpush1.msra.mxu0 0.0
        %3229 = vmatprep.subr.mxu0 0.0
        %3230 = vmatpush1.msra.mxu0 0.0
        %3231 = vmatprep.subr.mxu0 0.0
        %3232 = vmatpush1.msra.mxu0 0.0
        %3233 = vmatprep.subr.mxu0 0.0
        %3234 = vmatpush1.msra.mxu0 0.0
        %3235 = vmatprep.subr.mxu0 0.0
        %3236 = vmatpush1.msra.mxu0 0.0
        %3237 = vmatprep.subr.mxu0 0.0
        %3238 = vmatpush1.msra.mxu0 0.0
        %3239 = vmatprep.subr.mxu0 0.0
        %3240 = vmatpush1.msra.mxu0 0.0
        %3241 = vmatprep.subr.mxu0 0.0
        %3242 = vmatpush1.msra.mxu0 0.0
        %3243 = vmatprep.subr.mxu0 0.0
        %3244 = vmatpush1.msra.mxu0 0.0
        %3245 = vmatprep.subr.mxu0 0.0
        %3246 = vmatpush1.msra.mxu0 0.0
        %3247 = vmatprep.mubr.f32.mxu0 0.0
        %3248 = vmatmul.mubr.f32.gmra.mrb[0].mxu0 %v3181
        %v3249 = vpop.f32.mrb[0].mxu0
        %v3250 = vadd.f32 0.0, %v3249
        %v3251 = vpop.f32.mrb[0].mxu0
        %3252 = vdwg.mxu0
        %v3253 = vadd.f32 %v3103, %v3250
        %v3254 = vtanh.pop %v3253
        %v3255 = vsel %vm1757, %v3254, %v3098
        %3256 = vst.msk [vmem:[%s3101] sm:$0xff] %vm1069, %v3178
        %3257 = vst.msk [vmem:[%s3101 + $0x8] sm:$0xff] %vm1069, %v3254
        %s3258 = scalar_lea.vmem [#allocation3], 48
        %v3259 = vld [vmem:[%s3258] sm:$0xff]
        %v3260 = vld [vmem:[%s3258 + $0x8] sm:$0xff]
        %v3262 = vsel %vm1069, %v3179, 0
        %3264 = vmatprep.subr.mxu0 0.0
        %3265 = vmatpush1.msra.mxu0 %v1328
        %3266 = vmatprep.subr.mxu0 0.0
        %3267 = vmatpush1.msra.mxu0 %v1329
        %3268 = vmatprep.subr.mxu0 0.0
        %3269 = vmatpush1.msra.mxu0 %v1330
        %3270 = vmatprep.subr.mxu0 0.0
        %3271 = vmatpush1.msra.mxu0 %v1331
        %3272 = vmatprep.subr.mxu0 0.0
        %3273 = vmatpush1.msra.mxu0 0.0
        %3274 = vmatprep.subr.mxu0 0.0
        %3275 = vmatpush1.msra.mxu0 0.0
        %3276 = vmatprep.subr.mxu0 0.0
        %3277 = vmatpush1.msra.mxu0 0.0
        %3278 = vmatprep.subr.mxu0 0.0
        %3279 = vmatpush1.msra.mxu0 0.0
        %3280 = vmatprep.subr.mxu0 0.0
        %3281 = vmatpush1.msra.mxu0 0.0
        %3282 = vmatprep.subr.mxu0 0.0
        %3283 = vmatpush1.msra.mxu0 0.0
        %3284 = vmatprep.subr.mxu0 0.0
        %3285 = vmatpush1.msra.mxu0 0.0
        %3286 = vmatprep.subr.mxu0 0.0
        %3287 = vmatpush1.msra.mxu0 0.0
        %3288 = vmatprep.subr.mxu0 0.0
        %3289 = vmatpush1.msra.mxu0 0.0
        %3290 = vmatprep.subr.mxu0 0.0
        %3291 = vmatpush1.msra.mxu0 0.0
        %3292 = vmatprep.subr.mxu0 0.0
        %3293 = vmatpush1.msra.mxu0 0.0
        %3294 = vmatprep.subr.mxu0 0.0
        %3295 = vmatpush1.msra.mxu0 0.0
        %3296 = vmatprep.subr.mxu0 0.0
        %3297 = vmatpush1.msra.mxu0 0.0
        %3298 = vmatprep.subr.mxu0 0.0
        %3299 = vmatpush1.msra.mxu0 0.0
        %3300 = vmatprep.subr.mxu0 0.0
        %3301 = vmatpush1.msra.mxu0 0.0
        %3302 = vmatprep.subr.mxu0 0.0
        %3303 = vmatpush1.msra.mxu0 0.0
        %3304 = vmatprep.subr.mxu0 0.0
        %3305 = vmatpush1.msra.mxu0 0.0
        %3306 = vmatprep.subr.mxu0 0.0
        %3307 = vmatpush1.msra.mxu0 0.0
        %3308 = vmatprep.subr.mxu0 0.0
        %3309 = vmatpush1.msra.mxu0 0.0
        %3310 = vmatprep.subr.mxu0 0.0
        %3311 = vmatpush1.msra.mxu0 0.0
        %3312 = vmatprep.subr.mxu0 0.0
        %3313 = vmatpush1.msra.mxu0 0.0
        %3314 = vmatprep.subr.mxu0 0.0
        %3315 = vmatpush1.msra.mxu0 0.0
        %3316 = vmatprep.subr.mxu0 0.0
        %3317 = vmatpush1.msra.mxu0 0.0
        %3318 = vmatprep.subr.mxu0 0.0
        %3319 = vmatpush1.msra.mxu0 0.0
        %3320 = vmatprep.subr.mxu0 0.0
        %3321 = vmatpush1.msra.mxu0 0.0
        %3322 = vmatprep.subr.mxu0 0.0
        %3323 = vmatpush1.msra.mxu0 0.0
        %3324 = vmatprep.subr.mxu0 0.0
        %3325 = vmatpush1.msra.mxu0 0.0
        %3326 = vmatprep.subr.mxu0 0.0
        %3327 = vmatpush1.msra.mxu0 0.0
        %3328 = vmatprep.mubr.f32.mxu0 0.0
        %3329 = vmatmul.mubr.f32.gmra.mrb[0].mxu0 %v3262
        %v3330 = vpop.f32.mrb[0].mxu0
        %v3331 = vadd.f32 0.0, %v3330
        %v3332 = vpop.f32.mrb[0].mxu0
        %3333 = vdwg.mxu0
        %v3334 = vadd.f32 %v3259, %v3331
        %v3335 = vtanh.pop %v3334
        %v3336 = vsel %vm1842, %v3335, %v3179
        %v3338 = vsel %vm1069, %v3255, 0
        %3340 = vmatprep.subr.mxu0 0.0
        %3341 = vmatpush1.msra.mxu0 %v1328
        %3342 = vmatprep.subr.mxu0 0.0
        %3343 = vmatpush1.msra.mxu0 %v1329
        %3344 = vmatprep.subr.mxu0 0.0
        %3345 = vmatpush1.msra.mxu0 %v1330
        %3346 = vmatprep.subr.mxu0 0.0
        %3347 = vmatpush1.msra.mxu0 %v1331
        %3348 = vmatprep.subr.mxu0 0.0
        %3349 = vmatpush1.msra.mxu0 0.0
        %3350 = vmatprep.subr.mxu0 0.0
        %3351 = vmatpush1.msra.mxu0 0.0
        %3352 = vmatprep.subr.mxu0 0.0
        %3353 = vmatpush1.msra.mxu0 0.0
        %3354 = vmatprep.subr.mxu0 0.0
        %3355 = vmatpush1.msra.mxu0 0.0
        %3356 = vmatprep.subr.mxu0 0.0
        %3357 = vmatpush1.msra.mxu0 0.0
        %3358 = vmatprep.subr.mxu0 0.0
        %3359 = vmatpush1.msra.mxu0 0.0
        %3360 = vmatprep.subr.mxu0 0.0
        %3361 = vmatpush1.msra.mxu0 0.0
        %3362 = vmatprep.subr.mxu0 0.0
        %3363 = vmatpush1.msra.mxu0 0.0
        %3364 = vmatprep.subr.mxu0 0.0
        %3365 = vmatpush1.msra.mxu0 0.0
        %3366 = vmatprep.subr.mxu0 0.0
        %3367 = vmatpush1.msra.mxu0 0.0
        %3368 = vmatprep.subr.mxu0 0.0
        %3369 = vmatpush1.msra.mxu0 0.0
        %3370 = vmatprep.subr.mxu0 0.0
        %3371 = vmatpush1.msra.mxu0 0.0
        %3372 = vmatprep.subr.mxu0 0.0
        %3373 = vmatpush1.msra.mxu0 0.0
        %3374 = vmatprep.subr.mxu0 0.0
        %3375 = vmatpush1.msra.mxu0 0.0
        %3376 = vmatprep.subr.mxu0 0.0
        %3377 = vmatpush1.msra.mxu0 0.0
        %3378 = vmatprep.subr.mxu0 0.0
        %3379 = vmatpush1.msra.mxu0 0.0
        %3380 = vmatprep.subr.mxu0 0.0
        %3381 = vmatpush1.msra.mxu0 0.0
        %3382 = vmatprep.subr.mxu0 0.0
        %3383 = vmatpush1.msra.mxu0 0.0
        %3384 = vmatprep.subr.mxu0 0.0
        %3385 = vmatpush1.msra.mxu0 0.0
        %3386 = vmatprep.subr.mxu0 0.0
        %3387 = vmatpush1.msra.mxu0 0.0
        %3388 = vmatprep.subr.mxu0 0.0
        %3389 = vmatpush1.msra.mxu0 0.0
        %3390 = vmatprep.subr.mxu0 0.0
        %3391 = vmatpush1.msra.mxu0 0.0
        %3392 = vmatprep.subr.mxu0 0.0
        %3393 = vmatpush1.msra.mxu0 0.0
        %3394 = vmatprep.subr.mxu0 0.0
        %3395 = vmatpush1.msra.mxu0 0.0
        %3396 = vmatprep.subr.mxu0 0.0
        %3397 = vmatpush1.msra.mxu0 0.0
        %3398 = vmatprep.subr.mxu0 0.0
        %3399 = vmatpush1.msra.mxu0 0.0
        %3400 = vmatprep.subr.mxu0 0.0
        %3401 = vmatpush1.msra.mxu0 0.0
        %3402 = vmatprep.subr.mxu0 0.0
        %3403 = vmatpush1.msra.mxu0 0.0
        %3404 = vmatprep.mubr.f32.mxu0 0.0
        %3405 = vmatmul.mubr.f32.gmra.mrb[0].mxu0 %v3338
        %v3406 = vpop.f32.mrb[0].mxu0
        %v3407 = vadd.f32 0.0, %v3406
        %v3408 = vpop.f32.mrb[0].mxu0
        %3409 = vdwg.mxu0
        %v3410 = vadd.f32 %v3260, %v3407
        %v3411 = vtanh.pop %v3410
        %v3412 = vsel %vm1924, %v3411, %v3255
        %3413 = vst.msk [vmem:[%s3258] sm:$0xff] %vm1069, %v3335
        %3414 = vst.msk [vmem:[%s3258 + $0x8] sm:$0xff] %vm1069, %v3411
        %s3415 = scalar_lea.vmem [#allocation3], 64
        %v3416 = vld [vmem:[%s3415] sm:$0xff]
        %v3417 = vld [vmem:[%s3415 + $0x8] sm:$0xff]
        %v3419 = vsel %vm1069, %v3336, 0
        %3421 = vmatprep.subr.mxu0 0.0
        %3422 = vmatpush1.msra.mxu0 %v1328
        %3423 = vmatprep.subr.mxu0 0.0
        %3424 = vmatpush1.msra.mxu0 %v1329
        %3425 = vmatprep.subr.mxu0 0.0
        %3426 = vmatpush1.msra.mxu0 %v1330
        %3427 = vmatprep.subr.mxu0 0.0
        %3428 = vmatpush1.msra.mxu0 %v1331
        %3429 = vmatprep.subr.mxu0 0.0
        %3430 = vmatpush1.msra.mxu0 0.0
        %3431 = vmatprep.subr.mxu0 0.0
        %3432 = vmatpush1.msra.mxu0 0.0
        %3433 = vmatprep.subr.mxu0 0.0
        %3434 = vmatpush1.msra.mxu0 0.0
        %3435 = vmatprep.subr.mxu0 0.0
        %3436 = vmatpush1.msra.mxu0 0.0
        %3437 = vmatprep.subr.mxu0 0.0
        %3438 = vmatpush1.msra.mxu0 0.0
        %3439 = vmatprep.subr.mxu0 0.0
        %3440 = vmatpush1.msra.mxu0 0.0
        %3441 = vmatprep.subr.mxu0 0.0
        %3442 = vmatpush1.msra.mxu0 0.0
        %3443 = vmatprep.subr.mxu0 0.0
        %3444 = vmatpush1.msra.mxu0 0.0
        %3445 = vmatprep.subr.mxu0 0.0
        %3446 = vmatpush1.msra.mxu0 0.0
        %3447 = vmatprep.subr.mxu0 0.0
        %3448 = vmatpush1.msra.mxu0 0.0
        %3449 = vmatprep.subr.mxu0 0.0
        %3450 = vmatpush1.msra.mxu0 0.0
        %3451 = vmatprep.subr.mxu0 0.0
        %3452 = vmatpush1.msra.mxu0 0.0
        %3453 = vmatprep.subr.mxu0 0.0
        %3454 = vmatpush1.msra.mxu0 0.0
        %3455 = vmatprep.subr.mxu0 0.0
        %3456 = vmatpush1.msra.mxu0 0.0
        %3457 = vmatprep.subr.mxu0 0.0
        %3458 = vmatpush1.msra.mxu0 0.0
        %3459 = vmatprep.subr.mxu0 0.0
        %3460 = vmatpush1.msra.mxu0 0.0
        %3461 = vmatprep.subr.mxu0 0.0
        %3462 = vmatpush1.msra.mxu0 0.0
        %3463 = vmatprep.subr.mxu0 0.0
        %3464 = vmatpush1.msra.mxu0 0.0
        %3465 = vmatprep.subr.mxu0 0.0
        %3466 = vmatpush1.msra.mxu0 0.0
        %3467 = vmatprep.subr.mxu0 0.0
        %3468 = vmatpush1.msra.mxu0 0.0
        %3469 = vmatprep.subr.mxu0 0.0
        %3470 = vmatpush1.msra.mxu0 0.0
        %3471 = vmatprep.subr.mxu0 0.0
        %3472 = vmatpush1.msra.mxu0 0.0
        %3473 = vmatprep.subr.mxu0 0.0
        %3474 = vmatpush1.msra.mxu0 0.0
        %3475 = vmatprep.subr.mxu0 0.0
        %3476 = vmatpush1.msra.mxu0 0.0
        %3477 = vmatprep.subr.mxu0 0.0
        %3478 = vmatpush1.msra.mxu0 0.0
        %3479 = vmatprep.subr.mxu0 0.0
        %3480 = vmatpush1.msra.mxu0 0.0
        %3481 = vmatprep.subr.mxu0 0.0
        %3482 = vmatpush1.msra.mxu0 0.0
        %3483 = vmatprep.subr.mxu0 0.0
        %3484 = vmatpush1.msra.mxu0 0.0
        %3485 = vmatprep.mubr.f32.mxu0 0.0
        %3486 = vmatmul.mubr.f32.gmra.mrb[0].mxu0 %v3419
        %v3487 = vpop.f32.mrb[0].mxu0
        %v3488 = vadd.f32 0.0, %v3487
        %v3489 = vpop.f32.mrb[0].mxu0
        %3490 = vdwg.mxu0
        %v3491 = vadd.f32 %v3416, %v3488
        %v3492 = vtanh.pop %v3491
        %v3493 = vsel %vm2009, %v3492, %v3336
        %v3495 = vsel %vm1069, %v3412, 0
        %3497 = vmatprep.subr.mxu0 0.0
        %3498 = vmatpush1.msra.mxu0 %v1328
        %3499 = vmatprep.subr.mxu0 0.0
        %3500 = vmatpush1.msra.mxu0 %v1329
        %3501 = vmatprep.subr.mxu0 0.0
        %3502 = vmatpush1.msra.mxu0 %v1330
        %3503 = vmatprep.subr.mxu0 0.0
        %3504 = vmatpush1.msra.mxu0 %v1331
        %3505 = vmatprep.subr.mxu0 0.0
        %3506 = vmatpush1.msra.mxu0 0.0
        %3507 = vmatprep.subr.mxu0 0.0
        %3508 = vmatpush1.msra.mxu0 0.0
        %3509 = vmatprep.subr.mxu0 0.0
        %3510 = vmatpush1.msra.mxu0 0.0
        %3511 = vmatprep.subr.mxu0 0.0
        %3512 = vmatpush1.msra.mxu0 0.0
        %3513 = vmatprep.subr.mxu0 0.0
        %3514 = vmatpush1.msra.mxu0 0.0
        %3515 = vmatprep.subr.mxu0 0.0
        %3516 = vmatpush1.msra.mxu0 0.0
        %3517 = vmatprep.subr.mxu0 0.0
        %3518 = vmatpush1.msra.mxu0 0.0
        %3519 = vmatprep.subr.mxu0 0.0
        %3520 = vmatpush1.msra.mxu0 0.0
        %3521 = vmatprep.subr.mxu0 0.0
        %3522 = vmatpush1.msra.mxu0 0.0
        %3523 = vmatprep.subr.mxu0 0.0
        %3524 = vmatpush1.msra.mxu0 0.0
        %3525 = vmatprep.subr.mxu0 0.0
        %3526 = vmatpush1.msra.mxu0 0.0
        %3527 = vmatprep.subr.mxu0 0.0
        %3528 = vmatpush1.msra.mxu0 0.0
        %3529 = vmatprep.subr.mxu0 0.0
        %3530 = vmatpush1.msra.mxu0 0.0
        %3531 = vmatprep.subr.mxu0 0.0
        %3532 = vmatpush1.msra.mxu0 0.0
        %3533 = vmatprep.subr.mxu0 0.0
        %3534 = vmatpush1.msra.mxu0 0.0
        %3535 = vmatprep.subr.mxu0 0.0
        %3536 = vmatpush1.msra.mxu0 0.0
        %3537 = vmatprep.subr.mxu0 0.0
        %3538 = vmatpush1.msra.mxu0 0.0
        %3539 = vmatprep.subr.mxu0 0.0
        %3540 = vmatpush1.msra.mxu0 0.0
        %3541 = vmatprep.subr.mxu0 0.0
        %3542 = vmatpush1.msra.mxu0 0.0
        %3543 = vmatprep.subr.mxu0 0.0
        %3544 = vmatpush1.msra.mxu0 0.0
        %3545 = vmatprep.subr.mxu0 0.0
        %3546 = vmatpush1.msra.mxu0 0.0
        %3547 = vmatprep.subr.mxu0 0.0
        %3548 = vmatpush1.msra.mxu0 0.0
        %3549 = vmatprep.subr.mxu0 0.0
        %3550 = vmatpush1.msra.mxu0 0.0
        %3551 = vmatprep.subr.mxu0 0.0
        %3552 = vmatpush1.msra.mxu0 0.0
        %3553 = vmatprep.subr.mxu0 0.0
        %3554 = vmatpush1.msra.mxu0 0.0
        %3555 = vmatprep.subr.mxu0 0.0
        %3556 = vmatpush1.msra.mxu0 0.0
        %3557 = vmatprep.subr.mxu0 0.0
        %3558 = vmatpush1.msra.mxu0 0.0
        %3559 = vmatprep.subr.mxu0 0.0
        %3560 = vmatpush1.msra.mxu0 0.0
        %3561 = vmatprep.mubr.f32.mxu0 0.0
        %3562 = vmatmul.mubr.f32.gmra.mrb[0].mxu0 %v3495
        %v3563 = vpop.f32.mrb[0].mxu0
        %v3564 = vadd.f32 0.0, %v3563
        %v3565 = vpop.f32.mrb[0].mxu0
        %3566 = vdwg.mxu0
        %v3567 = vadd.f32 %v3417, %v3564
        %v3568 = vtanh.pop %v3567
        %v3569 = vsel %vm2091, %v3568, %v3412
        %3570 = vst.msk [vmem:[%s3415] sm:$0xff] %vm1069, %v3492
        %3571 = vst.msk [vmem:[%s3415 + $0x8] sm:$0xff] %vm1069, %v3568
        %s3572 = scalar_lea.vmem [#allocation3], 80
        %v3573 = vld [vmem:[%s3572] sm:$0xff]
        %v3574 = vld [vmem:[%s3572 + $0x8] sm:$0xff]
        %v3576 = vsel %vm1069, %v3493, 0
        %3578 = vmatprep.subr.mxu0 0.0
        %3579 = vmatpush1.msra.mxu0 %v1328
        %3580 = vmatprep.subr.mxu0 0.0
        %3581 = vmatpush1.msra.mxu0 %v1329
        %3582 = vmatprep.subr.mxu0 0.0
        %3583 = vmatpush1.msra.mxu0 %v1330
        %3584 = vmatprep.subr.mxu0 0.0
        %3585 = vmatpush1.msra.mxu0 %v1331
        %3586 = vmatprep.subr.mxu0 0.0
        %3587 = vmatpush1.msra.mxu0 0.0
        %3588 = vmatprep.subr.mxu0 0.0
        %3589 = vmatpush1.msra.mxu0 0.0
        %3590 = vmatprep.subr.mxu0 0.0
        %3591 = vmatpush1.msra.mxu0 0.0
        %3592 = vmatprep.subr.mxu0 0.0
        %3593 = vmatpush1.msra.mxu0 0.0
        %3594 = vmatprep.subr.mxu0 0.0
        %3595 = vmatpush1.msra.mxu0 0.0
        %3596 = vmatprep.subr.mxu0 0.0
        %3597 = vmatpush1.msra.mxu0 0.0
        %3598 = vmatprep.subr.mxu0 0.0
        %3599 = vmatpush1.msra.mxu0 0.0
        %3600 = vmatprep.subr.mxu0 0.0
        %3601 = vmatpush1.msra.mxu0 0.0
        %3602 = vmatprep.subr.mxu0 0.0
        %3603 = vmatpush1.msra.mxu0 0.0
        %3604 = vmatprep.subr.mxu0 0.0
        %3605 = vmatpush1.msra.mxu0 0.0
        %3606 = vmatprep.subr.mxu0 0.0
        %3607 = vmatpush1.msra.mxu0 0.0
        %3608 = vmatprep.subr.mxu0 0.0
        %3609 = vmatpush1.msra.mxu0 0.0
        %3610 = vmatprep.subr.mxu0 0.0
        %3611 = vmatpush1.msra.mxu0 0.0
        %3612 = vmatprep.subr.mxu0 0.0
        %3613 = vmatpush1.msra.mxu0 0.0
        %3614 = vmatprep.subr.mxu0 0.0
        %3615 = vmatpush1.msra.mxu0 0.0
        %3616 = vmatprep.subr.mxu0 0.0
        %3617 = vmatpush1.msra.mxu0 0.0
        %3618 = vmatprep.subr.mxu0 0.0
        %3619 = vmatpush1.msra.mxu0 0.0
        %3620 = vmatprep.subr.mxu0 0.0
        %3621 = vmatpush1.msra.mxu0 0.0
        %3622 = vmatprep.subr.mxu0 0.0
        %3623 = vmatpush1.msra.mxu0 0.0
        %3624 = vmatprep.subr.mxu0 0.0
        %3625 = vmatpush1.msra.mxu0 0.0
        %3626 = vmatprep.subr.mxu0 0.0
        %3627 = vmatpush1.msra.mxu0 0.0
        %3628 = vmatprep.subr.mxu0 0.0
        %3629 = vmatpush1.msra.mxu0 0.0
        %3630 = vmatprep.subr.mxu0 0.0
        %3631 = vmatpush1.msra.mxu0 0.0
        %3632 = vmatprep.subr.mxu0 0.0
        %3633 = vmatpush1.msra.mxu0 0.0
        %3634 = vmatprep.subr.mxu0 0.0
        %3635 = vmatpush1.msra.mxu0 0.0
        %3636 = vmatprep.subr.mxu0 0.0
        %3637 = vmatpush1.msra.mxu0 0.0
        %3638 = vmatprep.subr.mxu0 0.0
        %3639 = vmatpush1.msra.mxu0 0.0
        %3640 = vmatprep.subr.mxu0 0.0
        %3641 = vmatpush1.msra.mxu0 0.0
        %3642 = vmatprep.mubr.f32.mxu0 0.0
        %3643 = vmatmul.mubr.f32.gmra.mrb[0].mxu0 %v3576
        %v3644 = vpop.f32.mrb[0].mxu0
        %v3645 = vadd.f32 0.0, %v3644
        %v3646 = vpop.f32.mrb[0].mxu0
        %3647 = vdwg.mxu0
        %v3648 = vadd.f32 %v3573, %v3645
        %v3649 = vtanh.pop %v3648
        %v3650 = vsel %vm2176, %v3649, %v3493
        %v3652 = vsel %vm1069, %v3569, 0
        %3654 = vmatprep.subr.mxu0 0.0
        %3655 = vmatpush1.msra.mxu0 %v1328
        %3656 = vmatprep.subr.mxu0 0.0
        %3657 = vmatpush1.msra.mxu0 %v1329
        %3658 = vmatprep.subr.mxu0 0.0
        %3659 = vmatpush1.msra.mxu0 %v1330
        %3660 = vmatprep.subr.mxu0 0.0
        %3661 = vmatpush1.msra.mxu0 %v1331
        %3662 = vmatprep.subr.mxu0 0.0
        %3663 = vmatpush1.msra.mxu0 0.0
        %3664 = vmatprep.subr.mxu0 0.0
        %3665 = vmatpush1.msra.mxu0 0.0
        %3666 = vmatprep.subr.mxu0 0.0
        %3667 = vmatpush1.msra.mxu0 0.0
        %3668 = vmatprep.subr.mxu0 0.0
        %3669 = vmatpush1.msra.mxu0 0.0
        %3670 = vmatprep.subr.mxu0 0.0
        %3671 = vmatpush1.msra.mxu0 0.0
        %3672 = vmatprep.subr.mxu0 0.0
        %3673 = vmatpush1.msra.mxu0 0.0
        %3674 = vmatprep.subr.mxu0 0.0
        %3675 = vmatpush1.msra.mxu0 0.0
        %3676 = vmatprep.subr.mxu0 0.0
        %3677 = vmatpush1.msra.mxu0 0.0
        %3678 = vmatprep.subr.mxu0 0.0
        %3679 = vmatpush1.msra.mxu0 0.0
        %3680 = vmatprep.subr.mxu0 0.0
        %3681 = vmatpush1.msra.mxu0 0.0
        %3682 = vmatprep.subr.mxu0 0.0
        %3683 = vmatpush1.msra.mxu0 0.0
        %3684 = vmatprep.subr.mxu0 0.0
        %3685 = vmatpush1.msra.mxu0 0.0
        %3686 = vmatprep.subr.mxu0 0.0
        %3687 = vmatpush1.msra.mxu0 0.0
        %3688 = vmatprep.subr.mxu0 0.0
        %3689 = vmatpush1.msra.mxu0 0.0
        %3690 = vmatprep.subr.mxu0 0.0
        %3691 = vmatpush1.msra.mxu0 0.0
        %3692 = vmatprep.subr.mxu0 0.0
        %3693 = vmatpush1.msra.mxu0 0.0
        %3694 = vmatprep.subr.mxu0 0.0
        %3695 = vmatpush1.msra.mxu0 0.0
        %3696 = vmatprep.subr.mxu0 0.0
        %3697 = vmatpush1.msra.mxu0 0.0
        %3698 = vmatprep.subr.mxu0 0.0
        %3699 = vmatpush1.msra.mxu0 0.0
        %3700 = vmatprep.subr.mxu0 0.0
        %3701 = vmatpush1.msra.mxu0 0.0
        %3702 = vmatprep.subr.mxu0 0.0
        %3703 = vmatpush1.msra.mxu0 0.0
        %3704 = vmatprep.subr.mxu0 0.0
        %3705 = vmatpush1.msra.mxu0 0.0
        %3706 = vmatprep.subr.mxu0 0.0
        %3707 = vmatpush1.msra.mxu0 0.0
        %3708 = vmatprep.subr.mxu0 0.0
        %3709 = vmatpush1.msra.mxu0 0.0
        %3710 = vmatprep.subr.mxu0 0.0
        %3711 = vmatpush1.msra.mxu0 0.0
        %3712 = vmatprep.subr.mxu0 0.0
        %3713 = vmatpush1.msra.mxu0 0.0
        %3714 = vmatprep.subr.mxu0 0.0
        %3715 = vmatpush1.msra.mxu0 0.0
        %3716 = vmatprep.subr.mxu0 0.0
        %3717 = vmatpush1.msra.mxu0 0.0
        %3718 = vmatprep.mubr.f32.mxu0 0.0
        %3719 = vmatmul.mubr.f32.gmra.mrb[0].mxu0 %v3652
        %v3720 = vpop.f32.mrb[0].mxu0
        %v3721 = vadd.f32 0.0, %v3720
        %v3722 = vpop.f32.mrb[0].mxu0
        %3723 = vdwg.mxu0
        %v3724 = vadd.f32 %v3574, %v3721
        %v3725 = vtanh.pop %v3724
        %v3726 = vsel %vm2258, %v3725, %v3569
        %3727 = vst.msk [vmem:[%s3572] sm:$0xff] %vm1069, %v3649
        %3728 = vst.msk [vmem:[%s3572 + $0x8] sm:$0xff] %vm1069, %v3725
        %s3729 = scalar_lea.vmem [#allocation3], 96
        %v3730 = vld [vmem:[%s3729] sm:$0xff]
        %v3731 = vld [vmem:[%s3729 + $0x8] sm:$0xff]
        %v3733 = vsel %vm1069, %v3650, 0
        %3735 = vmatprep.subr.mxu0 0.0
        %3736 = vmatpush1.msra.mxu0 %v1328
        %3737 = vmatprep.subr.mxu0 0.0
        %3738 = vmatpush1.msra.mxu0 %v1329
        %3739 = vmatprep.subr.mxu0 0.0
        %3740 = vmatpush1.msra.mxu0 %v1330
        %3741 = vmatprep.subr.mxu0 0.0
        %3742 = vmatpush1.msra.mxu0 %v1331
        %3743 = vmatprep.subr.mxu0 0.0
        %3744 = vmatpush1.msra.mxu0 0.0
        %3745 = vmatprep.subr.mxu0 0.0
        %3746 = vmatpush1.msra.mxu0 0.0
        %3747 = vmatprep.subr.mxu0 0.0
        %3748 = vmatpush1.msra.mxu0 0.0
        %3749 = vmatprep.subr.mxu0 0.0
        %3750 = vmatpush1.msra.mxu0 0.0
        %3751 = vmatprep.subr.mxu0 0.0
        %3752 = vmatpush1.msra.mxu0 0.0
        %3753 = vmatprep.subr.mxu0 0.0
        %3754 = vmatpush1.msra.mxu0 0.0
        %3755 = vmatprep.subr.mxu0 0.0
        %3756 = vmatpush1.msra.mxu0 0.0
        %3757 = vmatprep.subr.mxu0 0.0
        %3758 = vmatpush1.msra.mxu0 0.0
        %3759 = vmatprep.subr.mxu0 0.0
        %3760 = vmatpush1.msra.mxu0 0.0
        %3761 = vmatprep.subr.mxu0 0.0
        %3762 = vmatpush1.msra.mxu0 0.0
        %3763 = vmatprep.subr.mxu0 0.0
        %3764 = vmatpush1.msra.mxu0 0.0
        %3765 = vmatprep.subr.mxu0 0.0
        %3766 = vmatpush1.msra.mxu0 0.0
        %3767 = vmatprep.subr.mxu0 0.0
        %3768 = vmatpush1.msra.mxu0 0.0
        %3769 = vmatprep.subr.mxu0 0.0
        %3770 = vmatpush1.msra.mxu0 0.0
        %3771 = vmatprep.subr.mxu0 0.0
        %3772 = vmatpush1.msra.mxu0 0.0
        %3773 = vmatprep.subr.mxu0 0.0
        %3774 = vmatpush1.msra.mxu0 0.0
        %3775 = vmatprep.subr.mxu0 0.0
        %3776 = vmatpush1.msra.mxu0 0.0
        %3777 = vmatprep.subr.mxu0 0.0
        %3778 = vmatpush1.msra.mxu0 0.0
        %3779 = vmatprep.subr.mxu0 0.0
        %3780 = vmatpush1.msra.mxu0 0.0
        %3781 = vmatprep.subr.mxu0 0.0
        %3782 = vmatpush1.msra.mxu0 0.0
        %3783 = vmatprep.subr.mxu0 0.0
        %3784 = vmatpush1.msra.mxu0 0.0
        %3785 = vmatprep.subr.mxu0 0.0
        %3786 = vmatpush1.msra.mxu0 0.0
        %3787 = vmatprep.subr.mxu0 0.0
        %3788 = vmatpush1.msra.mxu0 0.0
        %3789 = vmatprep.subr.mxu0 0.0
        %3790 = vmatpush1.msra.mxu0 0.0
        %3791 = vmatprep.subr.mxu0 0.0
        %3792 = vmatpush1.msra.mxu0 0.0
        %3793 = vmatprep.subr.mxu0 0.0
        %3794 = vmatpush1.msra.mxu0 0.0
        %3795 = vmatprep.subr.mxu0 0.0
        %3796 = vmatpush1.msra.mxu0 0.0
        %3797 = vmatprep.subr.mxu0 0.0
        %3798 = vmatpush1.msra.mxu0 0.0
        %3799 = vmatprep.mubr.f32.mxu0 0.0
        %3800 = vmatmul.mubr.f32.gmra.mrb[0].mxu0 %v3733
        %v3801 = vpop.f32.mrb[0].mxu0
        %v3802 = vadd.f32 0.0, %v3801
        %v3803 = vpop.f32.mrb[0].mxu0
        %3804 = vdwg.mxu0
        %v3805 = vadd.f32 %v3730, %v3802
        %v3806 = vtanh.pop %v3805
        %v3807 = vsel %vm2343, %v3806, %v3650
        %v3809 = vsel %vm1069, %v3726, 0
        %3811 = vmatprep.subr.mxu0 0.0
        %3812 = vmatpush1.msra.mxu0 %v1328
        %3813 = vmatprep.subr.mxu0 0.0
        %3814 = vmatpush1.msra.mxu0 %v1329
        %3815 = vmatprep.subr.mxu0 0.0
        %3816 = vmatpush1.msra.mxu0 %v1330
        %3817 = vmatprep.subr.mxu0 0.0
        %3818 = vmatpush1.msra.mxu0 %v1331
        %3819 = vmatprep.subr.mxu0 0.0
        %3820 = vmatpush1.msra.mxu0 0.0
        %3821 = vmatprep.subr.mxu0 0.0
        %3822 = vmatpush1.msra.mxu0 0.0
        %3823 = vmatprep.subr.mxu0 0.0
        %3824 = vmatpush1.msra.mxu0 0.0
        %3825 = vmatprep.subr.mxu0 0.0
        %3826 = vmatpush1.msra.mxu0 0.0
        %3827 = vmatprep.subr.mxu0 0.0
        %3828 = vmatpush1.msra.mxu0 0.0
        %3829 = vmatprep.subr.mxu0 0.0
        %3830 = vmatpush1.msra.mxu0 0.0
        %3831 = vmatprep.subr.mxu0 0.0
        %3832 = vmatpush1.msra.mxu0 0.0
        %3833 = vmatprep.subr.mxu0 0.0
        %3834 = vmatpush1.msra.mxu0 0.0
        %3835 = vmatprep.subr.mxu0 0.0
        %3836 = vmatpush1.msra.mxu0 0.0
        %3837 = vmatprep.subr.mxu0 0.0
        %3838 = vmatpush1.msra.mxu0 0.0
        %3839 = vmatprep.subr.mxu0 0.0
        %3840 = vmatpush1.msra.mxu0 0.0
        %3841 = vmatprep.subr.mxu0 0.0
        %3842 = vmatpush1.msra.mxu0 0.0
        %3843 = vmatprep.subr.mxu0 0.0
        %3844 = vmatpush1.msra.mxu0 0.0
        %3845 = vmatprep.subr.mxu0 0.0
        %3846 = vmatpush1.msra.mxu0 0.0
        %3847 = vmatprep.subr.mxu0 0.0
        %3848 = vmatpush1.msra.mxu0 0.0
        %3849 = vmatprep.subr.mxu0 0.0
        %3850 = vmatpush1.msra.mxu0 0.0
        %3851 = vmatprep.subr.mxu0 0.0
        %3852 = vmatpush1.msra.mxu0 0.0
        %3853 = vmatprep.subr.mxu0 0.0
        %3854 = vmatpush1.msra.mxu0 0.0
        %3855 = vmatprep.subr.mxu0 0.0
        %3856 = vmatpush1.msra.mxu0 0.0
        %3857 = vmatprep.subr.mxu0 0.0
        %3858 = vmatpush1.msra.mxu0 0.0
        %3859 = vmatprep.subr.mxu0 0.0
        %3860 = vmatpush1.msra.mxu0 0.0
        %3861 = vmatprep.subr.mxu0 0.0
        %3862 = vmatpush1.msra.mxu0 0.0
        %3863 = vmatprep.subr.mxu0 0.0
        %3864 = vmatpush1.msra.mxu0 0.0
        %3865 = vmatprep.subr.mxu0 0.0
        %3866 = vmatpush1.msra.mxu0 0.0
        %3867 = vmatprep.subr.mxu0 0.0
        %3868 = vmatpush1.msra.mxu0 0.0
        %3869 = vmatprep.subr.mxu0 0.0
        %3870 = vmatpush1.msra.mxu0 0.0
        %3871 = vmatprep.subr.mxu0 0.0
        %3872 = vmatpush1.msra.mxu0 0.0
        %3873 = vmatprep.subr.mxu0 0.0
        %3874 = vmatpush1.msra.mxu0 0.0
        %3875 = vmatprep.mubr.f32.mxu0 0.0
        %3876 = vmatmul.mubr.f32.gmra.mrb[0].mxu0 %v3809
        %v3877 = vpop.f32.mrb[0].mxu0
        %v3878 = vadd.f32 0.0, %v3877
        %v3879 = vpop.f32.mrb[0].mxu0
        %3880 = vdwg.mxu0
        %v3881 = vadd.f32 %v3731, %v3878
        %v3882 = vtanh.pop %v3881
        %v3883 = vsel %vm2425, %v3882, %v3726
        %3884 = vst.msk [vmem:[%s3729] sm:$0xff] %vm1069, %v3806
        %3885 = vst.msk [vmem:[%s3729 + $0x8] sm:$0xff] %vm1069, %v3882
        %s3886 = scalar_lea.vmem [#allocation3], 112
        %v3887 = vld [vmem:[%s3886] sm:$0xff]
        %v3888 = vld [vmem:[%s3886 + $0x8] sm:$0xff]
        %v3890 = vsel %vm1069, %v3807, 0
        %3892 = vmatprep.subr.mxu0 0.0
        %3893 = vmatpush1.msra.mxu0 %v1328
        %3894 = vmatprep.subr.mxu0 0.0
        %3895 = vmatpush1.msra.mxu0 %v1329
        %3896 = vmatprep.subr.mxu0 0.0
        %3897 = vmatpush1.msra.mxu0 %v1330
        %3898 = vmatprep.subr.mxu0 0.0
        %3899 = vmatpush1.msra.mxu0 %v1331
        %3900 = vmatprep.subr.mxu0 0.0
        %3901 = vmatpush1.msra.mxu0 0.0
        %3902 = vmatprep.subr.mxu0 0.0
        %3903 = vmatpush1.msra.mxu0 0.0
        %3904 = vmatprep.subr.mxu0 0.0
        %3905 = vmatpush1.msra.mxu0 0.0
        %3906 = vmatprep.subr.mxu0 0.0
        %3907 = vmatpush1.msra.mxu0 0.0
        %3908 = vmatprep.subr.mxu0 0.0
        %3909 = vmatpush1.msra.mxu0 0.0
        %3910 = vmatprep.subr.mxu0 0.0
        %3911 = vmatpush1.msra.mxu0 0.0
        %3912 = vmatprep.subr.mxu0 0.0
        %3913 = vmatpush1.msra.mxu0 0.0
        %3914 = vmatprep.subr.mxu0 0.0
        %3915 = vmatpush1.msra.mxu0 0.0
        %3916 = vmatprep.subr.mxu0 0.0
        %3917 = vmatpush1.msra.mxu0 0.0
        %3918 = vmatprep.subr.mxu0 0.0
        %3919 = vmatpush1.msra.mxu0 0.0
        %3920 = vmatprep.subr.mxu0 0.0
        %3921 = vmatpush1.msra.mxu0 0.0
        %3922 = vmatprep.subr.mxu0 0.0
        %3923 = vmatpush1.msra.mxu0 0.0
        %3924 = vmatprep.subr.mxu0 0.0
        %3925 = vmatpush1.msra.mxu0 0.0
        %3926 = vmatprep.subr.mxu0 0.0
        %3927 = vmatpush1.msra.mxu0 0.0
        %3928 = vmatprep.subr.mxu0 0.0
        %3929 = vmatpush1.msra.mxu0 0.0
        %3930 = vmatprep.subr.mxu0 0.0
        %3931 = vmatpush1.msra.mxu0 0.0
        %3932 = vmatprep.subr.mxu0 0.0
        %3933 = vmatpush1.msra.mxu0 0.0
        %3934 = vmatprep.subr.mxu0 0.0
        %3935 = vmatpush1.msra.mxu0 0.0
        %3936 = vmatprep.subr.mxu0 0.0
        %3937 = vmatpush1.msra.mxu0 0.0
        %3938 = vmatprep.subr.mxu0 0.0
        %3939 = vmatpush1.msra.mxu0 0.0
        %3940 = vmatprep.subr.mxu0 0.0
        %3941 = vmatpush1.msra.mxu0 0.0
        %3942 = vmatprep.subr.mxu0 0.0
        %3943 = vmatpush1.msra.mxu0 0.0
        %3944 = vmatprep.subr.mxu0 0.0
        %3945 = vmatpush1.msra.mxu0 0.0
        %3946 = vmatprep.subr.mxu0 0.0
        %3947 = vmatpush1.msra.mxu0 0.0
        %3948 = vmatprep.subr.mxu0 0.0
        %3949 = vmatpush1.msra.mxu0 0.0
        %3950 = vmatprep.subr.mxu0 0.0
        %3951 = vmatpush1.msra.mxu0 0.0
        %3952 = vmatprep.subr.mxu0 0.0
        %3953 = vmatpush1.msra.mxu0 0.0
        %3954 = vmatprep.subr.mxu0 0.0
        %3955 = vmatpush1.msra.mxu0 0.0
        %3956 = vmatprep.mubr.f32.mxu0 0.0
        %3957 = vmatmul.mubr.f32.gmra.mrb[0].mxu0 %v3890
        %v3958 = vpop.f32.mrb[0].mxu0
        %v3959 = vadd.f32 0.0, %v3958
        %v3960 = vpop.f32.mrb[0].mxu0
        %3961 = vdwg.mxu0
        %v3962 = vadd.f32 %v3887, %v3959
        %v3963 = vtanh.pop %v3962
        %v3965 = vsel %vm1069, %v3883, 0
        %3967 = vmatprep.subr.mxu0 0.0
        %3968 = vmatpush1.msra.mxu0 %v1328
        %3969 = vmatprep.subr.mxu0 0.0
        %3970 = vmatpush1.msra.mxu0 %v1329
        %3971 = vmatprep.subr.mxu0 0.0
        %3972 = vmatpush1.msra.mxu0 %v1330
        %3973 = vmatprep.subr.mxu0 0.0
        %3974 = vmatpush1.msra.mxu0 %v1331
        %3975 = vmatprep.subr.mxu0 0.0
        %3976 = vmatpush1.msra.mxu0 0.0
        %3977 = vmatprep.subr.mxu0 0.0
        %3978 = vmatpush1.msra.mxu0 0.0
        %3979 = vmatprep.subr.mxu0 0.0
        %3980 = vmatpush1.msra.mxu0 0.0
        %3981 = vmatprep.subr.mxu0 0.0
        %3982 = vmatpush1.msra.mxu0 0.0
        %3983 = vmatprep.subr.mxu0 0.0
        %3984 = vmatpush1.msra.mxu0 0.0
        %3985 = vmatprep.subr.mxu0 0.0
        %3986 = vmatpush1.msra.mxu0 0.0
        %3987 = vmatprep.subr.mxu0 0.0
        %3988 = vmatpush1.msra.mxu0 0.0
        %3989 = vmatprep.subr.mxu0 0.0
        %3990 = vmatpush1.msra.mxu0 0.0
        %3991 = vmatprep.subr.mxu0 0.0
        %3992 = vmatpush1.msra.mxu0 0.0
        %3993 = vmatprep.subr.mxu0 0.0
        %3994 = vmatpush1.msra.mxu0 0.0
        %3995 = vmatprep.subr.mxu0 0.0
        %3996 = vmatpush1.msra.mxu0 0.0
        %3997 = vmatprep.subr.mxu0 0.0
        %3998 = vmatpush1.msra.mxu0 0.0
        %3999 = vmatprep.subr.mxu0 0.0
        %4000 = vmatpush1.msra.mxu0 0.0
        %4001 = vmatprep.subr.mxu0 0.0
        %4002 = vmatpush1.msra.mxu0 0.0
        %4003 = vmatprep.subr.mxu0 0.0
        %4004 = vmatpush1.msra.mxu0 0.0
        %4005 = vmatprep.subr.mxu0 0.0
        %4006 = vmatpush1.msra.mxu0 0.0
        %4007 = vmatprep.subr.mxu0 0.0
        %4008 = vmatpush1.msra.mxu0 0.0
        %4009 = vmatprep.subr.mxu0 0.0
        %4010 = vmatpush1.msra.mxu0 0.0
        %4011 = vmatprep.subr.mxu0 0.0
        %4012 = vmatpush1.msra.mxu0 0.0
        %4013 = vmatprep.subr.mxu0 0.0
        %4014 = vmatpush1.msra.mxu0 0.0
        %4015 = vmatprep.subr.mxu0 0.0
        %4016 = vmatpush1.msra.mxu0 0.0
        %4017 = vmatprep.subr.mxu0 0.0
        %4018 = vmatpush1.msra.mxu0 0.0
        %4019 = vmatprep.subr.mxu0 0.0
        %4020 = vmatpush1.msra.mxu0 0.0
        %4021 = vmatprep.subr.mxu0 0.0
        %4022 = vmatpush1.msra.mxu0 0.0
        %4023 = vmatprep.subr.mxu0 0.0
        %4024 = vmatpush1.msra.mxu0 0.0
        %4025 = vmatprep.subr.mxu0 0.0
        %4026 = vmatpush1.msra.mxu0 0.0
        %4027 = vmatprep.subr.mxu0 0.0
        %4028 = vmatpush1.msra.mxu0 0.0
        %4029 = vmatprep.subr.mxu0 0.0
        %4030 = vmatpush1.msra.mxu0 0.0
        %4031 = vmatprep.mubr.f32.mxu0 0.0
        %4032 = vmatmul.mubr.f32.gmra.mrb[0].mxu0 %v3965
        %v4033 = vpop.f32.mrb[0].mxu0
        %v4034 = vadd.f32 0.0, %v4033
        %v4035 = vpop.f32.mrb[0].mxu0
        %4036 = vdwg.mxu0
        %v4037 = vadd.f32 %v3888, %v4034
        %v4038 = vtanh.pop %v4037
        %4039 = vst.msk [vmem:[%s3886] sm:$0xff] %vm1069, %v3963
        %4040 = vst.msk [vmem:[%s3886 + $0x8] sm:$0xff] %vm1069, %v4038
        %v4041 = vld [vmem:[#allocation3] sm:$0xff]
        %v4042 = vld [vmem:[#allocation3 + $0x8] sm:$0xff]
        %v4043 = vld [vmem:[#allocation3 + $0x10] sm:$0xff]
        %v4044 = vld [vmem:[#allocation3 + $0x18] sm:$0xff]
        %v4045 = vld [vmem:[#allocation3 + $0x20] sm:$0xff]
        %v4046 = vld [vmem:[#allocation3 + $0x28] sm:$0xff]
        %v4047 = vld [vmem:[#allocation3 + $0x30] sm:$0xff]
        %v4048 = vld [vmem:[#allocation3 + $0x38] sm:$0xff]
        %v4049 = vld [vmem:[#allocation3 + $0x40] sm:$0xff]
        %v4050 = vld [vmem:[#allocation3 + $0x48] sm:$0xff]
        %v4051 = vld [vmem:[#allocation3 + $0x50] sm:$0xff]
        %v4052 = vld [vmem:[#allocation3 + $0x58] sm:$0xff]
        %v4053 = vld [vmem:[#allocation3 + $0x60] sm:$0xff]
        %v4054 = vld [vmem:[#allocation3 + $0x68] sm:$0xff]
        %v4055 = vld [vmem:[#allocation3 + $0x70] sm:$0xff]
        %v4056 = vld [vmem:[#allocation3 + $0x78] sm:$0xff]
        %v4057 = vld [vmem:[%s13] sm:$0xff]
        %v4058 = vld [vmem:[%s13 + $0x8] sm:$0xff]
        %v4059 = vld [vmem:[%s13 + $0x10] sm:$0xff]
        %v4060 = vld [vmem:[%s13 + $0x18] sm:$0xff]
        %v4061 = vld [vmem:[%s14] sm:$0x1]
        %v4063 = vlaneseq
        %v4064 = vshrl.u32 %v4063, 7
        %v4065 = vsub.s32 0, %v4064
        %v4066 = vrot.slane %v4061, %v4065
        %v4069 = vsel %vm1069, %v4041, 0
        %v4072 = vsel %vm1069, %v4042, 0
        %v4075 = vsel %vm1069, %v4043, 0
        %v4078 = vsel %vm1069, %v4044, 0
        %v4081 = vsel %vm1069, %v4045, 0
        %v4084 = vsel %vm1069, %v4046, 0
        %v4087 = vsel %vm1069, %v4047, 0
        %v4090 = vsel %vm1069, %v4048, 0
        %v4093 = vsel %vm1069, %v4049, 0
        %v4096 = vsel %vm1069, %v4050, 0
        %v4099 = vsel %vm1069, %v4051, 0
        %v4102 = vsel %vm1069, %v4052, 0
        %v4105 = vsel %vm1069, %v4053, 0
        %v4108 = vsel %vm1069, %v4054, 0
        %v4111 = vsel %vm1069, %v4055, 0
        %v4114 = vsel %vm1069, %v4056, 0
        %4116 = vmatprep.subr.mxu0 0.0
        %4117 = vmatpush1.msra.mxu0 %v4057
        %4118 = vmatprep.subr.mxu0 0.0
        %4119 = vmatpush1.msra.mxu0 %v4058
        %4120 = vmatprep.subr.mxu0 0.0
        %4121 = vmatpush1.msra.mxu0 %v4059
        %4122 = vmatprep.subr.mxu0 0.0
        %4123 = vmatpush1.msra.mxu0 %v4060
        %4124 = vmatprep.subr.mxu0 0.0
        %4125 = vmatpush1.msra.mxu0 0.0
        %4126 = vmatprep.subr.mxu0 0.0
        %4127 = vmatpush1.msra.mxu0 0.0
        %4128 = vmatprep.subr.mxu0 0.0
        %4129 = vmatpush1.msra.mxu0 0.0
        %4130 = vmatprep.subr.mxu0 0.0
        %4131 = vmatpush1.msra.mxu0 0.0
        %4132 = vmatprep.subr.mxu0 0.0
        %4133 = vmatpush1.msra.mxu0 0.0
        %4134 = vmatprep.subr.mxu0 0.0
        %4135 = vmatpush1.msra.mxu0 0.0
        %4136 = vmatprep.subr.mxu0 0.0
        %4137 = vmatpush1.msra.mxu0 0.0
        %4138 = vmatprep.subr.mxu0 0.0
        %4139 = vmatpush1.msra.mxu0 0.0
        %4140 = vmatprep.subr.mxu0 0.0
        %4141 = vmatpush1.msra.mxu0 0.0
        %4142 = vmatprep.subr.mxu0 0.0
        %4143 = vmatpush1.msra.mxu0 0.0
        %4144 = vmatprep.subr.mxu0 0.0
        %4145 = vmatpush1.msra.mxu0 0.0
        %4146 = vmatprep.subr.mxu0 0.0
        %4147 = vmatpush1.msra.mxu0 0.0
        %4148 = vmatprep.subr.mxu0 0.0
        %4149 = vmatpush1.msra.mxu0 0.0
        %4150 = vmatprep.subr.mxu0 0.0
        %4151 = vmatpush1.msra.mxu0 0.0
        %4152 = vmatprep.subr.mxu0 0.0
        %4153 = vmatpush1.msra.mxu0 0.0
        %4154 = vmatprep.subr.mxu0 0.0
        %4155 = vmatpush1.msra.mxu0 0.0
        %4156 = vmatprep.subr.mxu0 0.0
        %4157 = vmatpush1.msra.mxu0 0.0
        %4158 = vmatprep.subr.mxu0 0.0
        %4159 = vmatpush1.msra.mxu0 0.0
        %4160 = vmatprep.subr.mxu0 0.0
        %4161 = vmatpush1.msra.mxu0 0.0
        %4162 = vmatprep.subr.mxu0 0.0
        %4163 = vmatpush1.msra.mxu0 0.0
        %4164 = vmatprep.subr.mxu0 0.0
        %4165 = vmatpush1.msra.mxu0 0.0
        %4166 = vmatprep.subr.mxu0 0.0
        %4167 = vmatpush1.msra.mxu0 0.0
        %4168 = vmatprep.subr.mxu0 0.0
        %4169 = vmatpush1.msra.mxu0 0.0
        %4170 = vmatprep.subr.mxu0 0.0
        %4171 = vmatpush1.msra.mxu0 0.0
        %4172 = vmatprep.subr.mxu0 0.0
        %4173 = vmatpush1.msra.mxu0 0.0
        %4174 = vmatprep.subr.mxu0 0.0
        %4175 = vmatpush1.msra.mxu0 0.0
        %4176 = vmatprep.subr.mxu0 0.0
        %4177 = vmatpush1.msra.mxu0 0.0
        %4178 = vmatprep.subr.mxu0 0.0
        %4179 = vmatpush1.msra.mxu0 0.0
        %4180 = vmatprep.mubr.f32.mxu0 0.0
        %4181 = vmatmul.mubr.f32.gmra.mrb[0].mxu0 %v4069
        %v4182 = vpop.f32.mrb[0].mxu0
        %v4183 = vadd.f32 %v4066, %v4182
        %v4184 = vpop.f32.mrb[0].mxu0
        %4185 = vmatprep.mubr.f32.mxu0 0.0
        %4186 = vmatmul.mubr.f32.gmra.mrb[0].mxu0 %v4072
        %v4187 = vpop.f32.mrb[0].mxu0
        %v4188 = vadd.f32 %v4066, %v4187
        %v4189 = vpop.f32.mrb[0].mxu0
        %4190 = vmatprep.mubr.f32.mxu0 0.0
        %4191 = vmatmul.mubr.f32.gmra.mrb[0].mxu0 %v4075
        %v4192 = vpop.f32.mrb[0].mxu0
        %v4193 = vadd.f32 %v4066, %v4192
        %v4194 = vpop.f32.mrb[0].mxu0
        %4195 = vmatprep.mubr.f32.mxu0 0.0
        %4196 = vmatmul.mubr.f32.gmra.mrb[0].mxu0 %v4078
        %v4197 = vpop.f32.mrb[0].mxu0
        %v4198 = vadd.f32 %v4066, %v4197
        %v4199 = vpop.f32.mrb[0].mxu0
        %4200 = vmatprep.mubr.f32.mxu0 0.0
        %4201 = vmatmul.mubr.f32.gmra.mrb[0].mxu0 %v4081
        %v4202 = vpop.f32.mrb[0].mxu0
        %v4203 = vadd.f32 %v4066, %v4202
        %v4204 = vpop.f32.mrb[0].mxu0
        %4205 = vmatprep.mubr.f32.mxu0 0.0
        %4206 = vmatmul.mubr.f32.gmra.mrb[0].mxu0 %v4084
        %v4207 = vpop.f32.mrb[0].mxu0
        %v4208 = vadd.f32 %v4066, %v4207
        %v4209 = vpop.f32.mrb[0].mxu0
        %4210 = vmatprep.mubr.f32.mxu0 0.0
        %4211 = vmatmul.mubr.f32.gmra.mrb[0].mxu0 %v4087
        %v4212 = vpop.f32.mrb[0].mxu0
        %v4213 = vadd.f32 %v4066, %v4212
        %v4214 = vpop.f32.mrb[0].mxu0
        %4215 = vmatprep.mubr.f32.mxu0 0.0
        %4216 = vmatmul.mubr.f32.gmra.mrb[0].mxu0 %v4090
        %v4217 = vpop.f32.mrb[0].mxu0
        %v4218 = vadd.f32 %v4066, %v4217
        %v4219 = vpop.f32.mrb[0].mxu0
        %4220 = vmatprep.mubr.f32.mxu0 0.0
        %4221 = vmatmul.mubr.f32.gmra.mrb[0].mxu0 %v4093
        %v4222 = vpop.f32.mrb[0].mxu0
        %v4223 = vadd.f32 %v4066, %v4222
        %v4224 = vpop.f32.mrb[0].mxu0
        %4225 = vmatprep.mubr.f32.mxu0 0.0
        %4226 = vmatmul.mubr.f32.gmra.mrb[0].mxu0 %v4096
        %v4227 = vpop.f32.mrb[0].mxu0
        %v4228 = vadd.f32 %v4066, %v4227
        %v4229 = vpop.f32.mrb[0].mxu0
        %4230 = vmatprep.mubr.f32.mxu0 0.0
        %4231 = vmatmul.mubr.f32.gmra.mrb[0].mxu0 %v4099
        %v4232 = vpop.f32.mrb[0].mxu0
        %v4233 = vadd.f32 %v4066, %v4232
        %v4234 = vpop.f32.mrb[0].mxu0
        %4235 = vmatprep.mubr.f32.mxu0 0.0
        %4236 = vmatmul.mubr.f32.gmra.mrb[0].mxu0 %v4102
        %v4237 = vpop.f32.mrb[0].mxu0
        %v4238 = vadd.f32 %v4066, %v4237
        %v4239 = vpop.f32.mrb[0].mxu0
        %4240 = vmatprep.mubr.f32.mxu0 0.0
        %4241 = vmatmul.mubr.f32.gmra.mrb[0].mxu0 %v4105
        %v4242 = vpop.f32.mrb[0].mxu0
        %v4243 = vadd.f32 %v4066, %v4242
        %v4244 = vpop.f32.mrb[0].mxu0
        %4245 = vmatprep.mubr.f32.mxu0 0.0
        %4246 = vmatmul.mubr.f32.gmra.mrb[0].mxu0 %v4108
        %v4247 = vpop.f32.mrb[0].mxu0
        %v4248 = vadd.f32 %v4066, %v4247
        %v4249 = vpop.f32.mrb[0].mxu0
        %4250 = vmatprep.mubr.f32.mxu0 0.0
        %4251 = vmatmul.mubr.f32.gmra.mrb[0].mxu0 %v4111
        %v4252 = vpop.f32.mrb[0].mxu0
        %v4253 = vadd.f32 %v4066, %v4252
        %v4254 = vpop.f32.mrb[0].mxu0
        %4255 = vmatprep.mubr.f32.mxu0 0.0
        %4256 = vmatmul.mubr.f32.gmra.mrb[0].mxu0 %v4114
        %v4257 = vpop.f32.mrb[0].mxu0
        %v4258 = vadd.f32 %v4066, %v4257
        %v4259 = vpop.f32.mrb[0].mxu0
        %4260 = vdwg.mxu0
        %v4261 = vsel %vm1414, %v4183, 0.0
        %v4262 = vsel %vm1423, %v4188, 0.0
        %v4263 = vsel %vm1508, %v4193, 0.0
        %v4264 = vsel %vm1590, %v4198, 0.0
        %v4265 = vsel %vm1675, %v4203, 0.0
        %v4266 = vsel %vm1757, %v4208, 0.0
        %v4267 = vsel %vm1842, %v4213, 0.0
        %v4268 = vsel %vm1924, %v4218, 0.0
        %v4269 = vsel %vm2009, %v4223, 0.0
        %v4270 = vsel %vm2091, %v4228, 0.0
        %v4271 = vsel %vm2176, %v4233, 0.0
        %v4272 = vsel %vm2258, %v4238, 0.0
        %v4273 = vsel %vm2343, %v4243, 0.0
        %v4274 = vsel %vm2425, %v4248, 0.0
        %v4275 = vsel %vm2510, %v4253, 0.0
        %v4276 = vsel %vm2592, %v4258, 0.0
        %vm4277 = vcmask 31744
        %4278 = vst.msk [vmem:[%s796] sm:$0xff] %vm4277, %v4261
        %4279 = vst.msk [vmem:[%s796 + $0x8] sm:$0xff] %vm4277, %v4262
        %4280 = vst.msk [vmem:[%s796 + $0x10] sm:$0xff] %vm4277, %v4263
        %4281 = vst.msk [vmem:[%s796 + $0x18] sm:$0xff] %vm4277, %v4264
        %4282 = vst.msk [vmem:[%s796 + $0x20] sm:$0xff] %vm4277, %v4265
        %4283 = vst.msk [vmem:[%s796 + $0x28] sm:$0xff] %vm4277, %v4266
        %4284 = vst.msk [vmem:[%s796 + $0x30] sm:$0xff] %vm4277, %v4267
        %4285 = vst.msk [vmem:[%s796 + $0x38] sm:$0xff] %vm4277, %v4268
        %4286 = vst.msk [vmem:[%s796 + $0x40] sm:$0xff] %vm4277, %v4269
        %4287 = vst.msk [vmem:[%s796 + $0x48] sm:$0xff] %vm4277, %v4270
        %4288 = vst.msk [vmem:[%s796 + $0x50] sm:$0xff] %vm4277, %v4271
        %4289 = vst.msk [vmem:[%s796 + $0x58] sm:$0xff] %vm4277, %v4272
        %4290 = vst.msk [vmem:[%s796 + $0x60] sm:$0xff] %vm4277, %v4273
        %4291 = vst.msk [vmem:[%s796 + $0x68] sm:$0xff] %vm4277, %v4274
        %4292 = vst.msk [vmem:[%s796 + $0x70] sm:$0xff] %vm4277, %v4275
        %4293 = vst.msk [vmem:[%s796 + $0x78] sm:$0xff] %vm4277, %v4276
        %s4294 = sand.u32 %s368, 1
        %s4295 = sand.u32 %s368, 1
        %s4296 = smul.addr %s4295, 128
        %s4297 = scalar_lea.vmem [#allocation6], %s4296
        %s4298 = smul.u32 2, %s30
        %p4299 = scmp.lt.s32.totalorder %s4298, 3
        %s4300 = scalar_select %p4299, %s4298, 3
        %s4301 = smul.addr %s4300, 8
        %s4302 = scalar_lea.vmem %s16, %s4301
        %s4303 = smul.u32 2, %s30
        %p4304 = scmp.lt.s32.totalorder %s4303, 3
        %s4305 = scalar_select %p4304, %s4303, 3
        %s4306 = smul.addr %s4305, 8
        %s4307 = scalar_lea.vmem %s17, %s4306
        %s4308 = smul.u32 2, %s30
        %p4309 = scmp.lt.s32.totalorder %s4308, 3
        %s4310 = scalar_select %p4309, %s4308, 3
        %s4311 = smul.addr %s4310, 8
        %s4312 = scalar_lea.vmem %s18, %s4311
        // Predicated region
        $region157: #{rvae_forward.1} parent=147 // pred_check
          %p4313 = pneg %p378
        $region158: #{rvae_forward.1} parent=147 // pred_check_branch
          %4315 = sbr.rel (%p4313) target = $region160
        $region159: #{rvae_forward.1} parent=147 // pred_region
          %s4316 = smul.u32 2, %s30
          %s4317 = smul.addr %s4316, 8
          %s4318 = scalar_lea.vmem %s15, %s4317
          // Predicated region
          $region161: #{rvae_forward.1} parent=159 // pred_check
            _
          $region162: #{rvae_forward.1} parent=159 // pred_check_branch
            %4320 = sbr.rel (0) target = $region164
          $region163: #{rvae_forward.1} parent=159 // pred_region
            // Predicated region
            $region165: #{rvae_forward.1} parent=163 // pred_check
              _
            $region166: #{rvae_forward.1} parent=163 // pred_check_branch
              %4322 = sbr.rel (0) target = $region168
            $region167: #{rvae_forward.1} parent=163 // pred_region
              // Predicated region
              $region180: #{rvae_forward.1} parent=167 // pred_check
                _
              $region181: #{rvae_forward.1} parent=167 // pred_check_branch
                %4367 = sbr.rel (0) target = $region183
              $region182: #{rvae_forward.1} parent=167 // pred_region
                loop: start=0, step=1, limit=1
                $region184: #{rvae_forward.1} parent=182 // loop_pre_header
                  _
                $region185: #{rvae_forward.1} parent=182 // loop_header
                  %s4369 = sphi 0, %s4373
                  %p4370 = scmp.ge.s32.totalorder %s4369, 1
                  %s4374 = sphi %s4297, %s4297
                  %s4375 = sphi %s4318, %s4318
                $region186: #{rvae_forward.1} parent=182 // loop_header_branch
                  %4372 = sbr.rel (%p4370) target = $region190
                $region187: #{rvae_forward.1} parent=182 // loop_body
                  %v4376 = vld [vmem:[%s4374] sm:$0xff]
                  %4377 = vst [vmem:[%s4375] sm:$0xff] %v4376
                  %v4378 = vld [vmem:[%s4374 + $0x8] sm:$0xff]
                  %4379 = vst [vmem:[%s4375 + $0x8] sm:$0xff] %v4378
                  %v4380 = vld [vmem:[%s4374 + $0x10] sm:$0xff]
                  %4381 = vst [vmem:[%s4375 + $0x20] sm:$0xff] %v4380
                  %v4382 = vld [vmem:[%s4374 + $0x18] sm:$0xff]
                  %4383 = vst [vmem:[%s4375 + $0x28] sm:$0xff] %v4382
                  %v4384 = vld [vmem:[%s4374 + $0x20] sm:$0xff]
                  %4385 = vst [vmem:[%s4375 + $0x40] sm:$0xff] %v4384
                  %v4386 = vld [vmem:[%s4374 + $0x28] sm:$0xff]
                  %4387 = vst [vmem:[%s4375 + $0x48] sm:$0xff] %v4386
                  %v4388 = vld [vmem:[%s4374 + $0x30] sm:$0xff]
                  %4389 = vst [vmem:[%s4375 + $0x60] sm:$0xff] %v4388
                  %v4390 = vld [vmem:[%s4374 + $0x38] sm:$0xff]
                  %4391 = vst [vmem:[%s4375 + $0x68] sm:$0xff] %v4390
                  %v4392 = vld [vmem:[%s4374 + $0x40] sm:$0xff]
                  %4393 = vst [vmem:[%s4375 + $0x80] sm:$0xff] %v4392
                  %v4394 = vld [vmem:[%s4374 + $0x48] sm:$0xff]
                  %4395 = vst [vmem:[%s4375 + $0x88] sm:$0xff] %v4394
                  %v4396 = vld [vmem:[%s4374 + $0x50] sm:$0xff]
                  %4397 = vst [vmem:[%s4375 + $0xa0] sm:$0xff] %v4396
                  %v4398 = vld [vmem:[%s4374 + $0x58] sm:$0xff]
                  %4399 = vst [vmem:[%s4375 + $0xa8] sm:$0xff] %v4398
                  %v4400 = vld [vmem:[%s4374 + $0x60] sm:$0xff]
                  %4401 = vst [vmem:[%s4375 + $0xc0] sm:$0xff] %v4400
                  %v4402 = vld [vmem:[%s4374 + $0x68] sm:$0xff]
                  %4403 = vst [vmem:[%s4375 + $0xc8] sm:$0xff] %v4402
                  %v4404 = vld [vmem:[%s4374 + $0x70] sm:$0xff]
                  %4405 = vst [vmem:[%s4375 + $0xe0] sm:$0xff] %v4404
                  %v4406 = vld [vmem:[%s4374 + $0x78] sm:$0xff]
                  %4407 = vst [vmem:[%s4375 + $0xe8] sm:$0xff] %v4406
                $region188: #{rvae_forward.1} parent=182 // loop_footer
                  %s4373 = sadd.s32 1, %s4369
                $region189: #{rvae_forward.1} parent=182 // loop_footer_branch
                  %4368 = sbr.rel target = $region185
                $region190: #{rvae_forward.1} parent=182 // loop_exit
                  _
              $region183: #{rvae_forward.1} parent=167 // pred_fallthru
                _
              // Predicated region
              $region191: #{rvae_forward.1} parent=167 // pred_check
                _
              $region192: #{rvae_forward.1} parent=167 // pred_check_branch
                %4409 = sbr.rel target = $region194
              $region193: #{rvae_forward.1} parent=167 // pred_region
                _
              $region194: #{rvae_forward.1} parent=167 // pred_fallthru
                _
            $region168: #{rvae_forward.1} parent=163 // pred_fallthru
              _
            // Predicated region
            $region169: #{rvae_forward.1} parent=163 // pred_check
              _
            $region170: #{rvae_forward.1} parent=163 // pred_check_branch
              %4324 = sbr.rel target = $region172
            $region171: #{rvae_forward.1} parent=163 // pred_region
              loop: start=0, step=1, limit=1
              $region173: #{rvae_forward.1} parent=171 // loop_pre_header
                _
              $region174: #{rvae_forward.1} parent=171 // loop_header
                %s4327 = sphi 0, %s4331
                %p4328 = scmp.ge.s32.totalorder %s4327, 1
                %s4332 = sphi %s4297, %s4297
                %s4333 = sphi %s4318, %s4318
              $region175: #{rvae_forward.1} parent=171 // loop_header_branch
                %4330 = sbr.rel (%p4328) target = $region179
              $region176: #{rvae_forward.1} parent=171 // loop_body
                %v4334 = vld [vmem:[%s4332] sm:$0xff]
                %4335 = vst [vmem:[%s4333] sm:$0xff] %v4334
                %v4336 = vld [vmem:[%s4332 + $0x8] sm:$0xff]
                %4337 = vst [vmem:[%s4333 + $0x8] sm:$0xff] %v4336
                %v4338 = vld [vmem:[%s4332 + $0x10] sm:$0xff]
                %4339 = vst [vmem:[%s4333 + $0x20] sm:$0xff] %v4338
                %v4340 = vld [vmem:[%s4332 + $0x18] sm:$0xff]
                %4341 = vst [vmem:[%s4333 + $0x28] sm:$0xff] %v4340
                %v4342 = vld [vmem:[%s4332 + $0x20] sm:$0xff]
                %4343 = vst [vmem:[%s4333 + $0x40] sm:$0xff] %v4342
                %v4344 = vld [vmem:[%s4332 + $0x28] sm:$0xff]
                %4345 = vst [vmem:[%s4333 + $0x48] sm:$0xff] %v4344
                %v4346 = vld [vmem:[%s4332 + $0x30] sm:$0xff]
                %4347 = vst [vmem:[%s4333 + $0x60] sm:$0xff] %v4346
                %v4348 = vld [vmem:[%s4332 + $0x38] sm:$0xff]
                %4349 = vst [vmem:[%s4333 + $0x68] sm:$0xff] %v4348
                %v4350 = vld [vmem:[%s4332 + $0x40] sm:$0xff]
                %4351 = vst [vmem:[%s4333 + $0x80] sm:$0xff] %v4350
                %v4352 = vld [vmem:[%s4332 + $0x48] sm:$0xff]
                %4353 = vst [vmem:[%s4333 + $0x88] sm:$0xff] %v4352
                %v4354 = vld [vmem:[%s4332 + $0x50] sm:$0xff]
                %4355 = vst [vmem:[%s4333 + $0xa0] sm:$0xff] %v4354
                %v4356 = vld [vmem:[%s4332 + $0x58] sm:$0xff]
                %4357 = vst [vmem:[%s4333 + $0xa8] sm:$0xff] %v4356
                %v4358 = vld [vmem:[%s4332 + $0x60] sm:$0xff]
                %4359 = vst [vmem:[%s4333 + $0xc0] sm:$0xff] %v4358
                %v4360 = vld [vmem:[%s4332 + $0x68] sm:$0xff]
                %4361 = vst [vmem:[%s4333 + $0xc8] sm:$0xff] %v4360
                %v4362 = vld [vmem:[%s4332 + $0x70] sm:$0xff]
                %4363 = vst [vmem:[%s4333 + $0xe0] sm:$0xff] %v4362
                %v4364 = vld [vmem:[%s4332 + $0x78] sm:$0xff]
                %4365 = vst [vmem:[%s4333 + $0xe8] sm:$0xff] %v4364
              $region177: #{rvae_forward.1} parent=171 // loop_footer
                %s4331 = sadd.s32 1, %s4327
              $region178: #{rvae_forward.1} parent=171 // loop_footer_branch
                %4326 = sbr.rel target = $region174
              $region179: #{rvae_forward.1} parent=171 // loop_exit
                _
            $region172: #{rvae_forward.1} parent=163 // pred_fallthru
              _
          $region164: #{rvae_forward.1} parent=159 // pred_fallthru
            _
          %4410 = vnop
        $region160: #{rvae_forward.1} parent=147 // pred_fallthru
          _
        // Predicated region
        $region195: #{rvae_forward.1} parent=147 // pred_check
          %p4411 = pneg %p404
        $region196: #{rvae_forward.1} parent=147 // pred_check_branch
          %4413 = sbr.rel (%p4411) target = $region198
        $region197: #{rvae_forward.1} parent=147 // pred_region
          %s4414 = smul.u32 2, %s30
        $region198: #{rvae_forward.1} parent=147 // pred_fallthru
          _
        // Predicated region
        $region199: #{rvae_forward.1} parent=147 // pred_check
          %p4415 = pneg %p430
        $region200: #{rvae_forward.1} parent=147 // pred_check_branch
          %4417 = sbr.rel (%p4415) target = $region202
        $region201: #{rvae_forward.1} parent=147 // pred_region
          %s4418 = smul.u32 2, %s30
        $region202: #{rvae_forward.1} parent=147 // pred_fallthru
          _
        // Predicated region
        $region203: #{rvae_forward.1} parent=147 // pred_check
          %p4419 = pneg %p456
        $region204: #{rvae_forward.1} parent=147 // pred_check_branch
          %4421 = sbr.rel (%p4419) target = $region206
        $region205: #{rvae_forward.1} parent=147 // pred_region
          %s4422 = smul.u32 2, %s30
        $region206: #{rvae_forward.1} parent=147 // pred_fallthru
          _
      $region148: #{rvae_forward.1} parent=5 // pred_fallthru
        _
      %p4423 = scmp.le.s32.totalorder 2, %s25
      // Predicated region
      $region207: #{rvae_forward.1} parent=5 // pred_check
        %p4424 = pneg %p4423
      $region208: #{rvae_forward.1} parent=5 // pred_check_branch
        %4426 = sbr.rel (%p4424) target = $region210
      $region209: #{rvae_forward.1} parent=5 // pred_region
        %s4427 = ssub.s32 %s25, 2
        // Predicated region
        $region211: #{rvae_forward.1} parent=209 // pred_check
          %p4428 = pneg %p384
        $region212: #{rvae_forward.1} parent=209 // pred_check_branch
          %4430 = sbr.rel (%p4428) target = $region214
        $region213: #{rvae_forward.1} parent=209 // pred_region
          %s4431 = sand.u32 %s369, 1
          %s4432 = sand.u32 %s369, 1
          %s4433 = smul.addr %s4432, 128
          %s4434 = scalar_lea.vmem [#allocation6], %s4433
        $region214: #{rvae_forward.1} parent=209 // pred_fallthru
          _
        // Predicated region
        $region215: #{rvae_forward.1} parent=209 // pred_check
          %p4435 = pneg %p410
        $region216: #{rvae_forward.1} parent=209 // pred_check_branch
          %4437 = sbr.rel (%p4435) target = $region218
        $region217: #{rvae_forward.1} parent=209 // pred_region
          %s4438 = smul.u32 2, %s31
          %p4439 = scmp.lt.s32.totalorder %s4438, 3
          %s4440 = scalar_select %p4439, %s4438, 3
          %s4441 = smul.addr %s4440, 8
          %s4442 = scalar_lea.vmem %s16, %s4441
        $region218: #{rvae_forward.1} parent=209 // pred_fallthru
          _
        // Predicated region
        $region219: #{rvae_forward.1} parent=209 // pred_check
          %p4443 = pneg %p436
        $region220: #{rvae_forward.1} parent=209 // pred_check_branch
          %4445 = sbr.rel (%p4443) target = $region222
        $region221: #{rvae_forward.1} parent=209 // pred_region
          %s4446 = smul.u32 2, %s31
          %p4447 = scmp.lt.s32.totalorder %s4446, 3
          %s4448 = scalar_select %p4447, %s4446, 3
          %s4449 = smul.addr %s4448, 8
          %s4450 = scalar_lea.vmem %s17, %s4449
        $region222: #{rvae_forward.1} parent=209 // pred_fallthru
          _
        // Predicated region
        $region223: #{rvae_forward.1} parent=209 // pred_check
          %p4451 = pneg %p462
        $region224: #{rvae_forward.1} parent=209 // pred_check_branch
          %4453 = sbr.rel (%p4451) target = $region226
        $region225: #{rvae_forward.1} parent=209 // pred_region
          %s4454 = smul.u32 2, %s31
          %p4455 = scmp.lt.s32.totalorder %s4454, 3
          %s4456 = scalar_select %p4455, %s4454, 3
          %s4457 = smul.addr %s4456, 8
          %s4458 = scalar_lea.vmem %s18, %s4457
        $region226: #{rvae_forward.1} parent=209 // pred_fallthru
          _
      $region210: #{rvae_forward.1} parent=5 // pred_fallthru
        _
    $region6: #{rvae_forward.1} parent=1 // loop_footer
      %s29 = sadd.s32 1, %s25
    $region7: #{rvae_forward.1} parent=1 // loop_footer_branch
      %24 = sbr.rel target = $region3
    $region8: #{rvae_forward.1} parent=1 // loop_exit
      _

</llo_original>
